<compile_context>
chip_gen: v6e
topology: v6e:2x2x1
jax: 0.10.0
libtpu: 0.0.40
codegen_flags: <defaults>
</compile_context>

<pallas_src>
import numpy as np
import jax
import jax.numpy as jnp
from jax.experimental import pallas as pl
from jax.experimental.pallas import tpu as pltpu


# ------------------------------ slab packing ---------------------------------


class _SlabPacker:
    """Packs many small 2-D arrays into one (rows, width) slab + offset table."""

    def __init__(self, row_align):
        self.row_align = row_align
        self.items = []          # (name, np.ndarray)

    def add(self, name, arr):
        arr = np.asarray(arr, np.float32)
        assert arr.ndim == 2
        self.items.append((name, arr))

    def finalize(self, dtype):
        width = max(a.shape[1] for _, a in self.items)
        width = ((width + 127) // 128) * 128
        blocks, offsets, cursor = [], {}, 0
        for name, arr in self.items:
            r, c = arr.shape
            rp = ((r + self.row_align - 1) // self.row_align) * self.row_align
            block = np.zeros((rp, width), np.float32)
            block[:r, :c] = arr
            offsets[name] = (cursor, r, c)
            cursor += rp
            blocks.append(block)
        slab = np.concatenate(blocks, axis=0)
        return jnp.asarray(slab, dtype), offsets


# ------------------------------- fused kernel --------------------------------


def make_fused_kernel(meta, woff, foff):
    B, E, nhead = meta['B'], meta['E'], meta['nhead']
    num_layers, Lf = meta['num_layers'], meta['Lf']
    Cin, C1 = meta['Cin'], meta['C1']
    L1, L2, L3 = meta['L1'], meta['L2'], meta['L3']
    K1, K2, K3 = meta['K1'], meta['K2'], meta['K3']
    dh = E // nhead
    scale_attn = 1.0 / float(dh) ** 0.5
    f32, bf16 = jnp.float32, jnp.bfloat16

    def kernel(x_ref, w_ref, f_ref, out_ref):
        # --- static carve-outs from the two constant slabs (one DMA each) ---
        def W(name):
            off, r, c = woff[name]
            return w_ref[off:off + r, 0:c]            # bf16 matmul operand

        def F(name):
            off, r, c = foff[name]
            return f_ref[off:off + r, 0:c]            # f32 elementwise constant

        def dot(a, b):                                 # bf16 operands, f32 accum
            return jnp.dot(a.astype(bf16), b.astype(bf16),
                           preferred_element_type=f32)

        def softmax_rows(v):
            v = v - jnp.max(v, axis=-1, keepdims=True)
            e = jnp.exp(v)
            return e * pl.reciprocal(jnp.sum(e, axis=-1, keepdims=True), approx=True)

        def layernorm(v, g, b):
            mu = jnp.mean(v, axis=-1, keepdims=True)
            var = jnp.mean((v - mu) ** 2, axis=-1, keepdims=True)
            return (v - mu) * jax.lax.rsqrt(var + 1e-5) * g + b

        def se_block(v, w1t, w2t, mean_m, exp_m):
            m = dot(mean_m, v)                         # per-sample means (B, C)
            h = jnp.maximum(dot(m, w1t), 0.0)
            g = jax.nn.sigmoid(dot(h, w2t))            # gates (B, C)
            return v * dot(exp_m, g)                   # broadcast gates back to rows

        def conv_bn_relu(v, sel, w_taps, k, rows_out, cin, scale, shift):
            taps = dot(sel, v)                         # (k*rows_out, cin) tap gather
            acc = dot(taps[0:rows_out, :], w_taps[0:cin, :])
            for kk in range(1, k):                     # clean dot chain (MRB-friendly)
                acc = acc + dot(taps[kk * rows_out:(kk + 1) * rows_out, :],
                                w_taps[kk * cin:(kk + 1) * cin, :])
            return jnp.maximum(acc * scale + shift, 0.0)   # folded BN (+bias) + ReLU

        def maxpool2(v, pe, po):
            return jnp.maximum(dot(pe, v), dot(po, v))

        # ----------------------- CNN (batched over B) -----------------------
        mean01, exp01, mean3 = W('mean01'), W('exp01'), W('mean3')
        v = x_ref[...]                                                  # (B*L0, Cin)
        v = se_block(v, W('se0_w1t'), W('se0_w2t'), mean01, exp01)
        v = conv_bn_relu(v, W('sel1'), W('w1'), K1, B * L1, Cin, F('bn1s'), F('bn1t'))
        v = se_block(v, W('se1_w1t'), W('se1_w2t'), mean01, exp01)
        v = conv_bn_relu(v, W('sel2'), W('w2'), K2, B * L2, C1, F('bn2s'), F('bn2t'))
        v = maxpool2(v, W('p1e'), W('p1o'))                             # (B*P1, C1)
        v = se_block(v, W('se2_w1t'), W('se2_w2t'), W('mean2'), W('exp2'))
        v = conv_bn_relu(v, W('sel3'), W('w3'), K3, B * L3, C1, F('bn3s'), F('bn3t'))
        v = maxpool2(v, W('p2e'), W('p2o'))             # rows already (l*B + b) order
        v = se_block(v, W('se3_w1t'), W('se3_w2t'), mean3, W('exp3'))
        x = dot(v, W('win_t')) + F('b_in')                              # (Lf*B, E)

        # ------------------ transformer (stacked over Lf*B) ------------------
        # batch_first=False: attention mixes the batch axis per CNN position ->
        # constant block-diagonal additive mask over the stacked rows.
        mask = F('attn_mask')                                           # (S, S)
        for li in range(num_layers):
            qkv = dot(x, W(f'wqkv{li}')) + F(f'bqkv{li}')               # (S, 3E)
            q = qkv[:, 0:E] * scale_attn
            k = qkv[:, E:2 * E]
            vv = qkv[:, 2 * E:3 * E]
            wo = W(f'wo{li}')
            attn = None
            for h in range(nhead):
                qh = q[:, h * dh:(h + 1) * dh]
                kh = k[:, h * dh:(h + 1) * dh]
                vh = vv[:, h * dh:(h + 1) * dh]
                s = jax.lax.dot_general(qh.astype(bf16), kh.astype(bf16),
                                        (((1,), (1,)), ((), ())),
                                        preferred_element_type=f32) + mask
                p = softmax_rows(s)
                contrib = dot(dot(p, vh), wo[h * dh:(h + 1) * dh, :])
                attn = contrib if attn is None else attn + contrib
            attn = attn + F(f'bo{li}')
            y = layernorm(x + attn, F(f'ln1g{li}'), F(f'ln1b{li}'))     # post-norm
            ff = jnp.maximum(dot(y, W(f'w1f{li}')) + F(f'b1f{li}'), 0.0)
            ff = dot(ff, W(f'w2f{li}')) + F(f'b2f{li}')
            x = layernorm(y + ff, F(f'ln2g{li}'), F(f'ln2b{li}'))

        # ---------------- mean over positions + fused heads ------------------
        xm = dot(mean3, x)                                              # (B, E)
        logits = dot(xm, W('wh_t')) + F('bh')                           # (B, 24)
        out = jnp.concatenate(
            [jax.nn.sigmoid(logits[:, 0:8]),        # cols 0/1 = gender / hold
             softmax_rows(logits[:, 8:16]),         # cols 8..10 = play_years
             softmax_rows(logits[:, 16:24])],       # cols 16..18 = level
            axis=1)
        out_ref[...] = out                                              # single store

    return kernel


# --------------------------- parameter packing --------------------------------


def _conv_len(l, k, s, p):
    return (l + 2 * p - k) // s + 1


def prepare_inputs(params, B, seq_len, input_dim, cnn_filters, transformer_dim,
                   nhead, num_layers, eps=1e-5):
    Cin, C1, C2, E = input_dim, cnn_filters, 2 * cnn_filters, transformer_dim
    K1, K2, K3 = 5, 5, 3
    L0 = seq_len
    L1 = _conv_len(L0, K1, 1, 2)
    L2 = _conv_len(L1, K2, 2, 2)
    P1 = L2 // 2
    L3 = _conv_len(P1, K3, 2, 1)
    Lf = L3 // 2
    S = Lf * B
    assert L1 == L0 and Lf >= 1

    # ------ block-diagonal constant matrices (batched over B, no padding) ------
    def conv_sel(l_in, l_out, k, stride, padding):
        sel = np.zeros((k * B * l_out, B * l_in), np.float32)
        for kk in range(k):
            for b in range(B):
                for j in range(l_out):
                    m = j * stride + kk - padding
                    if 0 <= m < l_in:
                        sel[kk * B * l_out + b * l_out + j, b * l_in + m] = 1.0
        return sel

    def pool_sel_batchmajor(l_in):
        l_out = l_in // 2
        e = np.zeros((B * l_out, B * l_in), np.float32)
        o = np.zeros_like(e)
        for b in range(B):
            for j in range(l_out):
                e[b * l_out + j, b * l_in + 2 * j] = 1.0
                o[b * l_out + j, b * l_in + 2 * j + 1] = 1.0
        return e, o

    def pool_sel_posmajor(l_in):
        # input rows batch-major, output rows position-major (l*B + b):
        # the CNN->transformer regrouping is baked into the last pool for free.
        l_out = l_in // 2
        e = np.zeros((l_out * B, B * l_in), np.float32)
        o = np.zeros_like(e)
        for l in range(l_out):
            for b in range(B):
                e[l * B + b, b * l_in + 2 * l] = 1.0
                o[l * B + b, b * l_in + 2 * l + 1] = 1.0
        return e, o

    def mean_exp_batchmajor(l):
        m = np.zeros((B, B * l), np.float32)
        ex = np.zeros((B * l, B), np.float32)
        for b in range(B):
            m[b, b * l:(b + 1) * l] = 1.0 / l
            ex[b * l:(b + 1) * l, b] = 1.0
        return m, ex

    def mean_exp_posmajor(l):
        m = np.zeros((B, l * B), np.float32)
        ex = np.zeros((l * B, B), np.float32)
        for ll in range(l):
            for b in range(B):
                m[b, ll * B + b] = 1.0 / l
                ex[ll * B + b, b] = 1.0
        return m, ex

    def conv_taps(conv_p):        # (Cout, Cin, K) -> (K*Cin, Cout), tap-major rows
        w = np.asarray(conv_p['w'], np.float32)
        return np.concatenate([w[:, :, k].T for k in range(w.shape[2])], axis=0)

    def bn_fold(conv_p, bn_p):
        g = np.asarray(bn_p['gamma'], np.float32)
        v = np.asarray(bn_p['var'], np.float32)
        mu = np.asarray(bn_p['mean'], np.float32)
        be = np.asarray(bn_p['beta'], np.float32)
        cb = np.asarray(conv_p['b'], np.float32)
        scale = g / np.sqrt(v + eps)
        shift = (cb - mu) * scale + be
        return scale.reshape(1, -1), shift.reshape(1, -1)

    mean01, exp01 = mean_exp_batchmajor(L1)        # shared by SE0 and SE1 (L0==L1)
    mean2, exp2 = mean_exp_batchmajor(P1)
    mean3, exp3 = mean_exp_posmajor(Lf)            # also used for the head mean

    wp = _SlabPacker(row_align=16)   # bf16 slab ((16,128) sublane tiles)
    fp = _SlabPacker(row_align=8)    # f32 slab  ((8,128) sublane tiles)

    # --- bf16 matmul-operand slab ---
    wp.add('mean01', mean01); wp.add('exp01', exp01)
    wp.add('mean2', mean2);   wp.add('exp2', exp2)
    wp.add('mean3', mean3);   wp.add('exp3', exp3)
    wp.add('se0_w1t', np.asarray(params['se0']['w1']).T)
    wp.add('se0_w2t', np.asarray(params['se0']['w2']).T)
    wp.add('sel1', conv_sel(L0, L1, K1, 1, 2))
    wp.add('w1', conv_taps(params['conv1']))
    wp.add('se1_w1t', np.asarray(params['se1']['w1']).T)
    wp.add('se1_w2t', np.asarray(params['se1']['w2']).T)
    wp.add('sel2', conv_sel(L1, L2, K2, 2, 2))
    wp.add('w2', conv_taps(params['conv2']))
    p1e, p1o = pool_sel_batchmajor(L2)
    wp.add('p1e', p1e); wp.add('p1o', p1o)
    wp.add('se2_w1t', np.asarray(params['se2']['w1']).T)
    wp.add('se2_w2t', np.asarray(params['se2']['w2']).T)
    wp.add('sel3', conv_sel(P1, L3, K3, 2, 1))
    wp.add('w3', conv_taps(params['conv3']))
    p2e, p2o = pool_sel_posmajor(L3)
    wp.add('p2e', p2e); wp.add('p2o', p2o)
    wp.add('se3_w1t', np.asarray(params['se3']['w1']).T)
    wp.add('se3_w2t', np.asarray(params['se3']['w2']).T)
    wp.add('win_t', np.asarray(params['input_layer']['w']).T)

    # --- f32 elementwise-constant slab ---
    s1, t1 = bn_fold(params['conv1'], params['bn1'])
    s2, t2 = bn_fold(params['conv2'], params['bn2'])
    s3, t3 = bn_fold(params['conv3'], params['bn3'])
    fp.add('bn1s', s1); fp.add('bn1t', t1)
    fp.add('bn2s', s2); fp.add('bn2t', t2)
    fp.add('bn3s', s3); fp.add('bn3t', t3)
    fp.add('b_in', np.asarray(params['input_layer']['b']).reshape(1, -1))

    for li, lp in enumerate(params['layers']):
        wqkv_t = np.concatenate([np.asarray(lp['wq']).T, np.asarray(lp['wk']).T,
                                 np.asarray(lp['wv']).T], axis=1)        # (E, 3E)
        bqkv = np.concatenate([np.asarray(lp['bq']), np.asarray(lp['bk']),
                               np.asarray(lp['bv'])]).reshape(1, -1)
        wp.add(f'wqkv{li}', wqkv_t)
        wp.add(f'wo{li}', np.asarray(lp['wo']).T)
        wp.add(f'w1f{li}', np.asarray(lp['ff1']['w']).T)
        wp.add(f'w2f{li}', np.asarray(lp['ff2']['w']).T)
        fp.add(f'bqkv{li}', bqkv)
        fp.add(f'bo{li}', np.asarray(lp['bo']).reshape(1, -1))
        fp.add(f'ln1g{li}', np.asarray(lp['ln1_g']).reshape(1, -1))
        fp.add(f'ln1b{li}', np.asarray(lp['ln1_b']).reshape(1, -1))
        fp.add(f'b1f{li}', np.asarray(lp['ff1']['b']).reshape(1, -1))
        fp.add(f'b2f{li}', np.asarray(lp['ff2']['b']).reshape(1, -1))
        fp.add(f'ln2g{li}', np.asarray(lp['ln2_g']).reshape(1, -1))
        fp.add(f'ln2b{li}', np.asarray(lp['ln2_b']).reshape(1, -1))

    # Fused output heads: cols 0/1 sigmoid (gender/hold), 8..10 play_years
    # softmax, 16..18 level softmax; padded softmax cols get bias -1e30 -> exp 0.
    # (Sigmoid cols 2..7 are sigmoid(0)=0.5 padding; the wrapper never returns them.)
    wh_t = np.zeros((E, 24), np.float32)
    bh = np.zeros((1, 24), np.float32)
    wh_t[:, 0] = np.asarray(params['fc_gender']['w'])[0]
    bh[0, 0] = float(np.asarray(params['fc_gender']['b'])[0])
    wh_t[:, 1] = np.asarray(params['fc_hold']['w'])[0]
    bh[0, 1] = float(np.asarray(params['fc_hold']['b'])[0])
    wh_t[:, 8:11] = np.asarray(params['fc_play_years']['w']).T
    bh[0, 8:11] = np.asarray(params['fc_play_years']['b'])
    bh[0, 11:16] = -1e30
    wh_t[:, 16:19] = np.asarray(params['fc_level']['w']).T
    bh[0, 16:19] = np.asarray(params['fc_level']['b'])
    bh[0, 19:24] = -1e30
    wp.add('wh_t', wh_t)
    fp.add('bh', bh)

    # Block-diagonal additive attention mask over stacked rows (l*B + b):
    # attend only within the same CNN position (batch_first=False semantics).
    mask = np.full((S, S), -1e30, np.float32)
    for l in range(Lf):
        mask[l * B:(l + 1) * B, l * B:(l + 1) * B] = 0.0
    fp.add('attn_mask', mask)

    wslab, woff = wp.finalize(jnp.bfloat16)
    fslab, foff = fp.finalize(jnp.float32)

    meta = dict(B=B, L0=L0, L1=L1, L2=L2, P1=P1, L3=L3, Lf=Lf, S=S,
                Cin=Cin, C1=C1, C2=C2, E=E, nhead=nhead, num_layers=num_layers,
                K1=K1, K2=K2, K3=K3)
    return wslab, fslab, woff, foff, meta


# ---------------------------------- wrapper -----------------------------------


def build_forward(meta, woff, foff):
    kernel = make_fused_kernel(meta, woff, foff)
    B, L0, Cin = meta['B'], meta['L0'], meta['Cin']
    # TODO(synk): on v7x, wrap this call in a leading grid axis over independent
    # request groups with dimension_semantics=("parallel",) to feed the second
    # TensorCore; a single B=2 problem has no clean intra-problem parallel split
    # (the transformer mixes the batch axis), so we keep one program here.

    def forward(x, wslab, fslab):
        vmem = pl.BlockSpec(memory_space=pltpu.MemorySpace.VMEM)
        x2 = x.reshape(B * L0, Cin).astype(jnp.float32)      # length-major stack
        out = pl.pallas_call(
            kernel,
            out_shape=jax.ShapeDtypeStruct((B, 24), jnp.float32),
            in_specs=[vmem, vmem, vmem],
            out_specs=vmem,
        )(x2, wslab, fslab)
        return out[:, 0:1], out[:, 1:2], out[:, 8:11], out[:, 16:19]

    return jax.jit(forward)


# ---------------------------- parameter initialization ------------------------


class KeyGen:
    def __init__(self, seed):
        self.key = jax.random.PRNGKey(seed)

    def __call__(self):
        self.key, sub = jax.random.split(self.key)
        return sub


def init_params(input_dim, cnn_filters, transformer_dim, nhead, num_layers, reduction=16):
    kg = KeyGen(42)

    def n(shape, s=0.1):
        return s * jax.random.normal(kg(), shape, dtype=jnp.float32)

    def se(c):
        cr = max(c // reduction, 1)
        return {'w1': n((cr, c)), 'w2': n((c, cr))}

    def bn(c):
        return {'gamma': 1.0 + n((c,)), 'beta': n((c,)),
                'mean': n((c,)), 'var': 1.0 + jnp.abs(n((c,)))}

    def conv(ci, co, k):
        return {'w': n((co, ci, k)), 'b': n((co,))}

    def lin(ci, co):
        return {'w': n((co, ci)), 'b': n((co,))}

    E = transformer_dim
    C1, C2 = cnn_filters, 2 * cnn_filters
    layers = []
    for _ in range(num_layers):
        layers.append({
            'wq': n((E, E)), 'bq': n((E,)), 'wk': n((E, E)), 'bk': n((E,)),
            'wv': n((E, E)), 'bv': n((E,)), 'wo': n((E, E)), 'bo': n((E,)),
            'ln1_g': 1.0 + n((E,)), 'ln1_b': n((E,)),
            'ff1': lin(E, 4 * E), 'ff2': lin(4 * E, E),
            'ln2_g': 1.0 + n((E,)), 'ln2_b': n((E,)),
        })

    return {
        'se0': se(input_dim),
        'conv1': conv(input_dim, C1, 5), 'bn1': bn(C1), 'se1': se(C1),
        'conv2': conv(C1, C1, 5), 'bn2': bn(C1), 'se2': se(C1),
        'conv3': conv(C1, C2, 3), 'bn3': bn(C2), 'se3': se(C2),
        'input_layer': lin(C2, E),
        'layers': layers,
        'fc_gender': lin(E, 1), 'fc_hold': lin(E, 1),
        'fc_play_years': lin(E, 3), 'fc_level': lin(E, 3),
    }


# ------------------------------------ main -------------------------------------


if __name__ == "__main__":
    B, seq_len, input_dim = 2, 32, 16
    cnn_filters, transformer_dim, nhead, num_layers = 32, 32, 4, 1

    params = init_params(input_dim, cnn_filters, transformer_dim, nhead, num_layers)
    x = jax.random.normal(jax.random.PRNGKey(0), (B, seq_len, input_dim), dtype=jnp.float32)

    wslab, fslab, woff, foff, meta = prepare_inputs(
        params, B, seq_len, input_dim, cnn_filters, transformer_dim, nhead, num_layers)
    fwd = build_forward(meta, woff, foff)

    gender_out, hold_racket_out, play_years_out, level_out = jax.block_until_ready(
        fwd(x, wslab, fslab))

    assert gender_out.shape == (B, 1)
    assert hold_racket_out.shape == (B, 1)
    assert play_years_out.shape == (B, 3)
    assert level_out.shape == (B, 3)
    assert bool(jnp.all(jnp.isfinite(gender_out)))
    assert bool(jnp.all(jnp.isfinite(play_years_out)))
    assert bool(jnp.all(jnp.isfinite(level_out)))
    print("KERNEL_OK")
</pallas_src>

<mosaic_0001>
module attributes {stable_mosaic.version = 11 : i64} {
  func.func @kernel(%arg0: memref<64x16xf32, #tpu.memory_space<vmem>>, %arg1: memref<1584x128xbf16, #tpu.memory_space<vmem>>, %arg2: memref<136x128xf32, #tpu.memory_space<vmem>>, %arg3: memref<2x24xf32, #tpu.memory_space<vmem>>) attributes {dimension_semantics = [], scalar_prefetch = 0 : i64, scratch_operands = 0 : i64, tpu.core_type = #tpu.core_type<tc>} {
    %c0 = arith.constant 0 : index
    %c0_0 = arith.constant 0 : index
    %0 = vector.load %arg1[%c0, %c0_0] : memref<1584x128xbf16, #tpu.memory_space<vmem>>, vector<2x64xbf16>
    %c16 = arith.constant 16 : index
    %c0_1 = arith.constant 0 : index
    %1 = vector.load %arg1[%c16, %c0_1] : memref<1584x128xbf16, #tpu.memory_space<vmem>>, vector<64x2xbf16>
    %c112 = arith.constant 112 : index
    %c0_2 = arith.constant 0 : index
    %2 = vector.load %arg1[%c112, %c0_2] : memref<1584x128xbf16, #tpu.memory_space<vmem>>, vector<2x4xbf16>
    %c0_3 = arith.constant 0 : index
    %c0_4 = arith.constant 0 : index
    %3 = vector.load %arg0[%c0_3, %c0_4] : memref<64x16xf32, #tpu.memory_space<vmem>>, vector<64x16xf32>
    %c144 = arith.constant 144 : index
    %c0_5 = arith.constant 0 : index
    %4 = vector.load %arg1[%c144, %c0_5] : memref<1584x128xbf16, #tpu.memory_space<vmem>>, vector<16x1xbf16>
    %c160 = arith.constant 160 : index
    %c0_6 = arith.constant 0 : index
    %5 = vector.load %arg1[%c160, %c0_6] : memref<1584x128xbf16, #tpu.memory_space<vmem>>, vector<1x16xbf16>
    %6 = arith.truncf %3 : vector<64x16xf32> to vector<64x16xbf16>
    %cst = arith.constant dense<0.000000e+00> : vector<2x16xf32>
    %7 = tpu.matmul %0, %6, %cst {dimension_numbers = #tpu.dot_dimension_numbers<[1], [0], [0], [1], [0, 0, 1, 1], [], []>} : vector<2x64xbf16>, vector<64x16xbf16>, vector<2x16xf32> -> vector<2x16xf32>
    %8 = arith.truncf %7 : vector<2x16xf32> to vector<2x16xbf16>
    %cst_7 = arith.constant dense<0.000000e+00> : vector<2x1xf32>
    %9 = tpu.matmul %8, %4, %cst_7 {dimension_numbers = #tpu.dot_dimension_numbers<[1], [0], [0], [1], [0, 0, 1, 1], [], []>} : vector<2x16xbf16>, vector<16x1xbf16>, vector<2x1xf32> -> vector<2x1xf32>
    %cst_8 = arith.constant 0.000000e+00 : f32
    %10 = vector.broadcast %cst_8 : f32 to vector<2x1xf32>
    %11 = arith.maximumf %9, %10 : vector<2x1xf32>
    %12 = arith.truncf %11 : vector<2x1xf32> to vector<2x1xbf16>
    %cst_9 = arith.constant dense<0.000000e+00> : vector<2x16xf32>
    %13 = tpu.matmul %12, %5, %cst_9 {dimension_numbers = #tpu.dot_dimension_numbers<[1], [0], [0], [1], [0, 0, 1, 1], [], []>} : vector<2x1xbf16>, vector<1x16xbf16>, vector<2x16xf32> -> vector<2x16xf32>
    %14 = arith.negf %13 : vector<2x16xf32>
    %15 = math.exp %14 : vector<2x16xf32>
    %cst_10 = arith.constant 1.000000e+00 : f32
    %16 = vector.broadcast %cst_10 : f32 to vector<2x16xf32>
    %17 = arith.addf %16, %15 : vector<2x16xf32>
    %18 = arith.divf %16, %17 : vector<2x16xf32>
    %19 = arith.truncf %18 : vector<2x16xf32> to vector<2x16xbf16>
    %cst_11 = arith.constant dense<0.000000e+00> : vector<64x16xf32>
    %20 = tpu.matmul %1, %19, %cst_11 {dimension_numbers = #tpu.dot_dimension_numbers<[1], [0], [0], [1], [0, 0, 1, 1], [], []>} : vector<64x2xbf16>, vector<2x16xbf16>, vector<64x16xf32> -> vector<64x16xf32>
    %21 = arith.mulf %3, %20 : vector<64x16xf32>
    %c176 = arith.constant 176 : index
    %c0_12 = arith.constant 0 : index
    %22 = vector.load %arg1[%c176, %c0_12] : memref<1584x128xbf16, #tpu.memory_space<vmem>>, vector<320x64xbf16>
    %c496 = arith.constant 496 : index
    %c0_13 = arith.constant 0 : index
    %23 = vector.load %arg1[%c496, %c0_13] : memref<1584x128xbf16, #tpu.memory_space<vmem>>, vector<80x32xbf16>
    %c0_14 = arith.constant 0 : index
    %c0_15 = arith.constant 0 : index
    %24 = vector.load %arg2[%c0_14, %c0_15] : memref<136x128xf32, #tpu.memory_space<vmem>>, vector<1x32xf32>
    %c8 = arith.constant 8 : index
    %c0_16 = arith.constant 0 : index
    %25 = vector.load %arg2[%c8, %c0_16] : memref<136x128xf32, #tpu.memory_space<vmem>>, vector<1x32xf32>
    %26 = arith.truncf %21 : vector<64x16xf32> to vector<64x16xbf16>
    %cst_17 = arith.constant dense<0.000000e+00> : vector<320x16xf32>
    %27 = tpu.matmul %22, %26, %cst_17 {dimension_numbers = #tpu.dot_dimension_numbers<[1], [0], [0], [1], [0, 0, 1, 1], [], []>} : vector<320x64xbf16>, vector<64x16xbf16>, vector<320x16xf32> -> vector<320x16xf32>
    %28 = vector.extract_strided_slice %27 {offsets = [0, 0], sizes = [64, 16], strides = [1, 1]} : vector<320x16xf32> to vector<64x16xf32>
    %29 = vector.extract_strided_slice %23 {offsets = [0, 0], sizes = [16, 32], strides = [1, 1]} : vector<80x32xbf16> to vector<16x32xbf16>
    %30 = arith.truncf %28 : vector<64x16xf32> to vector<64x16xbf16>
    %cst_18 = arith.constant dense<0.000000e+00> : vector<64x32xf32>
    %31 = tpu.matmul %30, %29, %cst_18 {dimension_numbers = #tpu.dot_dimension_numbers<[1], [0], [0], [1], [0, 0, 1, 1], [], []>} : vector<64x16xbf16>, vector<16x32xbf16>, vector<64x32xf32> -> vector<64x32xf32>
    %32 = vector.extract_strided_slice %27 {offsets = [64, 0], sizes = [64, 16], strides = [1, 1]} : vector<320x16xf32> to vector<64x16xf32>
    %33 = vector.extract_strided_slice %23 {offsets = [16, 0], sizes = [16, 32], strides = [1, 1]} : vector<80x32xbf16> to vector<16x32xbf16>
    %34 = arith.truncf %32 : vector<64x16xf32> to vector<64x16xbf16>
    %cst_19 = arith.constant dense<0.000000e+00> : vector<64x32xf32>
    %35 = tpu.matmul %34, %33, %cst_19 {dimension_numbers = #tpu.dot_dimension_numbers<[1], [0], [0], [1], [0, 0, 1, 1], [], []>} : vector<64x16xbf16>, vector<16x32xbf16>, vector<64x32xf32> -> vector<64x32xf32>
    %36 = arith.addf %31, %35 : vector<64x32xf32>
    %37 = vector.extract_strided_slice %27 {offsets = [128, 0], sizes = [64, 16], strides = [1, 1]} : vector<320x16xf32> to vector<64x16xf32>
    %38 = vector.extract_strided_slice %23 {offsets = [32, 0], sizes = [16, 32], strides = [1, 1]} : vector<80x32xbf16> to vector<16x32xbf16>
    %39 = arith.truncf %37 : vector<64x16xf32> to vector<64x16xbf16>
    %cst_20 = arith.constant dense<0.000000e+00> : vector<64x32xf32>
    %40 = tpu.matmul %39, %38, %cst_20 {dimension_numbers = #tpu.dot_dimension_numbers<[1], [0], [0], [1], [0, 0, 1, 1], [], []>} : vector<64x16xbf16>, vector<16x32xbf16>, vector<64x32xf32> -> vector<64x32xf32>
    %41 = arith.addf %36, %40 : vector<64x32xf32>
    %42 = vector.extract_strided_slice %27 {offsets = [192, 0], sizes = [64, 16], strides = [1, 1]} : vector<320x16xf32> to vector<64x16xf32>
    %43 = vector.extract_strided_slice %23 {offsets = [48, 0], sizes = [16, 32], strides = [1, 1]} : vector<80x32xbf16> to vector<16x32xbf16>
    %44 = arith.truncf %42 : vector<64x16xf32> to vector<64x16xbf16>
    %cst_21 = arith.constant dense<0.000000e+00> : vector<64x32xf32>
    %45 = tpu.matmul %44, %43, %cst_21 {dimension_numbers = #tpu.dot_dimension_numbers<[1], [0], [0], [1], [0, 0, 1, 1], [], []>} : vector<64x16xbf16>, vector<16x32xbf16>, vector<64x32xf32> -> vector<64x32xf32>
    %46 = arith.addf %41, %45 : vector<64x32xf32>
    %47 = vector.extract_strided_slice %27 {offsets = [256, 0], sizes = [64, 16], strides = [1, 1]} : vector<320x16xf32> to vector<64x16xf32>
    %48 = vector.extract_strided_slice %23 {offsets = [64, 0], sizes = [16, 32], strides = [1, 1]} : vector<80x32xbf16> to vector<16x32xbf16>
    %49 = arith.truncf %47 : vector<64x16xf32> to vector<64x16xbf16>
    %cst_22 = arith.constant dense<0.000000e+00> : vector<64x32xf32>
    %50 = tpu.matmul %49, %48, %cst_22 {dimension_numbers = #tpu.dot_dimension_numbers<[1], [0], [0], [1], [0, 0, 1, 1], [], []>} : vector<64x16xbf16>, vector<16x32xbf16>, vector<64x32xf32> -> vector<64x32xf32>
    %51 = arith.addf %46, %50 : vector<64x32xf32>
    %52 = vector.broadcast %24 : vector<1x32xf32> to vector<64x32xf32>
    %53 = arith.mulf %51, %52 : vector<64x32xf32>
    %54 = vector.broadcast %25 : vector<1x32xf32> to vector<64x32xf32>
    %55 = arith.addf %53, %54 : vector<64x32xf32>
    %cst_23 = arith.constant 0.000000e+00 : f32
    %56 = vector.broadcast %cst_23 : f32 to vector<64x32xf32>
    %57 = arith.maximumf %55, %56 : vector<64x32xf32>
    %c576 = arith.constant 576 : index
    %c0_24 = arith.constant 0 : index
    %58 = vector.load %arg1[%c576, %c0_24] : memref<1584x128xbf16, #tpu.memory_space<vmem>>, vector<32x2xbf16>
    %c608 = arith.constant 608 : index
    %c0_25 = arith.constant 0 : index
    %59 = vector.load %arg1[%c608, %c0_25] : memref<1584x128xbf16, #tpu.memory_space<vmem>>, vector<2x32xbf16>
    %60 = arith.truncf %57 : vector<64x32xf32> to vector<64x32xbf16>
    %cst_26 = arith.constant dense<0.000000e+00> : vector<2x32xf32>
    %61 = tpu.matmul %0, %60, %cst_26 {dimension_numbers = #tpu.dot_dimension_numbers<[1], [0], [0], [1], [0, 0, 1, 1], [], []>} : vector<2x64xbf16>, vector<64x32xbf16>, vector<2x32xf32> -> vector<2x32xf32>
    %62 = arith.truncf %61 : vector<2x32xf32> to vector<2x32xbf16>
    %cst_27 = arith.constant dense<0.000000e+00> : vector<2x2xf32>
    %63 = tpu.matmul %62, %58, %cst_27 {dimension_numbers = #tpu.dot_dimension_numbers<[1], [0], [0], [1], [0, 0, 1, 1], [], []>} : vector<2x32xbf16>, vector<32x2xbf16>, vector<2x2xf32> -> vector<2x2xf32>
    %cst_28 = arith.constant 0.000000e+00 : f32
    %64 = vector.broadcast %cst_28 : f32 to vector<2x2xf32>
    %65 = arith.maximumf %63, %64 : vector<2x2xf32>
    %66 = arith.truncf %65 : vector<2x2xf32> to vector<2x2xbf16>
    %cst_29 = arith.constant dense<0.000000e+00> : vector<2x32xf32>
    %67 = tpu.matmul %66, %59, %cst_29 {dimension_numbers = #tpu.dot_dimension_numbers<[1], [0], [0], [1], [0, 0, 1, 1], [], []>} : vector<2x2xbf16>, vector<2x32xbf16>, vector<2x32xf32> -> vector<2x32xf32>
    %68 = arith.negf %67 : vector<2x32xf32>
    %69 = math.exp %68 : vector<2x32xf32>
    %cst_30 = arith.constant 1.000000e+00 : f32
    %70 = vector.broadcast %cst_30 : f32 to vector<2x32xf32>
    %71 = arith.addf %70, %69 : vector<2x32xf32>
    %72 = arith.divf %70, %71 : vector<2x32xf32>
    %73 = arith.truncf %72 : vector<2x32xf32> to vector<2x32xbf16>
    %cst_31 = arith.constant dense<0.000000e+00> : vector<64x32xf32>
    %74 = tpu.matmul %1, %73, %cst_31 {dimension_numbers = #tpu.dot_dimension_numbers<[1], [0], [0], [1], [0, 0, 1, 1], [], []>} : vector<64x2xbf16>, vector<2x32xbf16>, vector<64x32xf32> -> vector<64x32xf32>
    %75 = arith.mulf %57, %74 : vector<64x32xf32>
    %c624 = arith.constant 624 : index
    %c0_32 = arith.constant 0 : index
    %76 = vector.load %arg1[%c624, %c0_32] : memref<1584x128xbf16, #tpu.memory_space<vmem>>, vector<160x64xbf16>
    %c784 = arith.constant 784 : index
    %c0_33 = arith.constant 0 : index
    %77 = vector.load %arg1[%c784, %c0_33] : memref<1584x128xbf16, #tpu.memory_space<vmem>>, vector<160x32xbf16>
    %c16_34 = arith.constant 16 : index
    %c0_35 = arith.constant 0 : index
    %78 = vector.load %arg2[%c16_34, %c0_35] : memref<136x128xf32, #tpu.memory_space<vmem>>, vector<1x32xf32>
    %c24 = arith.constant 24 : index
    %c0_36 = arith.constant 0 : index
    %79 = vector.load %arg2[%c24, %c0_36] : memref<136x128xf32, #tpu.memory_space<vmem>>, vector<1x32xf32>
    %80 = arith.truncf %75 : vector<64x32xf32> to vector<64x32xbf16>
    %cst_37 = arith.constant dense<0.000000e+00> : vector<160x32xf32>
    %81 = tpu.matmul %76, %80, %cst_37 {dimension_numbers = #tpu.dot_dimension_numbers<[1], [0], [0], [1], [0, 0, 1, 1], [], []>} : vector<160x64xbf16>, vector<64x32xbf16>, vector<160x32xf32> -> vector<160x32xf32>
    %82 = vector.extract_strided_slice %81 {offsets = [0, 0], sizes = [32, 32], strides = [1, 1]} : vector<160x32xf32> to vector<32x32xf32>
    %83 = vector.extract_strided_slice %77 {offsets = [0, 0], sizes = [32, 32], strides = [1, 1]} : vector<160x32xbf16> to vector<32x32xbf16>
    %84 = arith.truncf %82 : vector<32x32xf32> to vector<32x32xbf16>
    %cst_38 = arith.constant dense<0.000000e+00> : vector<32x32xf32>
    %85 = tpu.matmul %84, %83, %cst_38 {dimension_numbers = #tpu.dot_dimension_numbers<[1], [0], [0], [1], [0, 0, 1, 1], [], []>} : vector<32x32xbf16>, vector<32x32xbf16>, vector<32x32xf32> -> vector<32x32xf32>
    %86 = vector.extract_strided_slice %81 {offsets = [32, 0], sizes = [32, 32], strides = [1, 1]} : vector<160x32xf32> to vector<32x32xf32>
    %87 = vector.extract_strided_slice %77 {offsets = [32, 0], sizes = [32, 32], strides = [1, 1]} : vector<160x32xbf16> to vector<32x32xbf16>
    %88 = arith.truncf %86 : vector<32x32xf32> to vector<32x32xbf16>
    %cst_39 = arith.constant dense<0.000000e+00> : vector<32x32xf32>
    %89 = tpu.matmul %88, %87, %cst_39 {dimension_numbers = #tpu.dot_dimension_numbers<[1], [0], [0], [1], [0, 0, 1, 1], [], []>} : vector<32x32xbf16>, vector<32x32xbf16>, vector<32x32xf32> -> vector<32x32xf32>
    %90 = arith.addf %85, %89 : vector<32x32xf32>
    %91 = vector.extract_strided_slice %81 {offsets = [64, 0], sizes = [32, 32], strides = [1, 1]} : vector<160x32xf32> to vector<32x32xf32>
    %92 = vector.extract_strided_slice %77 {offsets = [64, 0], sizes = [32, 32], strides = [1, 1]} : vector<160x32xbf16> to vector<32x32xbf16>
    %93 = arith.truncf %91 : vector<32x32xf32> to vector<32x32xbf16>
    %cst_40 = arith.constant dense<0.000000e+00> : vector<32x32xf32>
    %94 = tpu.matmul %93, %92, %cst_40 {dimension_numbers = #tpu.dot_dimension_numbers<[1], [0], [0], [1], [0, 0, 1, 1], [], []>} : vector<32x32xbf16>, vector<32x32xbf16>, vector<32x32xf32> -> vector<32x32xf32>
    %95 = arith.addf %90, %94 : vector<32x32xf32>
    %96 = vector.extract_strided_slice %81 {offsets = [96, 0], sizes = [32, 32], strides = [1, 1]} : vector<160x32xf32> to vector<32x32xf32>
    %97 = vector.extract_strided_slice %77 {offsets = [96, 0], sizes = [32, 32], strides = [1, 1]} : vector<160x32xbf16> to vector<32x32xbf16>
    %98 = arith.truncf %96 : vector<32x32xf32> to vector<32x32xbf16>
    %cst_41 = arith.constant dense<0.000000e+00> : vector<32x32xf32>
    %99 = tpu.matmul %98, %97, %cst_41 {dimension_numbers = #tpu.dot_dimension_numbers<[1], [0], [0], [1], [0, 0, 1, 1], [], []>} : vector<32x32xbf16>, vector<32x32xbf16>, vector<32x32xf32> -> vector<32x32xf32>
    %100 = arith.addf %95, %99 : vector<32x32xf32>
    %101 = vector.extract_strided_slice %81 {offsets = [128, 0], sizes = [32, 32], strides = [1, 1]} : vector<160x32xf32> to vector<32x32xf32>
    %102 = vector.extract_strided_slice %77 {offsets = [128, 0], sizes = [32, 32], strides = [1, 1]} : vector<160x32xbf16> to vector<32x32xbf16>
    %103 = arith.truncf %101 : vector<32x32xf32> to vector<32x32xbf16>
    %cst_42 = arith.constant dense<0.000000e+00> : vector<32x32xf32>
    %104 = tpu.matmul %103, %102, %cst_42 {dimension_numbers = #tpu.dot_dimension_numbers<[1], [0], [0], [1], [0, 0, 1, 1], [], []>} : vector<32x32xbf16>, vector<32x32xbf16>, vector<32x32xf32> -> vector<32x32xf32>
    %105 = arith.addf %100, %104 : vector<32x32xf32>
    %106 = vector.broadcast %78 : vector<1x32xf32> to vector<32x32xf32>
    %107 = arith.mulf %105, %106 : vector<32x32xf32>
    %108 = vector.broadcast %79 : vector<1x32xf32> to vector<32x32xf32>
    %109 = arith.addf %107, %108 : vector<32x32xf32>
    %cst_43 = arith.constant 0.000000e+00 : f32
    %110 = vector.broadcast %cst_43 : f32 to vector<32x32xf32>
    %111 = arith.maximumf %109, %110 : vector<32x32xf32>
    %c944 = arith.constant 944 : index
    %c0_44 = arith.constant 0 : index
    %112 = vector.load %arg1[%c944, %c0_44] : memref<1584x128xbf16, #tpu.memory_space<vmem>>, vector<16x32xbf16>
    %c960 = arith.constant 960 : index
    %c0_45 = arith.constant 0 : index
    %113 = vector.load %arg1[%c960, %c0_45] : memref<1584x128xbf16, #tpu.memory_space<vmem>>, vector<16x32xbf16>
    %114 = arith.truncf %111 : vector<32x32xf32> to vector<32x32xbf16>
    %cst_46 = arith.constant dense<0.000000e+00> : vector<16x32xf32>
    %115 = tpu.matmul %112, %114, %cst_46 {dimension_numbers = #tpu.dot_dimension_numbers<[1], [0], [0], [1], [0, 0, 1, 1], [], []>} : vector<16x32xbf16>, vector<32x32xbf16>, vector<16x32xf32> -> vector<16x32xf32>
    %116 = arith.truncf %111 : vector<32x32xf32> to vector<32x32xbf16>
    %cst_47 = arith.constant dense<0.000000e+00> : vector<16x32xf32>
    %117 = tpu.matmul %113, %116, %cst_47 {dimension_numbers = #tpu.dot_dimension_numbers<[1], [0], [0], [1], [0, 0, 1, 1], [], []>} : vector<16x32xbf16>, vector<32x32xbf16>, vector<16x32xf32> -> vector<16x32xf32>
    %118 = arith.maximumf %115, %117 : vector<16x32xf32>
    %c976 = arith.constant 976 : index
    %c0_48 = arith.constant 0 : index
    %119 = vector.load %arg1[%c976, %c0_48] : memref<1584x128xbf16, #tpu.memory_space<vmem>>, vector<32x2xbf16>
    %c1008 = arith.constant 1008 : index
    %c0_49 = arith.constant 0 : index
    %120 = vector.load %arg1[%c1008, %c0_49] : memref<1584x128xbf16, #tpu.memory_space<vmem>>, vector<2x32xbf16>
    %c80 = arith.constant 80 : index
    %c0_50 = arith.constant 0 : index
    %121 = vector.load %arg1[%c80, %c0_50] : memref<1584x128xbf16, #tpu.memory_space<vmem>>, vector<2x16xbf16>
    %c96 = arith.constant 96 : index
    %c0_51 = arith.constant 0 : index
    %122 = vector.load %arg1[%c96, %c0_51] : memref<1584x128xbf16, #tpu.memory_space<vmem>>, vector<16x2xbf16>
    %123 = arith.truncf %118 : vector<16x32xf32> to vector<16x32xbf16>
    %cst_52 = arith.constant dense<0.000000e+00> : vector<2x32xf32>
    %124 = tpu.matmul %121, %123, %cst_52 {dimension_numbers = #tpu.dot_dimension_numbers<[1], [0], [0], [1], [0, 0, 1, 1], [], []>} : vector<2x16xbf16>, vector<16x32xbf16>, vector<2x32xf32> -> vector<2x32xf32>
    %125 = arith.truncf %124 : vector<2x32xf32> to vector<2x32xbf16>
    %cst_53 = arith.constant dense<0.000000e+00> : vector<2x2xf32>
    %126 = tpu.matmul %125, %119, %cst_53 {dimension_numbers = #tpu.dot_dimension_numbers<[1], [0], [0], [1], [0, 0, 1, 1], [], []>} : vector<2x32xbf16>, vector<32x2xbf16>, vector<2x2xf32> -> vector<2x2xf32>
    %cst_54 = arith.constant 0.000000e+00 : f32
    %127 = vector.broadcast %cst_54 : f32 to vector<2x2xf32>
    %128 = arith.maximumf %126, %127 : vector<2x2xf32>
    %129 = arith.truncf %128 : vector<2x2xf32> to vector<2x2xbf16>
    %cst_55 = arith.constant dense<0.000000e+00> : vector<2x32xf32>
    %130 = tpu.matmul %129, %120, %cst_55 {dimension_numbers = #tpu.dot_dimension_numbers<[1], [0], [0], [1], [0, 0, 1, 1], [], []>} : vector<2x2xbf16>, vector<2x32xbf16>, vector<2x32xf32> -> vector<2x32xf32>
    %131 = arith.negf %130 : vector<2x32xf32>
    %132 = math.exp %131 : vector<2x32xf32>
    %cst_56 = arith.constant 1.000000e+00 : f32
    %133 = vector.broadcast %cst_56 : f32 to vector<2x32xf32>
    %134 = arith.addf %133, %132 : vector<2x32xf32>
    %135 = arith.divf %133, %134 : vector<2x32xf32>
    %136 = arith.truncf %135 : vector<2x32xf32> to vector<2x32xbf16>
    %cst_57 = arith.constant dense<0.000000e+00> : vector<16x32xf32>
    %137 = tpu.matmul %122, %136, %cst_57 {dimension_numbers = #tpu.dot_dimension_numbers<[1], [0], [0], [1], [0, 0, 1, 1], [], []>} : vector<16x2xbf16>, vector<2x32xbf16>, vector<16x32xf32> -> vector<16x32xf32>
    %138 = arith.mulf %118, %137 : vector<16x32xf32>
    %c1024 = arith.constant 1024 : index
    %c0_58 = arith.constant 0 : index
    %139 = vector.load %arg1[%c1024, %c0_58] : memref<1584x128xbf16, #tpu.memory_space<vmem>>, vector<24x16xbf16>
    %c1056 = arith.constant 1056 : index
    %c0_59 = arith.constant 0 : index
    %140 = vector.load %arg1[%c1056, %c0_59] : memref<1584x128xbf16, #tpu.memory_space<vmem>>, vector<96x64xbf16>
    %c32 = arith.constant 32 : index
    %c0_60 = arith.constant 0 : index
    %141 = vector.load %arg2[%c32, %c0_60] : memref<136x128xf32, #tpu.memory_space<vmem>>, vector<1x64xf32>
    %c40 = arith.constant 40 : index
    %c0_61 = arith.constant 0 : index
    %142 = vector.load %arg2[%c40, %c0_61] : memref<136x128xf32, #tpu.memory_space<vmem>>, vector<1x64xf32>
    %143 = arith.truncf %138 : vector<16x32xf32> to vector<16x32xbf16>
    %cst_62 = arith.constant dense<0.000000e+00> : vector<24x32xf32>
    %144 = tpu.matmul %139, %143, %cst_62 {dimension_numbers = #tpu.dot_dimension_numbers<[1], [0], [0], [1], [0, 0, 1, 1], [], []>} : vector<24x16xbf16>, vector<16x32xbf16>, vector<24x32xf32> -> vector<24x32xf32>
    %145 = vector.extract_strided_slice %144 {offsets = [0, 0], sizes = [8, 32], strides = [1, 1]} : vector<24x32xf32> to vector<8x32xf32>
    %146 = vector.extract_strided_slice %140 {offsets = [0, 0], sizes = [32, 64], strides = [1, 1]} : vector<96x64xbf16> to vector<32x64xbf16>
    %147 = arith.truncf %145 : vector<8x32xf32> to vector<8x32xbf16>
    %cst_63 = arith.constant dense<0.000000e+00> : vector<8x64xf32>
    %148 = tpu.matmul %147, %146, %cst_63 {dimension_numbers = #tpu.dot_dimension_numbers<[1], [0], [0], [1], [0, 0, 1, 1], [], []>} : vector<8x32xbf16>, vector<32x64xbf16>, vector<8x64xf32> -> vector<8x64xf32>
    %149 = vector.extract_strided_slice %144 {offsets = [8, 0], sizes = [8, 32], strides = [1, 1]} : vector<24x32xf32> to vector<8x32xf32>
    %150 = vector.extract_strided_slice %140 {offsets = [32, 0], sizes = [32, 64], strides = [1, 1]} : vector<96x64xbf16> to vector<32x64xbf16>
    %151 = arith.truncf %149 : vector<8x32xf32> to vector<8x32xbf16>
    %cst_64 = arith.constant dense<0.000000e+00> : vector<8x64xf32>
    %152 = tpu.matmul %151, %150, %cst_64 {dimension_numbers = #tpu.dot_dimension_numbers<[1], [0], [0], [1], [0, 0, 1, 1], [], []>} : vector<8x32xbf16>, vector<32x64xbf16>, vector<8x64xf32> -> vector<8x64xf32>
    %153 = arith.addf %148, %152 : vector<8x64xf32>
    %154 = vector.extract_strided_slice %144 {offsets = [16, 0], sizes = [8, 32], strides = [1, 1]} : vector<24x32xf32> to vector<8x32xf32>
    %155 = vector.extract_strided_slice %140 {offsets = [64, 0], sizes = [32, 64], strides = [1, 1]} : vector<96x64xbf16> to vector<32x64xbf16>
    %156 = arith.truncf %154 : vector<8x32xf32> to vector<8x32xbf16>
    %cst_65 = arith.constant dense<0.000000e+00> : vector<8x64xf32>
    %157 = tpu.matmul %156, %155, %cst_65 {dimension_numbers = #tpu.dot_dimension_numbers<[1], [0], [0], [1], [0, 0, 1, 1], [], []>} : vector<8x32xbf16>, vector<32x64xbf16>, vector<8x64xf32> -> vector<8x64xf32>
    %158 = arith.addf %153, %157 : vector<8x64xf32>
    %159 = vector.broadcast %141 : vector<1x64xf32> to vector<8x64xf32>
    %160 = arith.mulf %158, %159 : vector<8x64xf32>
    %161 = vector.broadcast %142 : vector<1x64xf32> to vector<8x64xf32>
    %162 = arith.addf %160, %161 : vector<8x64xf32>
    %cst_66 = arith.constant 0.000000e+00 : f32
    %163 = vector.broadcast %cst_66 : f32 to vector<8x64xf32>
    %164 = arith.maximumf %162, %163 : vector<8x64xf32>
    %c1152 = arith.constant 1152 : index
    %c0_67 = arith.constant 0 : index
    %165 = vector.load %arg1[%c1152, %c0_67] : memref<1584x128xbf16, #tpu.memory_space<vmem>>, vector<4x8xbf16>
    %c1168 = arith.constant 1168 : index
    %c0_68 = arith.constant 0 : index
    %166 = vector.load %arg1[%c1168, %c0_68] : memref<1584x128xbf16, #tpu.memory_space<vmem>>, vector<4x8xbf16>
    %167 = arith.truncf %164 : vector<8x64xf32> to vector<8x64xbf16>
    %cst_69 = arith.constant dense<0.000000e+00> : vector<4x64xf32>
    %168 = tpu.matmul %165, %167, %cst_69 {dimension_numbers = #tpu.dot_dimension_numbers<[1], [0], [0], [1], [0, 0, 1, 1], [], []>} : vector<4x8xbf16>, vector<8x64xbf16>, vector<4x64xf32> -> vector<4x64xf32>
    %169 = arith.truncf %164 : vector<8x64xf32> to vector<8x64xbf16>
    %cst_70 = arith.constant dense<0.000000e+00> : vector<4x64xf32>
    %170 = tpu.matmul %166, %169, %cst_70 {dimension_numbers = #tpu.dot_dimension_numbers<[1], [0], [0], [1], [0, 0, 1, 1], [], []>} : vector<4x8xbf16>, vector<8x64xbf16>, vector<4x64xf32> -> vector<4x64xf32>
    %171 = arith.maximumf %168, %170 : vector<4x64xf32>
    %c1184 = arith.constant 1184 : index
    %c0_71 = arith.constant 0 : index
    %172 = vector.load %arg1[%c1184, %c0_71] : memref<1584x128xbf16, #tpu.memory_space<vmem>>, vector<64x4xbf16>
    %c1248 = arith.constant 1248 : index
    %c0_72 = arith.constant 0 : index
    %173 = vector.load %arg1[%c1248, %c0_72] : memref<1584x128xbf16, #tpu.memory_space<vmem>>, vector<4x64xbf16>
    %c128 = arith.constant 128 : index
    %c0_73 = arith.constant 0 : index
    %174 = vector.load %arg1[%c128, %c0_73] : memref<1584x128xbf16, #tpu.memory_space<vmem>>, vector<4x2xbf16>
    %175 = arith.truncf %171 : vector<4x64xf32> to vector<4x64xbf16>
    %cst_74 = arith.constant dense<0.000000e+00> : vector<2x64xf32>
    %176 = tpu.matmul %2, %175, %cst_74 {dimension_numbers = #tpu.dot_dimension_numbers<[1], [0], [0], [1], [0, 0, 1, 1], [], []>} : vector<2x4xbf16>, vector<4x64xbf16>, vector<2x64xf32> -> vector<2x64xf32>
    %177 = arith.truncf %176 : vector<2x64xf32> to vector<2x64xbf16>
    %cst_75 = arith.constant dense<0.000000e+00> : vector<2x4xf32>
    %178 = tpu.matmul %177, %172, %cst_75 {dimension_numbers = #tpu.dot_dimension_numbers<[1], [0], [0], [1], [0, 0, 1, 1], [], []>} : vector<2x64xbf16>, vector<64x4xbf16>, vector<2x4xf32> -> vector<2x4xf32>
    %cst_76 = arith.constant 0.000000e+00 : f32
    %179 = vector.broadcast %cst_76 : f32 to vector<2x4xf32>
    %180 = arith.maximumf %178, %179 : vector<2x4xf32>
    %181 = arith.truncf %180 : vector<2x4xf32> to vector<2x4xbf16>
    %cst_77 = arith.constant dense<0.000000e+00> : vector<2x64xf32>
    %182 = tpu.matmul %181, %173, %cst_77 {dimension_numbers = #tpu.dot_dimension_numbers<[1], [0], [0], [1], [0, 0, 1, 1], [], []>} : vector<2x4xbf16>, vector<4x64xbf16>, vector<2x64xf32> -> vector<2x64xf32>
    %183 = arith.negf %182 : vector<2x64xf32>
    %184 = math.exp %183 : vector<2x64xf32>
    %cst_78 = arith.constant 1.000000e+00 : f32
    %185 = vector.broadcast %cst_78 : f32 to vector<2x64xf32>
    %186 = arith.addf %185, %184 : vector<2x64xf32>
    %187 = arith.divf %185, %186 : vector<2x64xf32>
    %188 = arith.truncf %187 : vector<2x64xf32> to vector<2x64xbf16>
    %cst_79 = arith.constant dense<0.000000e+00> : vector<4x64xf32>
    %189 = tpu.matmul %174, %188, %cst_79 {dimension_numbers = #tpu.dot_dimension_numbers<[1], [0], [0], [1], [0, 0, 1, 1], [], []>} : vector<4x2xbf16>, vector<2x64xbf16>, vector<4x64xf32> -> vector<4x64xf32>
    %190 = arith.mulf %171, %189 : vector<4x64xf32>
    %c1264 = arith.constant 1264 : index
    %c0_80 = arith.constant 0 : index
    %191 = vector.load %arg1[%c1264, %c0_80] : memref<1584x128xbf16, #tpu.memory_space<vmem>>, vector<64x32xbf16>
    %192 = arith.truncf %190 : vector<4x64xf32> to vector<4x64xbf16>
    %cst_81 = arith.constant dense<0.000000e+00> : vector<4x32xf32>
    %193 = tpu.matmul %192, %191, %cst_81 {dimension_numbers = #tpu.dot_dimension_numbers<[1], [0], [0], [1], [0, 0, 1, 1], [], []>} : vector<4x64xbf16>, vector<64x32xbf16>, vector<4x32xf32> -> vector<4x32xf32>
    %c48 = arith.constant 48 : index
    %c0_82 = arith.constant 0 : index
    %194 = vector.load %arg2[%c48, %c0_82] : memref<136x128xf32, #tpu.memory_space<vmem>>, vector<1x32xf32>
    %195 = vector.broadcast %194 : vector<1x32xf32> to vector<4x32xf32>
    %196 = arith.addf %193, %195 : vector<4x32xf32>
    %c128_83 = arith.constant 128 : index
    %c0_84 = arith.constant 0 : index
    %197 = vector.load %arg2[%c128_83, %c0_84] : memref<136x128xf32, #tpu.memory_space<vmem>>, vector<4x4xf32>
    %c1328 = arith.constant 1328 : index
    %c0_85 = arith.constant 0 : index
    %198 = vector.load %arg1[%c1328, %c0_85] : memref<1584x128xbf16, #tpu.memory_space<vmem>>, vector<32x96xbf16>
    %199 = arith.truncf %196 : vector<4x32xf32> to vector<4x32xbf16>
    %cst_86 = arith.constant dense<0.000000e+00> : vector<4x96xf32>
    %200 = tpu.matmul %199, %198, %cst_86 {dimension_numbers = #tpu.dot_dimension_numbers<[1], [0], [0], [1], [0, 0, 1, 1], [], []>} : vector<4x32xbf16>, vector<32x96xbf16>, vector<4x96xf32> -> vector<4x96xf32>
    %c56 = arith.constant 56 : index
    %c0_87 = arith.constant 0 : index
    %201 = vector.load %arg2[%c56, %c0_87] : memref<136x128xf32, #tpu.memory_space<vmem>>, vector<1x96xf32>
    %202 = vector.broadcast %201 : vector<1x96xf32> to vector<4x96xf32>
    %203 = arith.addf %200, %202 : vector<4x96xf32>
    %204 = vector.extract_strided_slice %203 {offsets = [0, 0], sizes = [4, 32], strides = [1, 1]} : vector<4x96xf32> to vector<4x32xf32>
    %cst_88 = arith.constant 0.353553385 : f32
    %205 = vector.broadcast %cst_88 : f32 to vector<4x32xf32>
    %206 = arith.mulf %204, %205 : vector<4x32xf32>
    %207 = vector.extract_strided_slice %203 {offsets = [0, 32], sizes = [4, 32], strides = [1, 1]} : vector<4x96xf32> to vector<4x32xf32>
    %208 = vector.extract_strided_slice %203 {offsets = [0, 64], sizes = [4, 32], strides = [1, 1]} : vector<4x96xf32> to vector<4x32xf32>
    %c1360 = arith.constant 1360 : index
    %c0_89 = arith.constant 0 : index
    %209 = vector.load %arg1[%c1360, %c0_89] : memref<1584x128xbf16, #tpu.memory_space<vmem>>, vector<32x32xbf16>
    %210 = vector.extract_strided_slice %206 {offsets = [0, 0], sizes = [4, 8], strides = [1, 1]} : vector<4x32xf32> to vector<4x8xf32>
    %211 = vector.extract_strided_slice %207 {offsets = [0, 0], sizes = [4, 8], strides = [1, 1]} : vector<4x32xf32> to vector<4x8xf32>
    %212 = vector.extract_strided_slice %208 {offsets = [0, 0], sizes = [4, 8], strides = [1, 1]} : vector<4x32xf32> to vector<4x8xf32>
    %213 = arith.truncf %210 : vector<4x8xf32> to vector<4x8xbf16>
    %214 = arith.truncf %211 : vector<4x8xf32> to vector<4x8xbf16>
    %cst_90 = arith.constant dense<0.000000e+00> : vector<4x4xf32>
    %215 = tpu.matmul %213, %214, %cst_90 {dimension_numbers = #tpu.dot_dimension_numbers<[1], [1], [0], [0], [0, 0, 1, 0], [], []>} : vector<4x8xbf16>, vector<4x8xbf16>, vector<4x4xf32> -> vector<4x4xf32>
    %216 = arith.addf %215, %197 : vector<4x4xf32>
    %cst_91 = arith.constant dense<0xFF800000> : vector<4xf32>
    %217 = vector.multi_reduction <maximumf>, %216, %cst_91 [1] : vector<4x4xf32> to vector<4xf32>
    %218 = vector.shape_cast %217 : vector<4xf32> to vector<4x1xf32>
    %219 = vector.broadcast %218 : vector<4x1xf32> to vector<4x4xf32>
    %220 = arith.subf %216, %219 : vector<4x4xf32>
    %221 = math.exp %220 : vector<4x4xf32>
    %cst_92 = arith.constant dense<0.000000e+00> : vector<4xf32>
    %222 = vector.multi_reduction <add>, %221, %cst_92 [1] : vector<4x4xf32> to vector<4xf32>
    %223 = vector.shape_cast %222 : vector<4xf32> to vector<4x1xf32>
    %224 = tpu.reciprocal %223 {approx = true} : vector<4x1xf32> -> vector<4x1xf32>
    %225 = vector.broadcast %224 : vector<4x1xf32> to vector<4x4xf32>
    %226 = arith.mulf %221, %225 : vector<4x4xf32>
    %227 = arith.truncf %226 : vector<4x4xf32> to vector<4x4xbf16>
    %228 = arith.truncf %212 : vector<4x8xf32> to vector<4x8xbf16>
    %cst_93 = arith.constant dense<0.000000e+00> : vector<4x8xf32>
    %229 = tpu.matmul %227, %228, %cst_93 {dimension_numbers = #tpu.dot_dimension_numbers<[1], [0], [0], [1], [0, 0, 1, 1], [], []>} : vector<4x4xbf16>, vector<4x8xbf16>, vector<4x8xf32> -> vector<4x8xf32>
    %230 = vector.extract_strided_slice %209 {offsets = [0, 0], sizes = [8, 32], strides = [1, 1]} : vector<32x32xbf16> to vector<8x32xbf16>
    %231 = arith.truncf %229 : vector<4x8xf32> to vector<4x8xbf16>
    %cst_94 = arith.constant dense<0.000000e+00> : vector<4x32xf32>
    %232 = tpu.matmul %231, %230, %cst_94 {dimension_numbers = #tpu.dot_dimension_numbers<[1], [0], [0], [1], [0, 0, 1, 1], [], []>} : vector<4x8xbf16>, vector<8x32xbf16>, vector<4x32xf32> -> vector<4x32xf32>
    %233 = vector.extract_strided_slice %206 {offsets = [0, 8], sizes = [4, 8], strides = [1, 1]} : vector<4x32xf32> to vector<4x8xf32>
    %234 = vector.extract_strided_slice %207 {offsets = [0, 8], sizes = [4, 8], strides = [1, 1]} : vector<4x32xf32> to vector<4x8xf32>
    %235 = vector.extract_strided_slice %208 {offsets = [0, 8], sizes = [4, 8], strides = [1, 1]} : vector<4x32xf32> to vector<4x8xf32>
    %236 = arith.truncf %233 : vector<4x8xf32> to vector<4x8xbf16>
    %237 = arith.truncf %234 : vector<4x8xf32> to vector<4x8xbf16>
    %cst_95 = arith.constant dense<0.000000e+00> : vector<4x4xf32>
    %238 = tpu.matmul %236, %237, %cst_95 {dimension_numbers = #tpu.dot_dimension_numbers<[1], [1], [0], [0], [0, 0, 1, 0], [], []>} : vector<4x8xbf16>, vector<4x8xbf16>, vector<4x4xf32> -> vector<4x4xf32>
    %239 = arith.addf %238, %197 : vector<4x4xf32>
    %cst_96 = arith.constant dense<0xFF800000> : vector<4xf32>
    %240 = vector.multi_reduction <maximumf>, %239, %cst_96 [1] : vector<4x4xf32> to vector<4xf32>
    %241 = vector.shape_cast %240 : vector<4xf32> to vector<4x1xf32>
    %242 = vector.broadcast %241 : vector<4x1xf32> to vector<4x4xf32>
    %243 = arith.subf %239, %242 : vector<4x4xf32>
    %244 = math.exp %243 : vector<4x4xf32>
    %cst_97 = arith.constant dense<0.000000e+00> : vector<4xf32>
    %245 = vector.multi_reduction <add>, %244, %cst_97 [1] : vector<4x4xf32> to vector<4xf32>
    %246 = vector.shape_cast %245 : vector<4xf32> to vector<4x1xf32>
    %247 = tpu.reciprocal %246 {approx = true} : vector<4x1xf32> -> vector<4x1xf32>
    %248 = vector.broadcast %247 : vector<4x1xf32> to vector<4x4xf32>
    %249 = arith.mulf %244, %248 : vector<4x4xf32>
    %250 = arith.truncf %249 : vector<4x4xf32> to vector<4x4xbf16>
    %251 = arith.truncf %235 : vector<4x8xf32> to vector<4x8xbf16>
    %cst_98 = arith.constant dense<0.000000e+00> : vector<4x8xf32>
    %252 = tpu.matmul %250, %251, %cst_98 {dimension_numbers = #tpu.dot_dimension_numbers<[1], [0], [0], [1], [0, 0, 1, 1], [], []>} : vector<4x4xbf16>, vector<4x8xbf16>, vector<4x8xf32> -> vector<4x8xf32>
    %253 = vector.extract_strided_slice %209 {offsets = [8, 0], sizes = [8, 32], strides = [1, 1]} : vector<32x32xbf16> to vector<8x32xbf16>
    %254 = arith.truncf %252 : vector<4x8xf32> to vector<4x8xbf16>
    %cst_99 = arith.constant dense<0.000000e+00> : vector<4x32xf32>
    %255 = tpu.matmul %254, %253, %cst_99 {dimension_numbers = #tpu.dot_dimension_numbers<[1], [0], [0], [1], [0, 0, 1, 1], [], []>} : vector<4x8xbf16>, vector<8x32xbf16>, vector<4x32xf32> -> vector<4x32xf32>
    %256 = arith.addf %232, %255 : vector<4x32xf32>
    %257 = vector.extract_strided_slice %206 {offsets = [0, 16], sizes = [4, 8], strides = [1, 1]} : vector<4x32xf32> to vector<4x8xf32>
    %258 = vector.extract_strided_slice %207 {offsets = [0, 16], sizes = [4, 8], strides = [1, 1]} : vector<4x32xf32> to vector<4x8xf32>
    %259 = vector.extract_strided_slice %208 {offsets = [0, 16], sizes = [4, 8], strides = [1, 1]} : vector<4x32xf32> to vector<4x8xf32>
    %260 = arith.truncf %257 : vector<4x8xf32> to vector<4x8xbf16>
    %261 = arith.truncf %258 : vector<4x8xf32> to vector<4x8xbf16>
    %cst_100 = arith.constant dense<0.000000e+00> : vector<4x4xf32>
    %262 = tpu.matmul %260, %261, %cst_100 {dimension_numbers = #tpu.dot_dimension_numbers<[1], [1], [0], [0], [0, 0, 1, 0], [], []>} : vector<4x8xbf16>, vector<4x8xbf16>, vector<4x4xf32> -> vector<4x4xf32>
    %263 = arith.addf %262, %197 : vector<4x4xf32>
    %cst_101 = arith.constant dense<0xFF800000> : vector<4xf32>
    %264 = vector.multi_reduction <maximumf>, %263, %cst_101 [1] : vector<4x4xf32> to vector<4xf32>
    %265 = vector.shape_cast %264 : vector<4xf32> to vector<4x1xf32>
    %266 = vector.broadcast %265 : vector<4x1xf32> to vector<4x4xf32>
    %267 = arith.subf %263, %266 : vector<4x4xf32>
    %268 = math.exp %267 : vector<4x4xf32>
    %cst_102 = arith.constant dense<0.000000e+00> : vector<4xf32>
    %269 = vector.multi_reduction <add>, %268, %cst_102 [1] : vector<4x4xf32> to vector<4xf32>
    %270 = vector.shape_cast %269 : vector<4xf32> to vector<4x1xf32>
    %271 = tpu.reciprocal %270 {approx = true} : vector<4x1xf32> -> vector<4x1xf32>
    %272 = vector.broadcast %271 : vector<4x1xf32> to vector<4x4xf32>
    %273 = arith.mulf %268, %272 : vector<4x4xf32>
    %274 = arith.truncf %273 : vector<4x4xf32> to vector<4x4xbf16>
    %275 = arith.truncf %259 : vector<4x8xf32> to vector<4x8xbf16>
    %cst_103 = arith.constant dense<0.000000e+00> : vector<4x8xf32>
    %276 = tpu.matmul %274, %275, %cst_103 {dimension_numbers = #tpu.dot_dimension_numbers<[1], [0], [0], [1], [0, 0, 1, 1], [], []>} : vector<4x4xbf16>, vector<4x8xbf16>, vector<4x8xf32> -> vector<4x8xf32>
    %277 = vector.extract_strided_slice %209 {offsets = [16, 0], sizes = [8, 32], strides = [1, 1]} : vector<32x32xbf16> to vector<8x32xbf16>
    %278 = arith.truncf %276 : vector<4x8xf32> to vector<4x8xbf16>
    %cst_104 = arith.constant dense<0.000000e+00> : vector<4x32xf32>
    %279 = tpu.matmul %278, %277, %cst_104 {dimension_numbers = #tpu.dot_dimension_numbers<[1], [0], [0], [1], [0, 0, 1, 1], [], []>} : vector<4x8xbf16>, vector<8x32xbf16>, vector<4x32xf32> -> vector<4x32xf32>
    %280 = arith.addf %256, %279 : vector<4x32xf32>
    %281 = vector.extract_strided_slice %206 {offsets = [0, 24], sizes = [4, 8], strides = [1, 1]} : vector<4x32xf32> to vector<4x8xf32>
    %282 = vector.extract_strided_slice %207 {offsets = [0, 24], sizes = [4, 8], strides = [1, 1]} : vector<4x32xf32> to vector<4x8xf32>
    %283 = vector.extract_strided_slice %208 {offsets = [0, 24], sizes = [4, 8], strides = [1, 1]} : vector<4x32xf32> to vector<4x8xf32>
    %284 = arith.truncf %281 : vector<4x8xf32> to vector<4x8xbf16>
    %285 = arith.truncf %282 : vector<4x8xf32> to vector<4x8xbf16>
    %cst_105 = arith.constant dense<0.000000e+00> : vector<4x4xf32>
    %286 = tpu.matmul %284, %285, %cst_105 {dimension_numbers = #tpu.dot_dimension_numbers<[1], [1], [0], [0], [0, 0, 1, 0], [], []>} : vector<4x8xbf16>, vector<4x8xbf16>, vector<4x4xf32> -> vector<4x4xf32>
    %287 = arith.addf %286, %197 : vector<4x4xf32>
    %cst_106 = arith.constant dense<0xFF800000> : vector<4xf32>
    %288 = vector.multi_reduction <maximumf>, %287, %cst_106 [1] : vector<4x4xf32> to vector<4xf32>
    %289 = vector.shape_cast %288 : vector<4xf32> to vector<4x1xf32>
    %290 = vector.broadcast %289 : vector<4x1xf32> to vector<4x4xf32>
    %291 = arith.subf %287, %290 : vector<4x4xf32>
    %292 = math.exp %291 : vector<4x4xf32>
    %cst_107 = arith.constant dense<0.000000e+00> : vector<4xf32>
    %293 = vector.multi_reduction <add>, %292, %cst_107 [1] : vector<4x4xf32> to vector<4xf32>
    %294 = vector.shape_cast %293 : vector<4xf32> to vector<4x1xf32>
    %295 = tpu.reciprocal %294 {approx = true} : vector<4x1xf32> -> vector<4x1xf32>
    %296 = vector.broadcast %295 : vector<4x1xf32> to vector<4x4xf32>
    %297 = arith.mulf %292, %296 : vector<4x4xf32>
    %298 = arith.truncf %297 : vector<4x4xf32> to vector<4x4xbf16>
    %299 = arith.truncf %283 : vector<4x8xf32> to vector<4x8xbf16>
    %cst_108 = arith.constant dense<0.000000e+00> : vector<4x8xf32>
    %300 = tpu.matmul %298, %299, %cst_108 {dimension_numbers = #tpu.dot_dimension_numbers<[1], [0], [0], [1], [0, 0, 1, 1], [], []>} : vector<4x4xbf16>, vector<4x8xbf16>, vector<4x8xf32> -> vector<4x8xf32>
    %301 = vector.extract_strided_slice %209 {offsets = [24, 0], sizes = [8, 32], strides = [1, 1]} : vector<32x32xbf16> to vector<8x32xbf16>
    %302 = arith.truncf %300 : vector<4x8xf32> to vector<4x8xbf16>
    %cst_109 = arith.constant dense<0.000000e+00> : vector<4x32xf32>
    %303 = tpu.matmul %302, %301, %cst_109 {dimension_numbers = #tpu.dot_dimension_numbers<[1], [0], [0], [1], [0, 0, 1, 1], [], []>} : vector<4x8xbf16>, vector<8x32xbf16>, vector<4x32xf32> -> vector<4x32xf32>
    %304 = arith.addf %280, %303 : vector<4x32xf32>
    %c64 = arith.constant 64 : index
    %c0_110 = arith.constant 0 : index
    %305 = vector.load %arg2[%c64, %c0_110] : memref<136x128xf32, #tpu.memory_space<vmem>>, vector<1x32xf32>
    %306 = vector.broadcast %305 : vector<1x32xf32> to vector<4x32xf32>
    %307 = arith.addf %304, %306 : vector<4x32xf32>
    %308 = arith.addf %196, %307 : vector<4x32xf32>
    %c72 = arith.constant 72 : index
    %c0_111 = arith.constant 0 : index
    %309 = vector.load %arg2[%c72, %c0_111] : memref<136x128xf32, #tpu.memory_space<vmem>>, vector<1x32xf32>
    %c80_112 = arith.constant 80 : index
    %c0_113 = arith.constant 0 : index
    %310 = vector.load %arg2[%c80_112, %c0_113] : memref<136x128xf32, #tpu.memory_space<vmem>>, vector<1x32xf32>
    %cst_114 = arith.constant dense<0.000000e+00> : vector<4xf32>
    %311 = vector.multi_reduction <add>, %308, %cst_114 [1] : vector<4x32xf32> to vector<4xf32>
    %312 = vector.shape_cast %311 : vector<4xf32> to vector<4x1xf32>
    %cst_115 = arith.constant 3.200000e+01 : f32
    %313 = vector.broadcast %cst_115 : f32 to vector<4x1xf32>
    %314 = arith.divf %312, %313 : vector<4x1xf32>
    %315 = vector.broadcast %314 : vector<4x1xf32> to vector<4x32xf32>
    %316 = arith.subf %308, %315 : vector<4x32xf32>
    %317 = arith.mulf %316, %316 : vector<4x32xf32>
    %cst_116 = arith.constant dense<0.000000e+00> : vector<4xf32>
    %318 = vector.multi_reduction <add>, %317, %cst_116 [1] : vector<4x32xf32> to vector<4xf32>
    %319 = vector.shape_cast %318 : vector<4xf32> to vector<4x1xf32>
    %cst_117 = arith.constant 3.200000e+01 : f32
    %320 = vector.broadcast %cst_117 : f32 to vector<4x1xf32>
    %321 = arith.divf %319, %320 : vector<4x1xf32>
    %322 = vector.broadcast %314 : vector<4x1xf32> to vector<4x32xf32>
    %323 = arith.subf %308, %322 : vector<4x32xf32>
    %cst_118 = arith.constant 9.99999974E-6 : f32
    %324 = vector.broadcast %cst_118 : f32 to vector<4x1xf32>
    %325 = arith.addf %321, %324 : vector<4x1xf32>
    %326 = math.rsqrt %325 : vector<4x1xf32>
    %327 = vector.broadcast %326 : vector<4x1xf32> to vector<4x32xf32>
    %328 = arith.mulf %323, %327 : vector<4x32xf32>
    %329 = vector.broadcast %309 : vector<1x32xf32> to vector<4x32xf32>
    %330 = arith.mulf %328, %329 : vector<4x32xf32>
    %331 = vector.broadcast %310 : vector<1x32xf32> to vector<4x32xf32>
    %332 = arith.addf %330, %331 : vector<4x32xf32>
    %c1392 = arith.constant 1392 : index
    %c0_119 = arith.constant 0 : index
    %333 = vector.load %arg1[%c1392, %c0_119] : memref<1584x128xbf16, #tpu.memory_space<vmem>>, vector<32x128xbf16>
    %334 = arith.truncf %332 : vector<4x32xf32> to vector<4x32xbf16>
    %cst_120 = arith.constant dense<0.000000e+00> : vector<4x128xf32>
    %335 = tpu.matmul %334, %333, %cst_120 {dimension_numbers = #tpu.dot_dimension_numbers<[1], [0], [0], [1], [0, 0, 1, 1], [], []>} : vector<4x32xbf16>, vector<32x128xbf16>, vector<4x128xf32> -> vector<4x128xf32>
    %c88 = arith.constant 88 : index
    %c0_121 = arith.constant 0 : index
    %336 = vector.load %arg2[%c88, %c0_121] : memref<136x128xf32, #tpu.memory_space<vmem>>, vector<1x128xf32>
    %337 = vector.broadcast %336 : vector<1x128xf32> to vector<4x128xf32>
    %338 = arith.addf %335, %337 : vector<4x128xf32>
    %cst_122 = arith.constant 0.000000e+00 : f32
    %339 = vector.broadcast %cst_122 : f32 to vector<4x128xf32>
    %340 = arith.maximumf %338, %339 : vector<4x128xf32>
    %c1424 = arith.constant 1424 : index
    %c0_123 = arith.constant 0 : index
    %341 = vector.load %arg1[%c1424, %c0_123] : memref<1584x128xbf16, #tpu.memory_space<vmem>>, vector<128x32xbf16>
    %342 = arith.truncf %340 : vector<4x128xf32> to vector<4x128xbf16>
    %cst_124 = arith.constant dense<0.000000e+00> : vector<4x32xf32>
    %343 = tpu.matmul %342, %341, %cst_124 {dimension_numbers = #tpu.dot_dimension_numbers<[1], [0], [0], [1], [0, 0, 1, 1], [], []>} : vector<4x128xbf16>, vector<128x32xbf16>, vector<4x32xf32> -> vector<4x32xf32>
    %c96_125 = arith.constant 96 : index
    %c0_126 = arith.constant 0 : index
    %344 = vector.load %arg2[%c96_125, %c0_126] : memref<136x128xf32, #tpu.memory_space<vmem>>, vector<1x32xf32>
    %345 = vector.broadcast %344 : vector<1x32xf32> to vector<4x32xf32>
    %346 = arith.addf %343, %345 : vector<4x32xf32>
    %347 = arith.addf %332, %346 : vector<4x32xf32>
    %c104 = arith.constant 104 : index
    %c0_127 = arith.constant 0 : index
    %348 = vector.load %arg2[%c104, %c0_127] : memref<136x128xf32, #tpu.memory_space<vmem>>, vector<1x32xf32>
    %c112_128 = arith.constant 112 : index
    %c0_129 = arith.constant 0 : index
    %349 = vector.load %arg2[%c112_128, %c0_129] : memref<136x128xf32, #tpu.memory_space<vmem>>, vector<1x32xf32>
    %cst_130 = arith.constant dense<0.000000e+00> : vector<4xf32>
    %350 = vector.multi_reduction <add>, %347, %cst_130 [1] : vector<4x32xf32> to vector<4xf32>
    %351 = vector.shape_cast %350 : vector<4xf32> to vector<4x1xf32>
    %cst_131 = arith.constant 3.200000e+01 : f32
    %352 = vector.broadcast %cst_131 : f32 to vector<4x1xf32>
    %353 = arith.divf %351, %352 : vector<4x1xf32>
    %354 = vector.broadcast %353 : vector<4x1xf32> to vector<4x32xf32>
    %355 = arith.subf %347, %354 : vector<4x32xf32>
    %356 = arith.mulf %355, %355 : vector<4x32xf32>
    %cst_132 = arith.constant dense<0.000000e+00> : vector<4xf32>
    %357 = vector.multi_reduction <add>, %356, %cst_132 [1] : vector<4x32xf32> to vector<4xf32>
    %358 = vector.shape_cast %357 : vector<4xf32> to vector<4x1xf32>
    %cst_133 = arith.constant 3.200000e+01 : f32
    %359 = vector.broadcast %cst_133 : f32 to vector<4x1xf32>
    %360 = arith.divf %358, %359 : vector<4x1xf32>
    %361 = vector.broadcast %353 : vector<4x1xf32> to vector<4x32xf32>
    %362 = arith.subf %347, %361 : vector<4x32xf32>
    %cst_134 = arith.constant 9.99999974E-6 : f32
    %363 = vector.broadcast %cst_134 : f32 to vector<4x1xf32>
    %364 = arith.addf %360, %363 : vector<4x1xf32>
    %365 = math.rsqrt %364 : vector<4x1xf32>
    %366 = vector.broadcast %365 : vector<4x1xf32> to vector<4x32xf32>
    %367 = arith.mulf %362, %366 : vector<4x32xf32>
    %368 = vector.broadcast %348 : vector<1x32xf32> to vector<4x32xf32>
    %369 = arith.mulf %367, %368 : vector<4x32xf32>
    %370 = vector.broadcast %349 : vector<1x32xf32> to vector<4x32xf32>
    %371 = arith.addf %369, %370 : vector<4x32xf32>
    %372 = arith.truncf %371 : vector<4x32xf32> to vector<4x32xbf16>
    %cst_135 = arith.constant dense<0.000000e+00> : vector<2x32xf32>
    %373 = tpu.matmul %2, %372, %cst_135 {dimension_numbers = #tpu.dot_dimension_numbers<[1], [0], [0], [1], [0, 0, 1, 1], [], []>} : vector<2x4xbf16>, vector<4x32xbf16>, vector<2x32xf32> -> vector<2x32xf32>
    %c1552 = arith.constant 1552 : index
    %c0_136 = arith.constant 0 : index
    %374 = vector.load %arg1[%c1552, %c0_136] : memref<1584x128xbf16, #tpu.memory_space<vmem>>, vector<32x24xbf16>
    %375 = arith.truncf %373 : vector<2x32xf32> to vector<2x32xbf16>
    %cst_137 = arith.constant dense<0.000000e+00> : vector<2x24xf32>
    %376 = tpu.matmul %375, %374, %cst_137 {dimension_numbers = #tpu.dot_dimension_numbers<[1], [0], [0], [1], [0, 0, 1, 1], [], []>} : vector<2x32xbf16>, vector<32x24xbf16>, vector<2x24xf32> -> vector<2x24xf32>
    %c120 = arith.constant 120 : index
    %c0_138 = arith.constant 0 : index
    %377 = vector.load %arg2[%c120, %c0_138] : memref<136x128xf32, #tpu.memory_space<vmem>>, vector<1x24xf32>
    %378 = vector.broadcast %377 : vector<1x24xf32> to vector<2x24xf32>
    %379 = arith.addf %376, %378 : vector<2x24xf32>
    %380 = vector.extract_strided_slice %379 {offsets = [0, 0], sizes = [2, 8], strides = [1, 1]} : vector<2x24xf32> to vector<2x8xf32>
    %381 = arith.negf %380 : vector<2x8xf32>
    %382 = math.exp %381 : vector<2x8xf32>
    %cst_139 = arith.constant 1.000000e+00 : f32
    %383 = vector.broadcast %cst_139 : f32 to vector<2x8xf32>
    %384 = arith.addf %383, %382 : vector<2x8xf32>
    %385 = arith.divf %383, %384 : vector<2x8xf32>
    %386 = vector.extract_strided_slice %379 {offsets = [0, 8], sizes = [2, 8], strides = [1, 1]} : vector<2x24xf32> to vector<2x8xf32>
    %cst_140 = arith.constant dense<0xFF800000> : vector<2xf32>
    %387 = vector.multi_reduction <maximumf>, %386, %cst_140 [1] : vector<2x8xf32> to vector<2xf32>
    %388 = vector.shape_cast %387 : vector<2xf32> to vector<2x1xf32>
    %389 = vector.broadcast %388 : vector<2x1xf32> to vector<2x8xf32>
    %390 = arith.subf %386, %389 : vector<2x8xf32>
    %391 = math.exp %390 : vector<2x8xf32>
    %cst_141 = arith.constant dense<0.000000e+00> : vector<2xf32>
    %392 = vector.multi_reduction <add>, %391, %cst_141 [1] : vector<2x8xf32> to vector<2xf32>
    %393 = vector.shape_cast %392 : vector<2xf32> to vector<2x1xf32>
    %394 = tpu.reciprocal %393 {approx = true} : vector<2x1xf32> -> vector<2x1xf32>
    %395 = vector.broadcast %394 : vector<2x1xf32> to vector<2x8xf32>
    %396 = arith.mulf %391, %395 : vector<2x8xf32>
    %397 = vector.extract_strided_slice %379 {offsets = [0, 16], sizes = [2, 8], strides = [1, 1]} : vector<2x24xf32> to vector<2x8xf32>
    %cst_142 = arith.constant dense<0xFF800000> : vector<2xf32>
    %398 = vector.multi_reduction <maximumf>, %397, %cst_142 [1] : vector<2x8xf32> to vector<2xf32>
    %399 = vector.shape_cast %398 : vector<2xf32> to vector<2x1xf32>
    %400 = vector.broadcast %399 : vector<2x1xf32> to vector<2x8xf32>
    %401 = arith.subf %397, %400 : vector<2x8xf32>
    %402 = math.exp %401 : vector<2x8xf32>
    %cst_143 = arith.constant dense<0.000000e+00> : vector<2xf32>
    %403 = vector.multi_reduction <add>, %402, %cst_143 [1] : vector<2x8xf32> to vector<2xf32>
    %404 = vector.shape_cast %403 : vector<2xf32> to vector<2x1xf32>
    %405 = tpu.reciprocal %404 {approx = true} : vector<2x1xf32> -> vector<2x1xf32>
    %406 = vector.broadcast %405 : vector<2x1xf32> to vector<2x8xf32>
    %407 = arith.mulf %402, %406 : vector<2x8xf32>
    %408 = tpu.concatenate %385, %396, %407 in 1 : vector<2x8xf32>, vector<2x8xf32>, vector<2x8xf32> -> vector<2x24xf32>
    %c0_144 = arith.constant 0 : index
    %c0_145 = arith.constant 0 : index
    %409 = vector.load %arg3[%c0_144, %c0_145] : memref<2x24xf32, #tpu.memory_space<vmem>>, vector<2x24xf32>
    tpu.vector_store %arg3[%c0_144, %c0_145], %408 {strides = array<i32>} : memref<2x24xf32, #tpu.memory_space<vmem>>, vector<2x24xf32>,
    return
  }
}

</mosaic_0001>

<llo_original>
// kernel: forward.1
$region0: #{forward.1}
  #allocation0 [shape = 'u32[]', space=smem, size = 0x4, offset = 0x4, fixed_abs, tag = 'smem constant byte address 0x4 - core index']
  #allocation1 [shape = 'u32[144,128]{1,0:T(1,128)}', space=vmem, size = 0x12000, scoped, tag = 'internal scratch']
  %s0 = inlined_call_operand.vmem [shape: f32[64,16], index: 0, kind: input, shape index: {}]
  %s1 = inlined_call_operand.hbm [shape: bf16[1584,128], index: 1, kind: input, shape index: {}]
  %s2 = inlined_call_operand.hbm [shape: f32[136,128], index: 2, kind: input, shape index: {}]
  %s3 = inlined_call_operand.vmem [shape: f32[2,24], index: 3, kind: output, shape index: {}]
  %s4 = sld [smem:[#allocation0]]
  $region30: #{forward.1} parent=0
    _
  %s6 = ssub.s32 1, %s4
  %s7 = scalar_select 0, %s6, %s4
  $region1: #{forward.1} parent=0
    #allocation2 [shape = 'u8[405504]{0}', space=vmem, size = 0x63000, scoped, tag = 'input window, operand 1, single buffered']
    #allocation3 [shape = 's32[1]{0}', space=sflag, size = 0x4, scoped, tag = 'scoped memory for forward.1']
    #allocation4 [shape = 'u8[69632]{0}', space=vmem, size = 0x11000, scoped, tag = 'input window, operand 2, single buffered']
    #allocation5 [shape = 's32[1]{0}', space=sflag, size = 0x4, scoped, tag = 'scoped memory for forward.1']
    %8 = vsyncpa [#allocation3], 0
    %9 = vsyncpa [#allocation5], 0
    // Predicated region
    $region2: #{forward.1} parent=1 // pred_check
      _
    $region3: #{forward.1} parent=1 // pred_check_branch
      %11 = sbr.rel (0) target = $region5
    $region4: #{forward.1} parent=1 // pred_region
      _
    $region5: #{forward.1} parent=1 // pred_fallthru
      _
    // Predicated region
    $region6: #{forward.1} parent=1 // pred_check
      _
    $region7: #{forward.1} parent=1 // pred_check_branch
      %13 = sbr.rel (0) target = $region9
    $region8: #{forward.1} parent=1 // pred_region
      %s15 = ssub.s32 12672, 12672
      %16 = vsyncadd [#allocation3], %s15
      %s17 = sshll.u32 [#allocation2], 4
      %s18 = int_to_ptr.vmem [resolvable:$true] %s17
      %23 = dma.hbm_to_vmem [thread:$0]  %s1, 12672, %s18, [#allocation3], 64, 64, 4
    $region9: #{forward.1} parent=1 // pred_fallthru
      _
    // Predicated region
    $region10: #{forward.1} parent=1 // pred_check
      _
    $region11: #{forward.1} parent=1 // pred_check_branch
      %25 = sbr.rel (0) target = $region13
    $region12: #{forward.1} parent=1 // pred_region
      %s27 = ssub.s32 2176, 2176
      %28 = vsyncadd [#allocation5], %s27
      %s29 = sshll.u32 [#allocation4], 4
      %s30 = int_to_ptr.vmem [resolvable:$true] %s29
      %35 = dma.hbm_to_vmem [thread:$0]  %s2, 2176, %s30, [#allocation5], 128, 128, 8
    $region13: #{forward.1} parent=1 // pred_fallthru
      _
    // Predicated region
    $region14: #{forward.1} parent=1 // pred_check
      _
    $region15: #{forward.1} parent=1 // pred_check_branch
      %37 = sbr.rel (0) target = $region17
    $region16: #{forward.1} parent=1 // pred_region
      %38 = dma.done [#allocation3], 12672
    $region17: #{forward.1} parent=1 // pred_fallthru
      _
    // Predicated region
    $region18: #{forward.1} parent=1 // pred_check
      _
    $region19: #{forward.1} parent=1 // pred_check_branch
      %40 = sbr.rel (0) target = $region21
    $region20: #{forward.1} parent=1 // pred_region
      %41 = dma.done [#allocation5], 2176
    $region21: #{forward.1} parent=1 // pred_fallthru
      _
    %v43 = vld [vmem:[#allocation2] sm:$0x1]
    %v44 = vld [vmem:[#allocation2 + $0x8] sm:$0xf]
    %v45 = vld [vmem:[#allocation2 + $0xc] sm:$0xf]
    %v46 = vld [vmem:[#allocation2 + $0x10] sm:$0xf]
    %v47 = vld [vmem:[#allocation2 + $0x14] sm:$0xf]
    %v48 = vld [vmem:[#allocation2 + $0x18] sm:$0xf]
    %v49 = vld [vmem:[#allocation2 + $0x1c] sm:$0xf]
    %v50 = vld [vmem:[#allocation2 + $0x20] sm:$0xf]
    %v51 = vld [vmem:[#allocation2 + $0x24] sm:$0xf]
    %v52 = vld [vmem:[#allocation2 + $0x38] sm:$0x1]
    %v53 = vld [vmem:[%s0] sm:$0xff]
    %v54 = vld [vmem:[%s0 + $0x8] sm:$0xff]
    %v55 = vld [vmem:[%s0 + $0x10] sm:$0xff]
    %v56 = vld [vmem:[%s0 + $0x18] sm:$0xff]
    %v57 = vld [vmem:[%s0 + $0x20] sm:$0xff]
    %v58 = vld [vmem:[%s0 + $0x28] sm:$0xff]
    %v59 = vld [vmem:[%s0 + $0x30] sm:$0xff]
    %v60 = vld [vmem:[%s0 + $0x38] sm:$0xff]
    %v61 = vld [vmem:[#allocation2 + $0x48] sm:$0xf]
    %v62 = vld [vmem:[#allocation2 + $0x4c] sm:$0xf]
    %v63 = vld [vmem:[#allocation2 + $0x50] sm:$0x1]
    %v64 = vpack.c.bf16 %v54, %v53
    %v65 = vpack.c.bf16 %v56, %v55
    %v66 = vpack.c.bf16 %v58, %v57
    %v67 = vpack.c.bf16 %v60, %v59
    %vm68 = vcmask 523264
    %v70 = vsel %vm68, %v43, 0
    %72 = vmatprep.subr.bf16.mxu0 0
    %73 = vmatpush1.bf16.msra.mxu0 0
    %74 = vmatprep.subr.bf16.mxu0 0
    %75 = vmatpush1.bf16.msra.mxu0 0
    %76 = vmatprep.subr.bf16.mxu0 0
    %77 = vmatpush1.bf16.msra.mxu0 0
    %78 = vmatprep.subr.bf16.mxu0 0
    %79 = vmatpush1.bf16.msra.mxu0 0
    %80 = vmatprep.subr.bf16.mxu0 0
    %81 = vmatpush1.bf16.msra.mxu0 %v67
    %82 = vmatprep.subr.bf16.mxu0 0
    %83 = vmatpush1.bf16.msra.mxu0 %v66
    %84 = vmatprep.subr.bf16.mxu0 0
    %85 = vmatpush1.bf16.msra.mxu0 %v65
    %86 = vmatprep.subr.bf16.mxu0 0
    %87 = vmatpush1.bf16.msra.mxu0 %v64
    %88 = vmatprep.subr.bf16.mxu0 0
    %89 = vmatpush2.bf16.msra.mxu0 0
    %90 = vmatprep.subr.bf16.mxu0 0
    %91 = vmatpush2.bf16.msra.mxu0 0
    %92 = vmatprep.subr.bf16.mxu0 0
    %93 = vmatpush2.bf16.msra.mxu0 0
    %94 = vmatprep.subr.bf16.mxu0 0
    %95 = vmatpush2.bf16.msra.mxu0 0
    %96 = vmatprep.subr.bf16.mxu0 0
    %97 = vmatpush2.bf16.msra.mxu0 0
    %98 = vmatprep.subr.bf16.mxu0 0
    %99 = vmatpush2.bf16.msra.mxu0 0
    %100 = vmatprep.subr.bf16.mxu0 0
    %101 = vmatpush2.bf16.msra.mxu0 0
    %102 = vmatprep.subr.bf16.mxu0 0
    %103 = vmatpush2.bf16.msra.mxu0 0
    %104 = vmatprep.mubr.bf16.mxu0 0
    %105 = vmatmul.mubr.bf16.gmra.mxu0 %v70
    %v106 = vpop.f32.mrf.mxu0
    %v107 = vadd.f32 0.0, %v106
    %v108 = vpop.f32.mrf.mxu0
    %v109 = vpop.f32.mrf.mxu0
    %v110 = vpop.f32.mrf.mxu0
    %111 = vdwg.mxu0
    %v112 = vpack.c.bf16 %v107, %v107
    %v115 = vunpack.c.l.b16 %v61
    %v116 = vunpack.c.l.b16 %v62
    %v117 = vpack.c.b16 %v116, %v115
    %vm119 = vcmask 130048
    %v121 = vsel %vm119, %v112, 0
    %123 = vmatprep.subr.bf16.mxu0 0
    %124 = vmatpush1.bf16.msra.mxu0 0
    %125 = vmatprep.subr.bf16.mxu0 0
    %126 = vmatpush1.bf16.msra.mxu0 0
    %127 = vmatprep.subr.bf16.mxu0 0
    %128 = vmatpush1.bf16.msra.mxu0 0
    %129 = vmatprep.subr.bf16.mxu0 0
    %130 = vmatpush1.bf16.msra.mxu0 0
    %131 = vmatprep.subr.bf16.mxu0 0
    %132 = vmatpush1.bf16.msra.mxu0 0
    %133 = vmatprep.subr.bf16.mxu0 0
    %134 = vmatpush1.bf16.msra.mxu0 0
    %135 = vmatprep.subr.bf16.mxu0 0
    %136 = vmatpush1.bf16.msra.mxu0 0
    %137 = vmatprep.subr.bf16.mxu0 0
    %138 = vmatpush1.bf16.msra.mxu0 %v117
    %139 = vmatprep.subr.bf16.mxu0 0
    %140 = vmatpush2.bf16.msra.mxu0 0
    %141 = vmatprep.subr.bf16.mxu0 0
    %142 = vmatpush2.bf16.msra.mxu0 0
    %143 = vmatprep.subr.bf16.mxu0 0
    %144 = vmatpush2.bf16.msra.mxu0 0
    %145 = vmatprep.subr.bf16.mxu0 0
    %146 = vmatpush2.bf16.msra.mxu0 0
    %147 = vmatprep.subr.bf16.mxu0 0
    %148 = vmatpush2.bf16.msra.mxu0 0
    %149 = vmatprep.subr.bf16.mxu0 0
    %150 = vmatpush2.bf16.msra.mxu0 0
    %151 = vmatprep.subr.bf16.mxu0 0
    %152 = vmatpush2.bf16.msra.mxu0 0
    %153 = vmatprep.subr.bf16.mxu0 0
    %154 = vmatpush2.bf16.msra.mxu0 0
    %155 = vmatprep.mubr.bf16.mxu0 0
    %156 = vmatmul.mubr.bf16.gmra.mxu0 %v121
    %v157 = vpop.f32.mrf.mxu0
    %v158 = vadd.f32 0.0, %v157
    %v159 = vpop.f32.mrf.mxu0
    %v160 = vpop.f32.mrf.mxu0
    %v161 = vpop.f32.mrf.mxu0
    %162 = vdwg.mxu0
    %v163 = vmax.f32 %v158, 0.0
    %v164 = vpack.c.bf16 %v163, %v163
    %vm165 = vcmask 7168
    %v167 = vsel %vm165, %v164, 0
    %vm169 = vcmask 1040384
    %v170 = vsel 0, 4294967295, 65535
    %v171 = vsel %vm169, %v170, 0
    %v173 = vand.u32 %v63, %v171
    %175 = vmatprep.subr.bf16.mxu0 0
    %176 = vmatpush1.bf16.msra.mxu0 0
    %177 = vmatprep.subr.bf16.mxu0 0
    %178 = vmatpush1.bf16.msra.mxu0 0
    %179 = vmatprep.subr.bf16.mxu0 0
    %180 = vmatpush1.bf16.msra.mxu0 0
    %181 = vmatprep.subr.bf16.mxu0 0
    %182 = vmatpush1.bf16.msra.mxu0 0
    %183 = vmatprep.subr.bf16.mxu0 0
    %184 = vmatpush1.bf16.msra.mxu0 0
    %185 = vmatprep.subr.bf16.mxu0 0
    %186 = vmatpush1.bf16.msra.mxu0 0
    %187 = vmatprep.subr.bf16.mxu0 0
    %188 = vmatpush1.bf16.msra.mxu0 0
    %189 = vmatprep.subr.bf16.mxu0 0
    %190 = vmatpush1.bf16.msra.mxu0 %v173
    %191 = vmatprep.subr.bf16.mxu0 0
    %192 = vmatpush2.bf16.msra.mxu0 0
    %193 = vmatprep.subr.bf16.mxu0 0
    %194 = vmatpush2.bf16.msra.mxu0 0
    %195 = vmatprep.subr.bf16.mxu0 0
    %196 = vmatpush2.bf16.msra.mxu0 0
    %197 = vmatprep.subr.bf16.mxu0 0
    %198 = vmatpush2.bf16.msra.mxu0 0
    %199 = vmatprep.subr.bf16.mxu0 0
    %200 = vmatpush2.bf16.msra.mxu0 0
    %201 = vmatprep.subr.bf16.mxu0 0
    %202 = vmatpush2.bf16.msra.mxu0 0
    %203 = vmatprep.subr.bf16.mxu0 0
    %204 = vmatpush2.bf16.msra.mxu0 0
    %205 = vmatprep.subr.bf16.mxu0 0
    %206 = vmatpush2.bf16.msra.mxu0 0
    %207 = vmatprep.mubr.bf16.mxu0 0
    %208 = vmatmul.mubr.bf16.gmra.mxu0 %v167
    %v209 = vpop.f32.mrf.mxu0
    %v210 = vadd.f32 0.0, %v209
    %v211 = vpop.f32.mrf.mxu0
    %v212 = vpop.f32.mrf.mxu0
    %v213 = vpop.f32.mrf.mxu0
    %214 = vdwg.mxu0
    %v215 = vxor.u32 %v210, 2147483648
    %v216 = vmul.f32 %v215, 1.442695
    %v217 = vpow.pop %v216
    %v218 = vadd.f32 %v217, 1.0
    %v219 = vrcp.pop %v218
    %v220 = vmul.f32 1.0, %v219
    %v221 = vpack.c.bf16 %v220, %v220
    %v230 = vunpack.c.l.b16 %v44
    %v231 = vunpack.c.l.b16 %v45
    %v232 = vunpack.c.l.b16 %v46
    %v233 = vunpack.c.l.b16 %v47
    %v234 = vunpack.c.l.b16 %v48
    %v235 = vunpack.c.l.b16 %v49
    %v236 = vunpack.c.l.b16 %v50
    %v237 = vunpack.c.l.b16 %v51
    %v238 = vpack.c.b16 %v231, %v230
    %v239 = vpack.c.b16 %v233, %v232
    %v240 = vpack.c.b16 %v235, %v234
    %v241 = vpack.c.b16 %v237, %v236
    %vm242 = vcmask 15360
    %v244 = vsel %vm242, %v238, 0
    %v247 = vsel %vm242, %v239, 0
    %v250 = vsel %vm242, %v240, 0
    %v253 = vsel %vm242, %v241, 0
    %v256 = vsel %vm169, %v221, 0
    %258 = vmatprep.subr.bf16.mxu0 0
    %259 = vmatpush1.bf16.msra.mxu0 0
    %260 = vmatprep.subr.bf16.mxu0 0
    %261 = vmatpush1.bf16.msra.mxu0 0
    %262 = vmatprep.subr.bf16.mxu0 0
    %263 = vmatpush1.bf16.msra.mxu0 0
    %264 = vmatprep.subr.bf16.mxu0 0
    %265 = vmatpush1.bf16.msra.mxu0 0
    %266 = vmatprep.subr.bf16.mxu0 0
    %267 = vmatpush1.bf16.msra.mxu0 0
    %268 = vmatprep.subr.bf16.mxu0 0
    %269 = vmatpush1.bf16.msra.mxu0 0
    %270 = vmatprep.subr.bf16.mxu0 0
    %271 = vmatpush1.bf16.msra.mxu0 0
    %272 = vmatprep.subr.bf16.mxu0 0
    %273 = vmatpush1.bf16.msra.mxu0 %v256
    %274 = vmatprep.subr.bf16.mxu0 0
    %275 = vmatpush2.bf16.msra.mxu0 0
    %276 = vmatprep.subr.bf16.mxu0 0
    %277 = vmatpush2.bf16.msra.mxu0 0
    %278 = vmatprep.subr.bf16.mxu0 0
    %279 = vmatpush2.bf16.msra.mxu0 0
    %280 = vmatprep.subr.bf16.mxu0 0
    %281 = vmatpush2.bf16.msra.mxu0 0
    %282 = vmatprep.subr.bf16.mxu0 0
    %283 = vmatpush2.bf16.msra.mxu0 0
    %284 = vmatprep.subr.bf16.mxu0 0
    %285 = vmatpush2.bf16.msra.mxu0 0
    %286 = vmatprep.subr.bf16.mxu0 0
    %287 = vmatpush2.bf16.msra.mxu0 0
    %288 = vmatprep.subr.bf16.mxu0 0
    %289 = vmatpush2.bf16.msra.mxu0 0
    %290 = vmatprep.mubr.bf16.mxu0 0
    %291 = vmatmul.mubr.bf16.gmra.mxu0 %v244
    %v292 = vpop.f32.mrf.mxu0
    %v293 = vadd.f32 0.0, %v292
    %v294 = vpop.f32.mrf.mxu0
    %v295 = vpop.f32.mrf.mxu0
    %v296 = vadd.f32 0.0, %v295
    %v297 = vpop.f32.mrf.mxu0
    %298 = vmatprep.mubr.bf16.mxu0 0
    %299 = vmatmul.mubr.bf16.gmra.mxu0 %v247
    %v300 = vpop.f32.mrf.mxu0
    %v301 = vadd.f32 0.0, %v300
    %v302 = vpop.f32.mrf.mxu0
    %v303 = vpop.f32.mrf.mxu0
    %v304 = vadd.f32 0.0, %v303
    %v305 = vpop.f32.mrf.mxu0
    %306 = vmatprep.mubr.bf16.mxu0 0
    %307 = vmatmul.mubr.bf16.gmra.mxu0 %v250
    %v308 = vpop.f32.mrf.mxu0
    %v309 = vadd.f32 0.0, %v308
    %v310 = vpop.f32.mrf.mxu0
    %v311 = vpop.f32.mrf.mxu0
    %v312 = vadd.f32 0.0, %v311
    %v313 = vpop.f32.mrf.mxu0
    %314 = vmatprep.mubr.bf16.mxu0 0
    %315 = vmatmul.mubr.bf16.gmra.mxu0 %v253
    %v316 = vpop.f32.mrf.mxu0
    %v317 = vadd.f32 0.0, %v316
    %v318 = vpop.f32.mrf.mxu0
    %v319 = vpop.f32.mrf.mxu0
    %v320 = vadd.f32 0.0, %v319
    %v321 = vpop.f32.mrf.mxu0
    %322 = vdwg.mxu0
    %v323 = vmul.f32 %v53, %v293
    %v324 = vmul.f32 %v54, %v296
    %v325 = vmul.f32 %v55, %v301
    %v326 = vmul.f32 %v56, %v304
    %v327 = vmul.f32 %v57, %v309
    %v328 = vmul.f32 %v58, %v312
    %v329 = vmul.f32 %v59, %v317
    %v330 = vmul.f32 %v60, %v320
    %v331 = vld [vmem:[#allocation2 + $0x58] sm:$0xf]
    %v332 = vld [vmem:[#allocation2 + $0x5c] sm:$0xf]
    %v333 = vld [vmem:[#allocation2 + $0x60] sm:$0xf]
    %v334 = vld [vmem:[#allocation2 + $0x64] sm:$0xf]
    %v335 = vld [vmem:[#allocation2 + $0x68] sm:$0xf]
    %v336 = vld [vmem:[#allocation2 + $0x6c] sm:$0xf]
    %v337 = vld [vmem:[#allocation2 + $0x70] sm:$0xf]
    %v338 = vld [vmem:[#allocation2 + $0x74] sm:$0xf]
    %v339 = vld [vmem:[#allocation2 + $0x78] sm:$0xf]
    %v340 = vld [vmem:[#allocation2 + $0x7c] sm:$0xf]
    %v341 = vld [vmem:[#allocation2 + $0x80] sm:$0xf]
    %v342 = vld [vmem:[#allocation2 + $0x84] sm:$0xf]
    %v343 = vld [vmem:[#allocation2 + $0x88] sm:$0xf]
    %v344 = vld [vmem:[#allocation2 + $0x8c] sm:$0xf]
    %v345 = vld [vmem:[#allocation2 + $0x90] sm:$0xf]
    %v346 = vld [vmem:[#allocation2 + $0x94] sm:$0xf]
    %v347 = vld [vmem:[#allocation2 + $0x98] sm:$0xf]
    %v348 = vld [vmem:[#allocation2 + $0x9c] sm:$0xf]
    %v349 = vld [vmem:[#allocation2 + $0xa0] sm:$0xf]
    %v350 = vld [vmem:[#allocation2 + $0xa4] sm:$0xf]
    %v351 = vld [vmem:[#allocation2 + $0xa8] sm:$0xf]
    %v352 = vld [vmem:[#allocation2 + $0xac] sm:$0xf]
    %v353 = vld [vmem:[#allocation2 + $0xb0] sm:$0xf]
    %v354 = vld [vmem:[#allocation2 + $0xb4] sm:$0xf]
    %v355 = vld [vmem:[#allocation2 + $0xb8] sm:$0xf]
    %v356 = vld [vmem:[#allocation2 + $0xbc] sm:$0xf]
    %v357 = vld [vmem:[#allocation2 + $0xc0] sm:$0xf]
    %v358 = vld [vmem:[#allocation2 + $0xc4] sm:$0xf]
    %v359 = vld [vmem:[#allocation2 + $0xc8] sm:$0xf]
    %v360 = vld [vmem:[#allocation2 + $0xcc] sm:$0xf]
    %v361 = vld [vmem:[#allocation2 + $0xd0] sm:$0xf]
    %v362 = vld [vmem:[#allocation2 + $0xd4] sm:$0xf]
    %v363 = vld [vmem:[#allocation2 + $0xd8] sm:$0xf]
    %v364 = vld [vmem:[#allocation2 + $0xdc] sm:$0xf]
    %v365 = vld [vmem:[#allocation2 + $0xe0] sm:$0xf]
    %v366 = vld [vmem:[#allocation2 + $0xe4] sm:$0xf]
    %v367 = vld [vmem:[#allocation2 + $0xe8] sm:$0xf]
    %v368 = vld [vmem:[#allocation2 + $0xec] sm:$0xf]
    %v369 = vld [vmem:[#allocation2 + $0xf0] sm:$0xf]
    %v370 = vld [vmem:[#allocation2 + $0xf4] sm:$0xf]
    %v371 = vld [vmem:[#allocation2 + $0xf8] sm:$0xf]
    %v372 = vld [vmem:[#allocation2 + $0xfc] sm:$0xf]
    %v373 = vld [vmem:[#allocation2 + $0x100] sm:$0xf]
    %v374 = vld [vmem:[#allocation2 + $0x104] sm:$0xf]
    %v375 = vld [vmem:[#allocation2 + $0x108] sm:$0xf]
    %v376 = vld [vmem:[#allocation2 + $0x10c] sm:$0xf]
    %v377 = vld [vmem:[#allocation2 + $0x110] sm:$0xf]
    %v378 = vld [vmem:[#allocation2 + $0x114] sm:$0xf]
    %v379 = vld [vmem:[#allocation2 + $0x118] sm:$0xf]
    %v380 = vld [vmem:[#allocation2 + $0x11c] sm:$0xf]
    %v381 = vld [vmem:[#allocation4] sm:$0x1]
    %v382 = vld [vmem:[#allocation4 + $0x8] sm:$0x1]
    %v383 = vpack.c.bf16 %v324, %v323
    %v384 = vpack.c.bf16 %v326, %v325
    %v385 = vpack.c.bf16 %v328, %v327
    %v386 = vpack.c.bf16 %v330, %v329
    %v427 = vunpack.c.l.b16 %v331
    %v428 = vunpack.c.l.b16 %v332
    %v429 = vunpack.c.l.b16 %v333
    %v430 = vunpack.c.l.b16 %v334
    %v431 = vunpack.c.l.b16 %v335
    %v432 = vunpack.c.l.b16 %v336
    %v433 = vunpack.c.l.b16 %v337
    %v434 = vunpack.c.l.b16 %v338
    %v435 = vunpack.c.l.b16 %v339
    %v436 = vunpack.c.l.b16 %v340
    %v437 = vunpack.c.l.b16 %v341
    %v438 = vunpack.c.l.b16 %v342
    %v439 = vunpack.c.l.b16 %v343
    %v440 = vunpack.c.l.b16 %v344
    %v441 = vunpack.c.l.b16 %v345
    %v442 = vunpack.c.l.b16 %v346
    %v443 = vunpack.c.l.b16 %v347
    %v444 = vunpack.c.l.b16 %v348
    %v445 = vunpack.c.l.b16 %v349
    %v446 = vunpack.c.l.b16 %v350
    %v447 = vunpack.c.l.b16 %v351
    %v448 = vunpack.c.l.b16 %v352
    %v449 = vunpack.c.l.b16 %v353
    %v450 = vunpack.c.l.b16 %v354
    %v451 = vunpack.c.l.b16 %v355
    %v452 = vunpack.c.l.b16 %v356
    %v453 = vunpack.c.l.b16 %v357
    %v454 = vunpack.c.l.b16 %v358
    %v455 = vunpack.c.l.b16 %v359
    %v456 = vunpack.c.l.b16 %v360
    %v457 = vunpack.c.l.b16 %v361
    %v458 = vunpack.c.l.b16 %v362
    %v459 = vunpack.c.l.b16 %v363
    %v460 = vunpack.c.l.b16 %v364
    %v461 = vunpack.c.l.b16 %v365
    %v462 = vunpack.c.l.b16 %v366
    %v463 = vunpack.c.l.b16 %v367
    %v464 = vunpack.c.l.b16 %v368
    %v465 = vunpack.c.l.b16 %v369
    %v466 = vunpack.c.l.b16 %v370
    %v467 = vpack.c.b16 %v428, %v427
    %v468 = vpack.c.b16 %v430, %v429
    %v469 = vpack.c.b16 %v432, %v431
    %v470 = vpack.c.b16 %v434, %v433
    %v471 = vpack.c.b16 %v436, %v435
    %v472 = vpack.c.b16 %v438, %v437
    %v473 = vpack.c.b16 %v440, %v439
    %v474 = vpack.c.b16 %v442, %v441
    %v475 = vpack.c.b16 %v444, %v443
    %v476 = vpack.c.b16 %v446, %v445
    %v477 = vpack.c.b16 %v448, %v447
    %v478 = vpack.c.b16 %v450, %v449
    %v479 = vpack.c.b16 %v452, %v451
    %v480 = vpack.c.b16 %v454, %v453
    %v481 = vpack.c.b16 %v456, %v455
    %v482 = vpack.c.b16 %v458, %v457
    %v483 = vpack.c.b16 %v460, %v459
    %v484 = vpack.c.b16 %v462, %v461
    %v485 = vpack.c.b16 %v464, %v463
    %v486 = vpack.c.b16 %v466, %v465
    %v488 = vsel %vm68, %v467, 0
    %v491 = vsel %vm68, %v468, 0
    %v494 = vsel %vm68, %v469, 0
    %v497 = vsel %vm68, %v470, 0
    %v500 = vsel %vm68, %v471, 0
    %v503 = vsel %vm68, %v472, 0
    %v506 = vsel %vm68, %v473, 0
    %v509 = vsel %vm68, %v474, 0
    %v512 = vsel %vm68, %v475, 0
    %v515 = vsel %vm68, %v476, 0
    %v518 = vsel %vm68, %v477, 0
    %v521 = vsel %vm68, %v478, 0
    %v524 = vsel %vm68, %v479, 0
    %v527 = vsel %vm68, %v480, 0
    %v530 = vsel %vm68, %v481, 0
    %v533 = vsel %vm68, %v482, 0
    %v536 = vsel %vm68, %v483, 0
    %v539 = vsel %vm68, %v484, 0
    %v542 = vsel %vm68, %v485, 0
    %v545 = vsel %vm68, %v486, 0
    %547 = vmatprep.subr.bf16.mxu0 0
    %548 = vmatpush1.bf16.msra.mxu0 0
    %549 = vmatprep.subr.bf16.mxu0 0
    %550 = vmatpush1.bf16.msra.mxu0 0
    %551 = vmatprep.subr.bf16.mxu0 0
    %552 = vmatpush1.bf16.msra.mxu0 0
    %553 = vmatprep.subr.bf16.mxu0 0
    %554 = vmatpush1.bf16.msra.mxu0 0
    %555 = vmatprep.subr.bf16.mxu0 0
    %556 = vmatpush1.bf16.msra.mxu0 %v386
    %557 = vmatprep.subr.bf16.mxu0 0
    %558 = vmatpush1.bf16.msra.mxu0 %v385
    %559 = vmatprep.subr.bf16.mxu0 0
    %560 = vmatpush1.bf16.msra.mxu0 %v384
    %561 = vmatprep.subr.bf16.mxu0 0
    %562 = vmatpush1.bf16.msra.mxu0 %v383
    %563 = vmatprep.subr.bf16.mxu0 0
    %564 = vmatpush2.bf16.msra.mxu0 0
    %565 = vmatprep.subr.bf16.mxu0 0
    %566 = vmatpush2.bf16.msra.mxu0 0
    %567 = vmatprep.subr.bf16.mxu0 0
    %568 = vmatpush2.bf16.msra.mxu0 0
    %569 = vmatprep.subr.bf16.mxu0 0
    %570 = vmatpush2.bf16.msra.mxu0 0
    %571 = vmatprep.subr.bf16.mxu0 0
    %572 = vmatpush2.bf16.msra.mxu0 0
    %573 = vmatprep.subr.bf16.mxu0 0
    %574 = vmatpush2.bf16.msra.mxu0 0
    %575 = vmatprep.subr.bf16.mxu0 0
    %576 = vmatpush2.bf16.msra.mxu0 0
    %577 = vmatprep.subr.bf16.mxu0 0
    %578 = vmatpush2.bf16.msra.mxu0 0
    %579 = vmatprep.mubr.bf16.mxu0 0
    %580 = vmatmul.mubr.bf16.gmra.mxu0 %v488
    %v581 = vpop.f32.mrf.mxu0
    %v582 = vadd.f32 0.0, %v581
    %v583 = vpop.f32.mrf.mxu0
    %v584 = vpop.f32.mrf.mxu0
    %v585 = vadd.f32 0.0, %v584
    %v586 = vpop.f32.mrf.mxu0
    %587 = vmatprep.mubr.bf16.mxu0 0
    %588 = vmatmul.mubr.bf16.gmra.mxu0 %v491
    %v589 = vpop.f32.mrf.mxu0
    %v590 = vadd.f32 0.0, %v589
    %v591 = vpop.f32.mrf.mxu0
    %v592 = vpop.f32.mrf.mxu0
    %v593 = vadd.f32 0.0, %v592
    %v594 = vpop.f32.mrf.mxu0
    %595 = vmatprep.mubr.bf16.mxu0 0
    %596 = vmatmul.mubr.bf16.gmra.mxu0 %v494
    %v597 = vpop.f32.mrf.mxu0
    %v598 = vadd.f32 0.0, %v597
    %v599 = vpop.f32.mrf.mxu0
    %v600 = vpop.f32.mrf.mxu0
    %v601 = vadd.f32 0.0, %v600
    %v602 = vpop.f32.mrf.mxu0
    %603 = vmatprep.mubr.bf16.mxu0 0
    %604 = vmatmul.mubr.bf16.gmra.mxu0 %v497
    %v605 = vpop.f32.mrf.mxu0
    %v606 = vadd.f32 0.0, %v605
    %v607 = vpop.f32.mrf.mxu0
    %v608 = vpop.f32.mrf.mxu0
    %v609 = vadd.f32 0.0, %v608
    %v610 = vpop.f32.mrf.mxu0
    %611 = vmatprep.mubr.bf16.mxu0 0
    %612 = vmatmul.mubr.bf16.gmra.mxu0 %v500
    %v613 = vpop.f32.mrf.mxu0
    %v614 = vadd.f32 0.0, %v613
    %v615 = vpop.f32.mrf.mxu0
    %v616 = vpop.f32.mrf.mxu0
    %v617 = vadd.f32 0.0, %v616
    %v618 = vpop.f32.mrf.mxu0
    %619 = vmatprep.mubr.bf16.mxu0 0
    %620 = vmatmul.mubr.bf16.gmra.mxu0 %v503
    %v621 = vpop.f32.mrf.mxu0
    %v622 = vadd.f32 0.0, %v621
    %v623 = vpop.f32.mrf.mxu0
    %v624 = vpop.f32.mrf.mxu0
    %v625 = vadd.f32 0.0, %v624
    %v626 = vpop.f32.mrf.mxu0
    %627 = vmatprep.mubr.bf16.mxu0 0
    %628 = vmatmul.mubr.bf16.gmra.mxu0 %v506
    %v629 = vpop.f32.mrf.mxu0
    %v630 = vadd.f32 0.0, %v629
    %v631 = vpop.f32.mrf.mxu0
    %v632 = vpop.f32.mrf.mxu0
    %v633 = vadd.f32 0.0, %v632
    %v634 = vpop.f32.mrf.mxu0
    %635 = vmatprep.mubr.bf16.mxu0 0
    %636 = vmatmul.mubr.bf16.gmra.mxu0 %v509
    %v637 = vpop.f32.mrf.mxu0
    %v638 = vadd.f32 0.0, %v637
    %v639 = vpop.f32.mrf.mxu0
    %v640 = vpop.f32.mrf.mxu0
    %v641 = vadd.f32 0.0, %v640
    %v642 = vpop.f32.mrf.mxu0
    %643 = vmatprep.mubr.bf16.mxu0 0
    %644 = vmatmul.mubr.bf16.gmra.mxu0 %v512
    %v645 = vpop.f32.mrf.mxu0
    %v646 = vadd.f32 0.0, %v645
    %v647 = vpop.f32.mrf.mxu0
    %v648 = vpop.f32.mrf.mxu0
    %v649 = vadd.f32 0.0, %v648
    %v650 = vpop.f32.mrf.mxu0
    %651 = vmatprep.mubr.bf16.mxu0 0
    %652 = vmatmul.mubr.bf16.gmra.mxu0 %v515
    %v653 = vpop.f32.mrf.mxu0
    %v654 = vadd.f32 0.0, %v653
    %v655 = vpop.f32.mrf.mxu0
    %v656 = vpop.f32.mrf.mxu0
    %v657 = vadd.f32 0.0, %v656
    %v658 = vpop.f32.mrf.mxu0
    %659 = vmatprep.mubr.bf16.mxu0 0
    %660 = vmatmul.mubr.bf16.gmra.mxu0 %v518
    %v661 = vpop.f32.mrf.mxu0
    %v662 = vadd.f32 0.0, %v661
    %v663 = vpop.f32.mrf.mxu0
    %v664 = vpop.f32.mrf.mxu0
    %v665 = vadd.f32 0.0, %v664
    %v666 = vpop.f32.mrf.mxu0
    %667 = vmatprep.mubr.bf16.mxu0 0
    %668 = vmatmul.mubr.bf16.gmra.mxu0 %v521
    %v669 = vpop.f32.mrf.mxu0
    %v670 = vadd.f32 0.0, %v669
    %v671 = vpop.f32.mrf.mxu0
    %v672 = vpop.f32.mrf.mxu0
    %v673 = vadd.f32 0.0, %v672
    %v674 = vpop.f32.mrf.mxu0
    %675 = vmatprep.mubr.bf16.mxu0 0
    %676 = vmatmul.mubr.bf16.gmra.mxu0 %v524
    %v677 = vpop.f32.mrf.mxu0
    %v678 = vadd.f32 0.0, %v677
    %v679 = vpop.f32.mrf.mxu0
    %v680 = vpop.f32.mrf.mxu0
    %v681 = vadd.f32 0.0, %v680
    %v682 = vpop.f32.mrf.mxu0
    %683 = vmatprep.mubr.bf16.mxu0 0
    %684 = vmatmul.mubr.bf16.gmra.mxu0 %v527
    %v685 = vpop.f32.mrf.mxu0
    %v686 = vadd.f32 0.0, %v685
    %v687 = vpop.f32.mrf.mxu0
    %v688 = vpop.f32.mrf.mxu0
    %v689 = vadd.f32 0.0, %v688
    %v690 = vpop.f32.mrf.mxu0
    %691 = vmatprep.mubr.bf16.mxu0 0
    %692 = vmatmul.mubr.bf16.gmra.mxu0 %v530
    %v693 = vpop.f32.mrf.mxu0
    %v694 = vadd.f32 0.0, %v693
    %v695 = vpop.f32.mrf.mxu0
    %v696 = vpop.f32.mrf.mxu0
    %v697 = vadd.f32 0.0, %v696
    %v698 = vpop.f32.mrf.mxu0
    %699 = vmatprep.mubr.bf16.mxu0 0
    %700 = vmatmul.mubr.bf16.gmra.mxu0 %v533
    %v701 = vpop.f32.mrf.mxu0
    %v702 = vadd.f32 0.0, %v701
    %v703 = vpop.f32.mrf.mxu0
    %v704 = vpop.f32.mrf.mxu0
    %v705 = vadd.f32 0.0, %v704
    %v706 = vpop.f32.mrf.mxu0
    %707 = vmatprep.mubr.bf16.mxu0 0
    %708 = vmatmul.mubr.bf16.gmra.mxu0 %v536
    %v709 = vpop.f32.mrf.mxu0
    %v710 = vadd.f32 0.0, %v709
    %v711 = vpop.f32.mrf.mxu0
    %v712 = vpop.f32.mrf.mxu0
    %v713 = vadd.f32 0.0, %v712
    %v714 = vpop.f32.mrf.mxu0
    %715 = vmatprep.mubr.bf16.mxu0 0
    %716 = vmatmul.mubr.bf16.gmra.mxu0 %v539
    %v717 = vpop.f32.mrf.mxu0
    %v718 = vadd.f32 0.0, %v717
    %v719 = vpop.f32.mrf.mxu0
    %v720 = vpop.f32.mrf.mxu0
    %v721 = vadd.f32 0.0, %v720
    %v722 = vpop.f32.mrf.mxu0
    %723 = vmatprep.mubr.bf16.mxu0 0
    %724 = vmatmul.mubr.bf16.gmra.mxu0 %v542
    %v725 = vpop.f32.mrf.mxu0
    %v726 = vadd.f32 0.0, %v725
    %v727 = vpop.f32.mrf.mxu0
    %v728 = vpop.f32.mrf.mxu0
    %v729 = vadd.f32 0.0, %v728
    %v730 = vpop.f32.mrf.mxu0
    %731 = vmatprep.mubr.bf16.mxu0 0
    %732 = vmatmul.mubr.bf16.gmra.mxu0 %v545
    %v733 = vpop.f32.mrf.mxu0
    %v734 = vadd.f32 0.0, %v733
    %v735 = vpop.f32.mrf.mxu0
    %v736 = vpop.f32.mrf.mxu0
    %v737 = vadd.f32 0.0, %v736
    %v738 = vpop.f32.mrf.mxu0
    %739 = vdwg.mxu0
    %v740 = vpack.c.bf16 %v585, %v582
    %v741 = vpack.c.bf16 %v593, %v590
    %v742 = vpack.c.bf16 %v601, %v598
    %v743 = vpack.c.bf16 %v609, %v606
    %v744 = vpack.c.bf16 %v617, %v614
    %v745 = vpack.c.bf16 %v625, %v622
    %v746 = vpack.c.bf16 %v633, %v630
    %v747 = vpack.c.bf16 %v641, %v638
    %v750 = vunpack.c.l.b16 %v373
    %v751 = vunpack.c.l.b16 %v374
    %v752 = vpack.c.b16 %v751, %v750
    %v755 = vsel %vm119, %v744, 0
    %v758 = vsel %vm119, %v745, 0
    %v761 = vsel %vm119, %v746, 0
    %v764 = vsel %vm119, %v747, 0
    %766 = vmatprep.subr.bf16.mxu0 0
    %767 = vmatpush1.bf16.msra.mxu0 0
    %768 = vmatprep.subr.bf16.mxu0 0
    %769 = vmatpush1.bf16.msra.mxu0 0
    %770 = vmatprep.subr.bf16.mxu0 0
    %771 = vmatpush1.bf16.msra.mxu0 0
    %772 = vmatprep.subr.bf16.mxu0 0
    %773 = vmatpush1.bf16.msra.mxu0 0
    %774 = vmatprep.subr.bf16.mxu0 0
    %775 = vmatpush1.bf16.msra.mxu0 0
    %776 = vmatprep.subr.bf16.mxu0 0
    %777 = vmatpush1.bf16.msra.mxu0 0
    %778 = vmatprep.subr.bf16.mxu0 0
    %779 = vmatpush1.bf16.msra.mxu0 0
    %780 = vmatprep.subr.bf16.mxu0 0
    %781 = vmatpush1.bf16.msra.mxu0 %v752
    %782 = vmatprep.subr.bf16.mxu0 0
    %783 = vmatpush2.bf16.msra.mxu0 0
    %784 = vmatprep.subr.bf16.mxu0 0
    %785 = vmatpush2.bf16.msra.mxu0 0
    %786 = vmatprep.subr.bf16.mxu0 0
    %787 = vmatpush2.bf16.msra.mxu0 0
    %788 = vmatprep.subr.bf16.mxu0 0
    %789 = vmatpush2.bf16.msra.mxu0 0
    %790 = vmatprep.subr.bf16.mxu0 0
    %791 = vmatpush2.bf16.msra.mxu0 0
    %792 = vmatprep.subr.bf16.mxu0 0
    %793 = vmatpush2.bf16.msra.mxu0 0
    %794 = vmatprep.subr.bf16.mxu0 0
    %795 = vmatpush2.bf16.msra.mxu0 0
    %796 = vmatprep.subr.bf16.mxu0 0
    %797 = vmatpush2.bf16.msra.mxu0 0
    %798 = vmatprep.mubr.bf16.mxu0 0
    %799 = vmatmul.mubr.bf16.gmra.mxu0 %v755
    %v800 = vpop.f32.mrf.mxu0
    %v801 = vadd.f32 0.0, %v800
    %v802 = vpop.f32.mrf.mxu0
    %v803 = vpop.f32.mrf.mxu0
    %v804 = vadd.f32 0.0, %v803
    %v805 = vpop.f32.mrf.mxu0
    %806 = vmatprep.mubr.bf16.mxu0 0
    %807 = vmatmul.mubr.bf16.gmra.mxu0 %v758
    %v808 = vpop.f32.mrf.mxu0
    %v809 = vadd.f32 0.0, %v808
    %v810 = vpop.f32.mrf.mxu0
    %v811 = vpop.f32.mrf.mxu0
    %v812 = vadd.f32 0.0, %v811
    %v813 = vpop.f32.mrf.mxu0
    %814 = vmatprep.mubr.bf16.mxu0 0
    %815 = vmatmul.mubr.bf16.gmra.mxu0 %v761
    %v816 = vpop.f32.mrf.mxu0
    %v817 = vadd.f32 0.0, %v816
    %v818 = vpop.f32.mrf.mxu0
    %v819 = vpop.f32.mrf.mxu0
    %v820 = vadd.f32 0.0, %v819
    %v821 = vpop.f32.mrf.mxu0
    %822 = vmatprep.mubr.bf16.mxu0 0
    %823 = vmatmul.mubr.bf16.gmra.mxu0 %v764
    %v824 = vpop.f32.mrf.mxu0
    %v825 = vadd.f32 0.0, %v824
    %v826 = vpop.f32.mrf.mxu0
    %v827 = vpop.f32.mrf.mxu0
    %v828 = vadd.f32 0.0, %v827
    %v829 = vpop.f32.mrf.mxu0
    %830 = vdwg.mxu0
    %v833 = vunpack.c.l.b16 %v371
    %v834 = vunpack.c.l.b16 %v372
    %v835 = vpack.c.b16 %v834, %v833
    %v838 = vsel %vm119, %v740, 0
    %v841 = vsel %vm119, %v741, 0
    %v844 = vsel %vm119, %v742, 0
    %v847 = vsel %vm119, %v743, 0
    %849 = vmatprep.subr.bf16.mxu0 0
    %850 = vmatpush1.bf16.msra.mxu0 0
    %851 = vmatprep.subr.bf16.mxu0 0
    %852 = vmatpush1.bf16.msra.mxu0 0
    %853 = vmatprep.subr.bf16.mxu0 0
    %854 = vmatpush1.bf16.msra.mxu0 0
    %855 = vmatprep.subr.bf16.mxu0 0
    %856 = vmatpush1.bf16.msra.mxu0 0
    %857 = vmatprep.subr.bf16.mxu0 0
    %858 = vmatpush1.bf16.msra.mxu0 0
    %859 = vmatprep.subr.bf16.mxu0 0
    %860 = vmatpush1.bf16.msra.mxu0 0
    %861 = vmatprep.subr.bf16.mxu0 0
    %862 = vmatpush1.bf16.msra.mxu0 0
    %863 = vmatprep.subr.bf16.mxu0 0
    %864 = vmatpush1.bf16.msra.mxu0 %v835
    %865 = vmatprep.subr.bf16.mxu0 0
    %866 = vmatpush2.bf16.msra.mxu0 0
    %867 = vmatprep.subr.bf16.mxu0 0
    %868 = vmatpush2.bf16.msra.mxu0 0
    %869 = vmatprep.subr.bf16.mxu0 0
    %870 = vmatpush2.bf16.msra.mxu0 0
    %871 = vmatprep.subr.bf16.mxu0 0
    %872 = vmatpush2.bf16.msra.mxu0 0
    %873 = vmatprep.subr.bf16.mxu0 0
    %874 = vmatpush2.bf16.msra.mxu0 0
    %875 = vmatprep.subr.bf16.mxu0 0
    %876 = vmatpush2.bf16.msra.mxu0 0
    %877 = vmatprep.subr.bf16.mxu0 0
    %878 = vmatpush2.bf16.msra.mxu0 0
    %879 = vmatprep.subr.bf16.mxu0 0
    %880 = vmatpush2.bf16.msra.mxu0 0
    %881 = vmatprep.mubr.bf16.mxu0 0
    %882 = vmatmul.mubr.bf16.gmra.mxu0 %v838
    %v883 = vpop.f32.mrf.mxu0
    %v884 = vadd.f32 %v801, %v883
    %v885 = vpop.f32.mrf.mxu0
    %v886 = vpop.f32.mrf.mxu0
    %v887 = vadd.f32 %v804, %v886
    %v888 = vpop.f32.mrf.mxu0
    %889 = vmatprep.mubr.bf16.mxu0 0
    %890 = vmatmul.mubr.bf16.gmra.mxu0 %v841
    %v891 = vpop.f32.mrf.mxu0
    %v892 = vadd.f32 %v809, %v891
    %v893 = vpop.f32.mrf.mxu0
    %v894 = vpop.f32.mrf.mxu0
    %v895 = vadd.f32 %v812, %v894
    %v896 = vpop.f32.mrf.mxu0
    %897 = vmatprep.mubr.bf16.mxu0 0
    %898 = vmatmul.mubr.bf16.gmra.mxu0 %v844
    %v899 = vpop.f32.mrf.mxu0
    %v900 = vadd.f32 %v817, %v899
    %v901 = vpop.f32.mrf.mxu0
    %v902 = vpop.f32.mrf.mxu0
    %v903 = vadd.f32 %v820, %v902
    %v904 = vpop.f32.mrf.mxu0
    %905 = vmatprep.mubr.bf16.mxu0 0
    %906 = vmatmul.mubr.bf16.gmra.mxu0 %v847
    %v907 = vpop.f32.mrf.mxu0
    %v908 = vadd.f32 %v825, %v907
    %v909 = vpop.f32.mrf.mxu0
    %v910 = vpop.f32.mrf.mxu0
    %v911 = vadd.f32 %v828, %v910
    %v912 = vpop.f32.mrf.mxu0
    %913 = vdwg.mxu0
    %v914 = vpack.c.bf16 %v649, %v646
    %v915 = vpack.c.bf16 %v657, %v654
    %v916 = vpack.c.bf16 %v665, %v662
    %v917 = vpack.c.bf16 %v673, %v670
    %v920 = vunpack.c.l.b16 %v375
    %v921 = vunpack.c.l.b16 %v376
    %v922 = vpack.c.b16 %v921, %v920
    %v925 = vsel %vm119, %v914, 0
    %v928 = vsel %vm119, %v915, 0
    %v931 = vsel %vm119, %v916, 0
    %v934 = vsel %vm119, %v917, 0
    %936 = vmatprep.subr.bf16.mxu0 0
    %937 = vmatpush1.bf16.msra.mxu0 0
    %938 = vmatprep.subr.bf16.mxu0 0
    %939 = vmatpush1.bf16.msra.mxu0 0
    %940 = vmatprep.subr.bf16.mxu0 0
    %941 = vmatpush1.bf16.msra.mxu0 0
    %942 = vmatprep.subr.bf16.mxu0 0
    %943 = vmatpush1.bf16.msra.mxu0 0
    %944 = vmatprep.subr.bf16.mxu0 0
    %945 = vmatpush1.bf16.msra.mxu0 0
    %946 = vmatprep.subr.bf16.mxu0 0
    %947 = vmatpush1.bf16.msra.mxu0 0
    %948 = vmatprep.subr.bf16.mxu0 0
    %949 = vmatpush1.bf16.msra.mxu0 0
    %950 = vmatprep.subr.bf16.mxu0 0
    %951 = vmatpush1.bf16.msra.mxu0 %v922
    %952 = vmatprep.subr.bf16.mxu0 0
    %953 = vmatpush2.bf16.msra.mxu0 0
    %954 = vmatprep.subr.bf16.mxu0 0
    %955 = vmatpush2.bf16.msra.mxu0 0
    %956 = vmatprep.subr.bf16.mxu0 0
    %957 = vmatpush2.bf16.msra.mxu0 0
    %958 = vmatprep.subr.bf16.mxu0 0
    %959 = vmatpush2.bf16.msra.mxu0 0
    %960 = vmatprep.subr.bf16.mxu0 0
    %961 = vmatpush2.bf16.msra.mxu0 0
    %962 = vmatprep.subr.bf16.mxu0 0
    %963 = vmatpush2.bf16.msra.mxu0 0
    %964 = vmatprep.subr.bf16.mxu0 0
    %965 = vmatpush2.bf16.msra.mxu0 0
    %966 = vmatprep.subr.bf16.mxu0 0
    %967 = vmatpush2.bf16.msra.mxu0 0
    %968 = vmatprep.mubr.bf16.mxu0 0
    %969 = vmatmul.mubr.bf16.gmra.mxu0 %v925
    %v970 = vpop.f32.mrf.mxu0
    %v971 = vadd.f32 0.0, %v970
    %v972 = vpop.f32.mrf.mxu0
    %v973 = vpop.f32.mrf.mxu0
    %v974 = vadd.f32 0.0, %v973
    %v975 = vpop.f32.mrf.mxu0
    %976 = vmatprep.mubr.bf16.mxu0 0
    %977 = vmatmul.mubr.bf16.gmra.mxu0 %v928
    %v978 = vpop.f32.mrf.mxu0
    %v979 = vadd.f32 0.0, %v978
    %v980 = vpop.f32.mrf.mxu0
    %v981 = vpop.f32.mrf.mxu0
    %v982 = vadd.f32 0.0, %v981
    %v983 = vpop.f32.mrf.mxu0
    %984 = vmatprep.mubr.bf16.mxu0 0
    %985 = vmatmul.mubr.bf16.gmra.mxu0 %v931
    %v986 = vpop.f32.mrf.mxu0
    %v987 = vadd.f32 0.0, %v986
    %v988 = vpop.f32.mrf.mxu0
    %v989 = vpop.f32.mrf.mxu0
    %v990 = vadd.f32 0.0, %v989
    %v991 = vpop.f32.mrf.mxu0
    %992 = vmatprep.mubr.bf16.mxu0 0
    %993 = vmatmul.mubr.bf16.gmra.mxu0 %v934
    %v994 = vpop.f32.mrf.mxu0
    %v995 = vadd.f32 0.0, %v994
    %v996 = vpop.f32.mrf.mxu0
    %v997 = vpop.f32.mrf.mxu0
    %v998 = vadd.f32 0.0, %v997
    %v999 = vpop.f32.mrf.mxu0
    %1000 = vdwg.mxu0
    %v1001 = vadd.f32 %v884, %v971
    %v1002 = vadd.f32 %v887, %v974
    %v1003 = vadd.f32 %v892, %v979
    %v1004 = vadd.f32 %v895, %v982
    %v1005 = vadd.f32 %v900, %v987
    %v1006 = vadd.f32 %v903, %v990
    %v1007 = vadd.f32 %v908, %v995
    %v1008 = vadd.f32 %v911, %v998
    %v1009 = vpack.c.bf16 %v681, %v678
    %v1010 = vpack.c.bf16 %v689, %v686
    %v1011 = vpack.c.bf16 %v697, %v694
    %v1012 = vpack.c.bf16 %v705, %v702
    %v1015 = vunpack.c.l.b16 %v377
    %v1016 = vunpack.c.l.b16 %v378
    %v1017 = vpack.c.b16 %v1016, %v1015
    %v1020 = vsel %vm119, %v1009, 0
    %v1023 = vsel %vm119, %v1010, 0
    %v1026 = vsel %vm119, %v1011, 0
    %v1029 = vsel %vm119, %v1012, 0
    %1031 = vmatprep.subr.bf16.mxu0 0
    %1032 = vmatpush1.bf16.msra.mxu0 0
    %1033 = vmatprep.subr.bf16.mxu0 0
    %1034 = vmatpush1.bf16.msra.mxu0 0
    %1035 = vmatprep.subr.bf16.mxu0 0
    %1036 = vmatpush1.bf16.msra.mxu0 0
    %1037 = vmatprep.subr.bf16.mxu0 0
    %1038 = vmatpush1.bf16.msra.mxu0 0
    %1039 = vmatprep.subr.bf16.mxu0 0
    %1040 = vmatpush1.bf16.msra.mxu0 0
    %1041 = vmatprep.subr.bf16.mxu0 0
    %1042 = vmatpush1.bf16.msra.mxu0 0
    %1043 = vmatprep.subr.bf16.mxu0 0
    %1044 = vmatpush1.bf16.msra.mxu0 0
    %1045 = vmatprep.subr.bf16.mxu0 0
    %1046 = vmatpush1.bf16.msra.mxu0 %v1017
    %1047 = vmatprep.subr.bf16.mxu0 0
    %1048 = vmatpush2.bf16.msra.mxu0 0
    %1049 = vmatprep.subr.bf16.mxu0 0
    %1050 = vmatpush2.bf16.msra.mxu0 0
    %1051 = vmatprep.subr.bf16.mxu0 0
    %1052 = vmatpush2.bf16.msra.mxu0 0
    %1053 = vmatprep.subr.bf16.mxu0 0
    %1054 = vmatpush2.bf16.msra.mxu0 0
    %1055 = vmatprep.subr.bf16.mxu0 0
    %1056 = vmatpush2.bf16.msra.mxu0 0
    %1057 = vmatprep.subr.bf16.mxu0 0
    %1058 = vmatpush2.bf16.msra.mxu0 0
    %1059 = vmatprep.subr.bf16.mxu0 0
    %1060 = vmatpush2.bf16.msra.mxu0 0
    %1061 = vmatprep.subr.bf16.mxu0 0
    %1062 = vmatpush2.bf16.msra.mxu0 0
    %1063 = vmatprep.mubr.bf16.mxu0 0
    %1064 = vmatmul.mubr.bf16.gmra.mxu0 %v1020
    %v1065 = vpop.f32.mrf.mxu0
    %v1066 = vadd.f32 0.0, %v1065
    %v1067 = vpop.f32.mrf.mxu0
    %v1068 = vpop.f32.mrf.mxu0
    %v1069 = vadd.f32 0.0, %v1068
    %v1070 = vpop.f32.mrf.mxu0
    %1071 = vmatprep.mubr.bf16.mxu0 0
    %1072 = vmatmul.mubr.bf16.gmra.mxu0 %v1023
    %v1073 = vpop.f32.mrf.mxu0
    %v1074 = vadd.f32 0.0, %v1073
    %v1075 = vpop.f32.mrf.mxu0
    %v1076 = vpop.f32.mrf.mxu0
    %v1077 = vadd.f32 0.0, %v1076
    %v1078 = vpop.f32.mrf.mxu0
    %1079 = vmatprep.mubr.bf16.mxu0 0
    %1080 = vmatmul.mubr.bf16.gmra.mxu0 %v1026
    %v1081 = vpop.f32.mrf.mxu0
    %v1082 = vadd.f32 0.0, %v1081
    %v1083 = vpop.f32.mrf.mxu0
    %v1084 = vpop.f32.mrf.mxu0
    %v1085 = vadd.f32 0.0, %v1084
    %v1086 = vpop.f32.mrf.mxu0
    %1087 = vmatprep.mubr.bf16.mxu0 0
    %1088 = vmatmul.mubr.bf16.gmra.mxu0 %v1029
    %v1089 = vpop.f32.mrf.mxu0
    %v1090 = vadd.f32 0.0, %v1089
    %v1091 = vpop.f32.mrf.mxu0
    %v1092 = vpop.f32.mrf.mxu0
    %v1093 = vadd.f32 0.0, %v1092
    %v1094 = vpop.f32.mrf.mxu0
    %1095 = vdwg.mxu0
    %v1096 = vadd.f32 %v1001, %v1066
    %v1097 = vadd.f32 %v1002, %v1069
    %v1098 = vadd.f32 %v1003, %v1074
    %v1099 = vadd.f32 %v1004, %v1077
    %v1100 = vadd.f32 %v1005, %v1082
    %v1101 = vadd.f32 %v1006, %v1085
    %v1102 = vadd.f32 %v1007, %v1090
    %v1103 = vadd.f32 %v1008, %v1093
    %v1104 = vpack.c.bf16 %v713, %v710
    %v1105 = vpack.c.bf16 %v721, %v718
    %v1106 = vpack.c.bf16 %v729, %v726
    %v1107 = vpack.c.bf16 %v737, %v734
    %v1110 = vunpack.c.l.b16 %v379
    %v1111 = vunpack.c.l.b16 %v380
    %v1112 = vpack.c.b16 %v1111, %v1110
    %v1115 = vsel %vm119, %v1104, 0
    %v1118 = vsel %vm119, %v1105, 0
    %v1121 = vsel %vm119, %v1106, 0
    %v1124 = vsel %vm119, %v1107, 0
    %1126 = vmatprep.subr.bf16.mxu0 0
    %1127 = vmatpush1.bf16.msra.mxu0 0
    %1128 = vmatprep.subr.bf16.mxu0 0
    %1129 = vmatpush1.bf16.msra.mxu0 0
    %1130 = vmatprep.subr.bf16.mxu0 0
    %1131 = vmatpush1.bf16.msra.mxu0 0
    %1132 = vmatprep.subr.bf16.mxu0 0
    %1133 = vmatpush1.bf16.msra.mxu0 0
    %1134 = vmatprep.subr.bf16.mxu0 0
    %1135 = vmatpush1.bf16.msra.mxu0 0
    %1136 = vmatprep.subr.bf16.mxu0 0
    %1137 = vmatpush1.bf16.msra.mxu0 0
    %1138 = vmatprep.subr.bf16.mxu0 0
    %1139 = vmatpush1.bf16.msra.mxu0 0
    %1140 = vmatprep.subr.bf16.mxu0 0
    %1141 = vmatpush1.bf16.msra.mxu0 %v1112
    %1142 = vmatprep.subr.bf16.mxu0 0
    %1143 = vmatpush2.bf16.msra.mxu0 0
    %1144 = vmatprep.subr.bf16.mxu0 0
    %1145 = vmatpush2.bf16.msra.mxu0 0
    %1146 = vmatprep.subr.bf16.mxu0 0
    %1147 = vmatpush2.bf16.msra.mxu0 0
    %1148 = vmatprep.subr.bf16.mxu0 0
    %1149 = vmatpush2.bf16.msra.mxu0 0
    %1150 = vmatprep.subr.bf16.mxu0 0
    %1151 = vmatpush2.bf16.msra.mxu0 0
    %1152 = vmatprep.subr.bf16.mxu0 0
    %1153 = vmatpush2.bf16.msra.mxu0 0
    %1154 = vmatprep.subr.bf16.mxu0 0
    %1155 = vmatpush2.bf16.msra.mxu0 0
    %1156 = vmatprep.subr.bf16.mxu0 0
    %1157 = vmatpush2.bf16.msra.mxu0 0
    %1158 = vmatprep.mubr.bf16.mxu0 0
    %1159 = vmatmul.mubr.bf16.gmra.mxu0 %v1115
    %v1160 = vpop.f32.mrf.mxu0
    %v1161 = vadd.f32 0.0, %v1160
    %v1162 = vpop.f32.mrf.mxu0
    %v1163 = vpop.f32.mrf.mxu0
    %v1164 = vadd.f32 0.0, %v1163
    %v1165 = vpop.f32.mrf.mxu0
    %1166 = vmatprep.mubr.bf16.mxu0 0
    %1167 = vmatmul.mubr.bf16.gmra.mxu0 %v1118
    %v1168 = vpop.f32.mrf.mxu0
    %v1169 = vadd.f32 0.0, %v1168
    %v1170 = vpop.f32.mrf.mxu0
    %v1171 = vpop.f32.mrf.mxu0
    %v1172 = vadd.f32 0.0, %v1171
    %v1173 = vpop.f32.mrf.mxu0
    %1174 = vmatprep.mubr.bf16.mxu0 0
    %1175 = vmatmul.mubr.bf16.gmra.mxu0 %v1121
    %v1176 = vpop.f32.mrf.mxu0
    %v1177 = vadd.f32 0.0, %v1176
    %v1178 = vpop.f32.mrf.mxu0
    %v1179 = vpop.f32.mrf.mxu0
    %v1180 = vadd.f32 0.0, %v1179
    %v1181 = vpop.f32.mrf.mxu0
    %1182 = vmatprep.mubr.bf16.mxu0 0
    %1183 = vmatmul.mubr.bf16.gmra.mxu0 %v1124
    %v1184 = vpop.f32.mrf.mxu0
    %v1185 = vadd.f32 0.0, %v1184
    %v1186 = vpop.f32.mrf.mxu0
    %v1187 = vpop.f32.mrf.mxu0
    %v1188 = vadd.f32 0.0, %v1187
    %v1189 = vpop.f32.mrf.mxu0
    %1190 = vdwg.mxu0
    %v1191 = vadd.f32 %v1096, %v1161
    %v1192 = vadd.f32 %v1097, %v1164
    %v1193 = vadd.f32 %v1098, %v1169
    %v1194 = vadd.f32 %v1099, %v1172
    %v1195 = vadd.f32 %v1100, %v1177
    %v1196 = vadd.f32 %v1101, %v1180
    %v1197 = vadd.f32 %v1102, %v1185
    %v1198 = vadd.f32 %v1103, %v1188
    %v1199 = vlaneseq
    %v1200 = vshrl.u32 %v1199, 7
    %v1201 = vsub.s32 0, %v1200
    %v1202 = vrot.slane %v381, %v1201
    %v1203 = vmul.f32 %v1191, %v1202
    %v1204 = vmul.f32 %v1192, %v1202
    %v1205 = vmul.f32 %v1193, %v1202
    %v1206 = vmul.f32 %v1194, %v1202
    %v1207 = vmul.f32 %v1195, %v1202
    %v1208 = vmul.f32 %v1196, %v1202
    %v1209 = vmul.f32 %v1197, %v1202
    %v1210 = vmul.f32 %v1198, %v1202
    %v1211 = vlaneseq
    %v1212 = vshrl.u32 %v1211, 7
    %v1213 = vsub.s32 0, %v1212
    %v1214 = vrot.slane %v382, %v1213
    %v1215 = vadd.f32 %v1203, %v1214
    %v1216 = vadd.f32 %v1204, %v1214
    %v1217 = vadd.f32 %v1205, %v1214
    %v1218 = vadd.f32 %v1206, %v1214
    %v1219 = vadd.f32 %v1207, %v1214
    %v1220 = vadd.f32 %v1208, %v1214
    %v1221 = vadd.f32 %v1209, %v1214
    %v1222 = vadd.f32 %v1210, %v1214
    %v1223 = vmax.f32 %v1215, 0.0
    %v1224 = vmax.f32 %v1216, 0.0
    %v1225 = vmax.f32 %v1217, 0.0
    %v1226 = vmax.f32 %v1218, 0.0
    %v1227 = vmax.f32 %v1219, 0.0
    %v1228 = vmax.f32 %v1220, 0.0
    %v1229 = vmax.f32 %v1221, 0.0
    %v1230 = vmax.f32 %v1222, 0.0
    %v1231 = vld [vmem:[#allocation2 + $0x120] sm:$0xf]
    %v1232 = vld [vmem:[#allocation2 + $0x124] sm:$0xf]
    %v1233 = vld [vmem:[#allocation2 + $0x128] sm:$0xf]
    %v1234 = vld [vmem:[#allocation2 + $0x12c] sm:$0xf]
    %v1235 = vld [vmem:[#allocation2 + $0x130] sm:$0x1]
    %v1236 = vpack.c.bf16 %v1224, %v1223
    %v1237 = vpack.c.bf16 %v1226, %v1225
    %v1238 = vpack.c.bf16 %v1228, %v1227
    %v1239 = vpack.c.bf16 %v1230, %v1229
    %1240 = vmatprep.subr.bf16.mxu0 0
    %1241 = vmatpush1.bf16.msra.mxu0 0
    %1242 = vmatprep.subr.bf16.mxu0 0
    %1243 = vmatpush1.bf16.msra.mxu0 0
    %1244 = vmatprep.subr.bf16.mxu0 0
    %1245 = vmatpush1.bf16.msra.mxu0 0
    %1246 = vmatprep.subr.bf16.mxu0 0
    %1247 = vmatpush1.bf16.msra.mxu0 0
    %1248 = vmatprep.subr.bf16.mxu0 0
    %1249 = vmatpush1.bf16.msra.mxu0 %v1239
    %1250 = vmatprep.subr.bf16.mxu0 0
    %1251 = vmatpush1.bf16.msra.mxu0 %v1238
    %1252 = vmatprep.subr.bf16.mxu0 0
    %1253 = vmatpush1.bf16.msra.mxu0 %v1237
    %1254 = vmatprep.subr.bf16.mxu0 0
    %1255 = vmatpush1.bf16.msra.mxu0 %v1236
    %1256 = vmatprep.subr.bf16.mxu0 0
    %1257 = vmatpush2.bf16.msra.mxu0 0
    %1258 = vmatprep.subr.bf16.mxu0 0
    %1259 = vmatpush2.bf16.msra.mxu0 0
    %1260 = vmatprep.subr.bf16.mxu0 0
    %1261 = vmatpush2.bf16.msra.mxu0 0
    %1262 = vmatprep.subr.bf16.mxu0 0
    %1263 = vmatpush2.bf16.msra.mxu0 0
    %1264 = vmatprep.subr.bf16.mxu0 0
    %1265 = vmatpush2.bf16.msra.mxu0 0
    %1266 = vmatprep.subr.bf16.mxu0 0
    %1267 = vmatpush2.bf16.msra.mxu0 0
    %1268 = vmatprep.subr.bf16.mxu0 0
    %1269 = vmatpush2.bf16.msra.mxu0 0
    %1270 = vmatprep.subr.bf16.mxu0 0
    %1271 = vmatpush2.bf16.msra.mxu0 0
    %1272 = vmatprep.mubr.bf16.mxu0 0
    %1273 = vmatmul.mubr.bf16.gmra.mxu0 %v70
    %v1274 = vpop.f32.mrf.mxu0
    %v1275 = vadd.f32 0.0, %v1274
    %v1276 = vpop.f32.mrf.mxu0
    %v1277 = vpop.f32.mrf.mxu0
    %v1278 = vpop.f32.mrf.mxu0
    %1279 = vdwg.mxu0
    %v1280 = vpack.c.bf16 %v1275, %v1275
    %v1285 = vunpack.c.l.b16 %v1231
    %v1286 = vunpack.c.l.b16 %v1232
    %v1287 = vunpack.c.l.b16 %v1233
    %v1288 = vunpack.c.l.b16 %v1234
    %v1289 = vpack.c.b16 %v1286, %v1285
    %v1290 = vpack.c.b16 %v1288, %v1287
    %vm1293 = vcmask 261120
    %v1295 = vsel %vm1293, %v1280, 0
    %1297 = vmatprep.subr.bf16.mxu0 0
    %1298 = vmatpush1.bf16.msra.mxu0 0
    %1299 = vmatprep.subr.bf16.mxu0 0
    %1300 = vmatpush1.bf16.msra.mxu0 0
    %1301 = vmatprep.subr.bf16.mxu0 0
    %1302 = vmatpush1.bf16.msra.mxu0 0
    %1303 = vmatprep.subr.bf16.mxu0 0
    %1304 = vmatpush1.bf16.msra.mxu0 0
    %1305 = vmatprep.subr.bf16.mxu0 0
    %1306 = vmatpush1.bf16.msra.mxu0 0
    %1307 = vmatprep.subr.bf16.mxu0 0
    %1308 = vmatpush1.bf16.msra.mxu0 0
    %1309 = vmatprep.subr.bf16.mxu0 0
    %1310 = vmatpush1.bf16.msra.mxu0 %v1290
    %1311 = vmatprep.subr.bf16.mxu0 0
    %1312 = vmatpush1.bf16.msra.mxu0 %v1289
    %1313 = vmatprep.subr.bf16.mxu0 0
    %1314 = vmatpush2.bf16.msra.mxu0 0
    %1315 = vmatprep.subr.bf16.mxu0 0
    %1316 = vmatpush2.bf16.msra.mxu0 0
    %1317 = vmatprep.subr.bf16.mxu0 0
    %1318 = vmatpush2.bf16.msra.mxu0 0
    %1319 = vmatprep.subr.bf16.mxu0 0
    %1320 = vmatpush2.bf16.msra.mxu0 0
    %1321 = vmatprep.subr.bf16.mxu0 0
    %1322 = vmatpush2.bf16.msra.mxu0 0
    %1323 = vmatprep.subr.bf16.mxu0 0
    %1324 = vmatpush2.bf16.msra.mxu0 0
    %1325 = vmatprep.subr.bf16.mxu0 0
    %1326 = vmatpush2.bf16.msra.mxu0 0
    %1327 = vmatprep.subr.bf16.mxu0 0
    %1328 = vmatpush2.bf16.msra.mxu0 0
    %1329 = vmatprep.mubr.bf16.mxu0 0
    %1330 = vmatmul.mubr.bf16.gmra.mxu0 %v1295
    %v1331 = vpop.f32.mrf.mxu0
    %v1332 = vadd.f32 0.0, %v1331
    %v1333 = vpop.f32.mrf.mxu0
    %v1334 = vpop.f32.mrf.mxu0
    %v1335 = vpop.f32.mrf.mxu0
    %1336 = vdwg.mxu0
    %v1337 = vmax.f32 %v1332, 0.0
    %v1338 = vpack.c.bf16 %v1337, %v1337
    %v1340 = vsel %vm242, %v1338, 0
    %v1343 = vsel %vm169, %v1235, 0
    %1345 = vmatprep.subr.bf16.mxu0 0
    %1346 = vmatpush1.bf16.msra.mxu0 0
    %1347 = vmatprep.subr.bf16.mxu0 0
    %1348 = vmatpush1.bf16.msra.mxu0 0
    %1349 = vmatprep.subr.bf16.mxu0 0
    %1350 = vmatpush1.bf16.msra.mxu0 0
    %1351 = vmatprep.subr.bf16.mxu0 0
    %1352 = vmatpush1.bf16.msra.mxu0 0
    %1353 = vmatprep.subr.bf16.mxu0 0
    %1354 = vmatpush1.bf16.msra.mxu0 0
    %1355 = vmatprep.subr.bf16.mxu0 0
    %1356 = vmatpush1.bf16.msra.mxu0 0
    %1357 = vmatprep.subr.bf16.mxu0 0
    %1358 = vmatpush1.bf16.msra.mxu0 0
    %1359 = vmatprep.subr.bf16.mxu0 0
    %1360 = vmatpush1.bf16.msra.mxu0 %v1343
    %1361 = vmatprep.subr.bf16.mxu0 0
    %1362 = vmatpush2.bf16.msra.mxu0 0
    %1363 = vmatprep.subr.bf16.mxu0 0
    %1364 = vmatpush2.bf16.msra.mxu0 0
    %1365 = vmatprep.subr.bf16.mxu0 0
    %1366 = vmatpush2.bf16.msra.mxu0 0
    %1367 = vmatprep.subr.bf16.mxu0 0
    %1368 = vmatpush2.bf16.msra.mxu0 0
    %1369 = vmatprep.subr.bf16.mxu0 0
    %1370 = vmatpush2.bf16.msra.mxu0 0
    %1371 = vmatprep.subr.bf16.mxu0 0
    %1372 = vmatpush2.bf16.msra.mxu0 0
    %1373 = vmatprep.subr.bf16.mxu0 0
    %1374 = vmatpush2.bf16.msra.mxu0 0
    %1375 = vmatprep.subr.bf16.mxu0 0
    %1376 = vmatpush2.bf16.msra.mxu0 0
    %1377 = vmatprep.mubr.bf16.mxu0 0
    %1378 = vmatmul.mubr.bf16.gmra.mxu0 %v1340
    %v1379 = vpop.f32.mrf.mxu0
    %v1380 = vadd.f32 0.0, %v1379
    %v1381 = vpop.f32.mrf.mxu0
    %v1382 = vpop.f32.mrf.mxu0
    %v1383 = vpop.f32.mrf.mxu0
    %1384 = vdwg.mxu0
    %v1385 = vxor.u32 %v1380, 2147483648
    %v1386 = vmul.f32 %v1385, 1.442695
    %v1387 = vpow.pop %v1386
    %v1388 = vadd.f32 %v1387, 1.0
    %v1389 = vrcp.pop %v1388
    %v1390 = vmul.f32 1.0, %v1389
    %v1391 = vpack.c.bf16 %v1390, %v1390
    %v1393 = vsel %vm169, %v1391, 0
    %1395 = vmatprep.subr.bf16.mxu0 0
    %1396 = vmatpush1.bf16.msra.mxu0 0
    %1397 = vmatprep.subr.bf16.mxu0 0
    %1398 = vmatpush1.bf16.msra.mxu0 0
    %1399 = vmatprep.subr.bf16.mxu0 0
    %1400 = vmatpush1.bf16.msra.mxu0 0
    %1401 = vmatprep.subr.bf16.mxu0 0
    %1402 = vmatpush1.bf16.msra.mxu0 0
    %1403 = vmatprep.subr.bf16.mxu0 0
    %1404 = vmatpush1.bf16.msra.mxu0 0
    %1405 = vmatprep.subr.bf16.mxu0 0
    %1406 = vmatpush1.bf16.msra.mxu0 0
    %1407 = vmatprep.subr.bf16.mxu0 0
    %1408 = vmatpush1.bf16.msra.mxu0 0
    %1409 = vmatprep.subr.bf16.mxu0 0
    %1410 = vmatpush1.bf16.msra.mxu0 %v1393
    %1411 = vmatprep.subr.bf16.mxu0 0
    %1412 = vmatpush2.bf16.msra.mxu0 0
    %1413 = vmatprep.subr.bf16.mxu0 0
    %1414 = vmatpush2.bf16.msra.mxu0 0
    %1415 = vmatprep.subr.bf16.mxu0 0
    %1416 = vmatpush2.bf16.msra.mxu0 0
    %1417 = vmatprep.subr.bf16.mxu0 0
    %1418 = vmatpush2.bf16.msra.mxu0 0
    %1419 = vmatprep.subr.bf16.mxu0 0
    %1420 = vmatpush2.bf16.msra.mxu0 0
    %1421 = vmatprep.subr.bf16.mxu0 0
    %1422 = vmatpush2.bf16.msra.mxu0 0
    %1423 = vmatprep.subr.bf16.mxu0 0
    %1424 = vmatpush2.bf16.msra.mxu0 0
    %1425 = vmatprep.subr.bf16.mxu0 0
    %1426 = vmatpush2.bf16.msra.mxu0 0
    %1427 = vmatprep.mubr.bf16.mxu0 0
    %1428 = vmatmul.mubr.bf16.gmra.mxu0 %v244
    %v1429 = vpop.f32.mrf.mxu0
    %v1430 = vadd.f32 0.0, %v1429
    %v1431 = vpop.f32.mrf.mxu0
    %v1432 = vpop.f32.mrf.mxu0
    %v1433 = vadd.f32 0.0, %v1432
    %v1434 = vpop.f32.mrf.mxu0
    %1435 = vmatprep.mubr.bf16.mxu0 0
    %1436 = vmatmul.mubr.bf16.gmra.mxu0 %v247
    %v1437 = vpop.f32.mrf.mxu0
    %v1438 = vadd.f32 0.0, %v1437
    %v1439 = vpop.f32.mrf.mxu0
    %v1440 = vpop.f32.mrf.mxu0
    %v1441 = vadd.f32 0.0, %v1440
    %v1442 = vpop.f32.mrf.mxu0
    %1443 = vmatprep.mubr.bf16.mxu0 0
    %1444 = vmatmul.mubr.bf16.gmra.mxu0 %v250
    %v1445 = vpop.f32.mrf.mxu0
    %v1446 = vadd.f32 0.0, %v1445
    %v1447 = vpop.f32.mrf.mxu0
    %v1448 = vpop.f32.mrf.mxu0
    %v1449 = vadd.f32 0.0, %v1448
    %v1450 = vpop.f32.mrf.mxu0
    %1451 = vmatprep.mubr.bf16.mxu0 0
    %1452 = vmatmul.mubr.bf16.gmra.mxu0 %v253
    %v1453 = vpop.f32.mrf.mxu0
    %v1454 = vadd.f32 0.0, %v1453
    %v1455 = vpop.f32.mrf.mxu0
    %v1456 = vpop.f32.mrf.mxu0
    %v1457 = vadd.f32 0.0, %v1456
    %v1458 = vpop.f32.mrf.mxu0
    %1459 = vdwg.mxu0
    %v1460 = vmul.f32 %v1223, %v1430
    %v1461 = vmul.f32 %v1224, %v1433
    %v1462 = vmul.f32 %v1225, %v1438
    %v1463 = vmul.f32 %v1226, %v1441
    %v1464 = vmul.f32 %v1227, %v1446
    %v1465 = vmul.f32 %v1228, %v1449
    %v1466 = vmul.f32 %v1229, %v1454
    %v1467 = vmul.f32 %v1230, %v1457
    %v1468 = vld [vmem:[#allocation2 + $0x138] sm:$0xf]
    %v1469 = vld [vmem:[#allocation2 + $0x13c] sm:$0xf]
    %v1470 = vld [vmem:[#allocation2 + $0x140] sm:$0xf]
    %v1471 = vld [vmem:[#allocation2 + $0x144] sm:$0xf]
    %v1472 = vld [vmem:[#allocation2 + $0x148] sm:$0xf]
    %v1473 = vld [vmem:[#allocation2 + $0x14c] sm:$0xf]
    %v1474 = vld [vmem:[#allocation2 + $0x150] sm:$0xf]
    %v1475 = vld [vmem:[#allocation2 + $0x154] sm:$0xf]
    %v1476 = vld [vmem:[#allocation2 + $0x158] sm:$0xf]
    %v1477 = vld [vmem:[#allocation2 + $0x15c] sm:$0xf]
    %v1478 = vld [vmem:[#allocation2 + $0x160] sm:$0xf]
    %v1479 = vld [vmem:[#allocation2 + $0x164] sm:$0xf]
    %v1480 = vld [vmem:[#allocation2 + $0x168] sm:$0xf]
    %v1481 = vld [vmem:[#allocation2 + $0x16c] sm:$0xf]
    %v1482 = vld [vmem:[#allocation2 + $0x170] sm:$0xf]
    %v1483 = vld [vmem:[#allocation2 + $0x174] sm:$0xf]
    %v1484 = vld [vmem:[#allocation2 + $0x178] sm:$0xf]
    %v1485 = vld [vmem:[#allocation2 + $0x17c] sm:$0xf]
    %v1486 = vld [vmem:[#allocation2 + $0x180] sm:$0xf]
    %v1487 = vld [vmem:[#allocation2 + $0x184] sm:$0xf]
    %v1488 = vld [vmem:[#allocation2 + $0x188] sm:$0xf]
    %v1489 = vld [vmem:[#allocation2 + $0x18c] sm:$0xf]
    %v1490 = vld [vmem:[#allocation2 + $0x190] sm:$0xf]
    %v1491 = vld [vmem:[#allocation2 + $0x194] sm:$0xf]
    %v1492 = vld [vmem:[#allocation2 + $0x198] sm:$0xf]
    %v1493 = vld [vmem:[#allocation2 + $0x19c] sm:$0xf]
    %v1494 = vld [vmem:[#allocation2 + $0x1a0] sm:$0xf]
    %v1495 = vld [vmem:[#allocation2 + $0x1a4] sm:$0xf]
    %v1496 = vld [vmem:[#allocation2 + $0x1a8] sm:$0xf]
    %v1497 = vld [vmem:[#allocation2 + $0x1ac] sm:$0xf]
    %v1498 = vld [vmem:[#allocation2 + $0x1b0] sm:$0xf]
    %v1499 = vld [vmem:[#allocation2 + $0x1b4] sm:$0xf]
    %v1500 = vld [vmem:[#allocation2 + $0x1b8] sm:$0xf]
    %v1501 = vld [vmem:[#allocation2 + $0x1bc] sm:$0xf]
    %v1502 = vld [vmem:[#allocation2 + $0x1c0] sm:$0xf]
    %v1503 = vld [vmem:[#allocation2 + $0x1c4] sm:$0xf]
    %v1504 = vld [vmem:[#allocation2 + $0x1c8] sm:$0xf]
    %v1505 = vld [vmem:[#allocation2 + $0x1cc] sm:$0xf]
    %v1506 = vld [vmem:[#allocation2 + $0x1d0] sm:$0xf]
    %v1507 = vld [vmem:[#allocation2 + $0x1d4] sm:$0xf]
    %v1508 = vld [vmem:[#allocation4 + $0x10] sm:$0x1]
    %v1509 = vld [vmem:[#allocation4 + $0x18] sm:$0x1]
    %v1510 = vpack.c.bf16 %v1461, %v1460
    %v1511 = vpack.c.bf16 %v1463, %v1462
    %v1512 = vpack.c.bf16 %v1465, %v1464
    %v1513 = vpack.c.bf16 %v1467, %v1466
    %v1534 = vunpack.c.l.b16 %v1468
    %v1535 = vunpack.c.l.b16 %v1469
    %v1536 = vunpack.c.l.b16 %v1470
    %v1537 = vunpack.c.l.b16 %v1471
    %v1538 = vunpack.c.l.b16 %v1472
    %v1539 = vunpack.c.l.b16 %v1473
    %v1540 = vunpack.c.l.b16 %v1474
    %v1541 = vunpack.c.l.b16 %v1475
    %v1542 = vunpack.c.l.b16 %v1476
    %v1543 = vunpack.c.l.b16 %v1477
    %v1544 = vunpack.c.l.b16 %v1478
    %v1545 = vunpack.c.l.b16 %v1479
    %v1546 = vunpack.c.l.b16 %v1480
    %v1547 = vunpack.c.l.b16 %v1481
    %v1548 = vunpack.c.l.b16 %v1482
    %v1549 = vunpack.c.l.b16 %v1483
    %v1550 = vunpack.c.l.b16 %v1484
    %v1551 = vunpack.c.l.b16 %v1485
    %v1552 = vunpack.c.l.b16 %v1486
    %v1553 = vunpack.c.l.b16 %v1487
    %v1554 = vpack.c.b16 %v1535, %v1534
    %v1555 = vpack.c.b16 %v1537, %v1536
    %v1556 = vpack.c.b16 %v1539, %v1538
    %v1557 = vpack.c.b16 %v1541, %v1540
    %v1558 = vpack.c.b16 %v1543, %v1542
    %v1559 = vpack.c.b16 %v1545, %v1544
    %v1560 = vpack.c.b16 %v1547, %v1546
    %v1561 = vpack.c.b16 %v1549, %v1548
    %v1562 = vpack.c.b16 %v1551, %v1550
    %v1563 = vpack.c.b16 %v1553, %v1552
    %v1565 = vsel %vm68, %v1554, 0
    %v1568 = vsel %vm68, %v1555, 0
    %v1571 = vsel %vm68, %v1556, 0
    %v1574 = vsel %vm68, %v1557, 0
    %v1577 = vsel %vm68, %v1558, 0
    %v1580 = vsel %vm68, %v1559, 0
    %v1583 = vsel %vm68, %v1560, 0
    %v1586 = vsel %vm68, %v1561, 0
    %v1589 = vsel %vm68, %v1562, 0
    %v1592 = vsel %vm68, %v1563, 0
    %1594 = vmatprep.subr.bf16.mxu0 0
    %1595 = vmatpush1.bf16.msra.mxu0 0
    %1596 = vmatprep.subr.bf16.mxu0 0
    %1597 = vmatpush1.bf16.msra.mxu0 0
    %1598 = vmatprep.subr.bf16.mxu0 0
    %1599 = vmatpush1.bf16.msra.mxu0 0
    %1600 = vmatprep.subr.bf16.mxu0 0
    %1601 = vmatpush1.bf16.msra.mxu0 0
    %1602 = vmatprep.subr.bf16.mxu0 0
    %1603 = vmatpush1.bf16.msra.mxu0 %v1513
    %1604 = vmatprep.subr.bf16.mxu0 0
    %1605 = vmatpush1.bf16.msra.mxu0 %v1512
    %1606 = vmatprep.subr.bf16.mxu0 0
    %1607 = vmatpush1.bf16.msra.mxu0 %v1511
    %1608 = vmatprep.subr.bf16.mxu0 0
    %1609 = vmatpush1.bf16.msra.mxu0 %v1510
    %1610 = vmatprep.subr.bf16.mxu0 0
    %1611 = vmatpush2.bf16.msra.mxu0 0
    %1612 = vmatprep.subr.bf16.mxu0 0
    %1613 = vmatpush2.bf16.msra.mxu0 0
    %1614 = vmatprep.subr.bf16.mxu0 0
    %1615 = vmatpush2.bf16.msra.mxu0 0
    %1616 = vmatprep.subr.bf16.mxu0 0
    %1617 = vmatpush2.bf16.msra.mxu0 0
    %1618 = vmatprep.subr.bf16.mxu0 0
    %1619 = vmatpush2.bf16.msra.mxu0 0
    %1620 = vmatprep.subr.bf16.mxu0 0
    %1621 = vmatpush2.bf16.msra.mxu0 0
    %1622 = vmatprep.subr.bf16.mxu0 0
    %1623 = vmatpush2.bf16.msra.mxu0 0
    %1624 = vmatprep.subr.bf16.mxu0 0
    %1625 = vmatpush2.bf16.msra.mxu0 0
    %1626 = vmatprep.mubr.bf16.mxu0 0
    %1627 = vmatmul.mubr.bf16.gmra.mxu0 %v1565
    %v1628 = vpop.f32.mrf.mxu0
    %v1629 = vadd.f32 0.0, %v1628
    %v1630 = vpop.f32.mrf.mxu0
    %v1631 = vpop.f32.mrf.mxu0
    %v1632 = vadd.f32 0.0, %v1631
    %v1633 = vpop.f32.mrf.mxu0
    %1634 = vmatprep.mubr.bf16.mxu0 0
    %1635 = vmatmul.mubr.bf16.gmra.mxu0 %v1568
    %v1636 = vpop.f32.mrf.mxu0
    %v1637 = vadd.f32 0.0, %v1636
    %v1638 = vpop.f32.mrf.mxu0
    %v1639 = vpop.f32.mrf.mxu0
    %v1640 = vadd.f32 0.0, %v1639
    %v1641 = vpop.f32.mrf.mxu0
    %1642 = vmatprep.mubr.bf16.mxu0 0
    %1643 = vmatmul.mubr.bf16.gmra.mxu0 %v1571
    %v1644 = vpop.f32.mrf.mxu0
    %v1645 = vadd.f32 0.0, %v1644
    %v1646 = vpop.f32.mrf.mxu0
    %v1647 = vpop.f32.mrf.mxu0
    %v1648 = vadd.f32 0.0, %v1647
    %v1649 = vpop.f32.mrf.mxu0
    %1650 = vmatprep.mubr.bf16.mxu0 0
    %1651 = vmatmul.mubr.bf16.gmra.mxu0 %v1574
    %v1652 = vpop.f32.mrf.mxu0
    %v1653 = vadd.f32 0.0, %v1652
    %v1654 = vpop.f32.mrf.mxu0
    %v1655 = vpop.f32.mrf.mxu0
    %v1656 = vadd.f32 0.0, %v1655
    %v1657 = vpop.f32.mrf.mxu0
    %1658 = vmatprep.mubr.bf16.mxu0 0
    %1659 = vmatmul.mubr.bf16.gmra.mxu0 %v1577
    %v1660 = vpop.f32.mrf.mxu0
    %v1661 = vadd.f32 0.0, %v1660
    %v1662 = vpop.f32.mrf.mxu0
    %v1663 = vpop.f32.mrf.mxu0
    %v1664 = vadd.f32 0.0, %v1663
    %v1665 = vpop.f32.mrf.mxu0
    %1666 = vmatprep.mubr.bf16.mxu0 0
    %1667 = vmatmul.mubr.bf16.gmra.mxu0 %v1580
    %v1668 = vpop.f32.mrf.mxu0
    %v1669 = vadd.f32 0.0, %v1668
    %v1670 = vpop.f32.mrf.mxu0
    %v1671 = vpop.f32.mrf.mxu0
    %v1672 = vadd.f32 0.0, %v1671
    %v1673 = vpop.f32.mrf.mxu0
    %1674 = vmatprep.mubr.bf16.mxu0 0
    %1675 = vmatmul.mubr.bf16.gmra.mxu0 %v1583
    %v1676 = vpop.f32.mrf.mxu0
    %v1677 = vadd.f32 0.0, %v1676
    %v1678 = vpop.f32.mrf.mxu0
    %v1679 = vpop.f32.mrf.mxu0
    %v1680 = vadd.f32 0.0, %v1679
    %v1681 = vpop.f32.mrf.mxu0
    %1682 = vmatprep.mubr.bf16.mxu0 0
    %1683 = vmatmul.mubr.bf16.gmra.mxu0 %v1586
    %v1684 = vpop.f32.mrf.mxu0
    %v1685 = vadd.f32 0.0, %v1684
    %v1686 = vpop.f32.mrf.mxu0
    %v1687 = vpop.f32.mrf.mxu0
    %v1688 = vadd.f32 0.0, %v1687
    %v1689 = vpop.f32.mrf.mxu0
    %1690 = vmatprep.mubr.bf16.mxu0 0
    %1691 = vmatmul.mubr.bf16.gmra.mxu0 %v1589
    %v1692 = vpop.f32.mrf.mxu0
    %v1693 = vadd.f32 0.0, %v1692
    %v1694 = vpop.f32.mrf.mxu0
    %v1695 = vpop.f32.mrf.mxu0
    %v1696 = vadd.f32 0.0, %v1695
    %v1697 = vpop.f32.mrf.mxu0
    %1698 = vmatprep.mubr.bf16.mxu0 0
    %1699 = vmatmul.mubr.bf16.gmra.mxu0 %v1592
    %v1700 = vpop.f32.mrf.mxu0
    %v1701 = vadd.f32 0.0, %v1700
    %v1702 = vpop.f32.mrf.mxu0
    %v1703 = vpop.f32.mrf.mxu0
    %v1704 = vadd.f32 0.0, %v1703
    %v1705 = vpop.f32.mrf.mxu0
    %1706 = vdwg.mxu0
    %v1707 = vpack.c.bf16 %v1632, %v1629
    %v1708 = vpack.c.bf16 %v1640, %v1637
    %v1709 = vpack.c.bf16 %v1648, %v1645
    %v1710 = vpack.c.bf16 %v1656, %v1653
    %v1715 = vunpack.c.l.b16 %v1492
    %v1716 = vunpack.c.l.b16 %v1493
    %v1717 = vunpack.c.l.b16 %v1494
    %v1718 = vunpack.c.l.b16 %v1495
    %v1719 = vpack.c.b16 %v1716, %v1715
    %v1720 = vpack.c.b16 %v1718, %v1717
    %v1724 = vsel %vm1293, %v1709, 0
    %v1727 = vsel %vm1293, %v1710, 0
    %1729 = vmatprep.subr.bf16.mxu0 0
    %1730 = vmatpush1.bf16.msra.mxu0 0
    %1731 = vmatprep.subr.bf16.mxu0 0
    %1732 = vmatpush1.bf16.msra.mxu0 0
    %1733 = vmatprep.subr.bf16.mxu0 0
    %1734 = vmatpush1.bf16.msra.mxu0 0
    %1735 = vmatprep.subr.bf16.mxu0 0
    %1736 = vmatpush1.bf16.msra.mxu0 0
    %1737 = vmatprep.subr.bf16.mxu0 0
    %1738 = vmatpush1.bf16.msra.mxu0 0
    %1739 = vmatprep.subr.bf16.mxu0 0
    %1740 = vmatpush1.bf16.msra.mxu0 0
    %1741 = vmatprep.subr.bf16.mxu0 0
    %1742 = vmatpush1.bf16.msra.mxu0 %v1720
    %1743 = vmatprep.subr.bf16.mxu0 0
    %1744 = vmatpush1.bf16.msra.mxu0 %v1719
    %1745 = vmatprep.subr.bf16.mxu0 0
    %1746 = vmatpush2.bf16.msra.mxu0 0
    %1747 = vmatprep.subr.bf16.mxu0 0
    %1748 = vmatpush2.bf16.msra.mxu0 0
    %1749 = vmatprep.subr.bf16.mxu0 0
    %1750 = vmatpush2.bf16.msra.mxu0 0
    %1751 = vmatprep.subr.bf16.mxu0 0
    %1752 = vmatpush2.bf16.msra.mxu0 0
    %1753 = vmatprep.subr.bf16.mxu0 0
    %1754 = vmatpush2.bf16.msra.mxu0 0
    %1755 = vmatprep.subr.bf16.mxu0 0
    %1756 = vmatpush2.bf16.msra.mxu0 0
    %1757 = vmatprep.subr.bf16.mxu0 0
    %1758 = vmatpush2.bf16.msra.mxu0 0
    %1759 = vmatprep.subr.bf16.mxu0 0
    %1760 = vmatpush2.bf16.msra.mxu0 0
    %1761 = vmatprep.mubr.bf16.mxu0 0
    %1762 = vmatmul.mubr.bf16.gmra.mxu0 %v1724
    %v1763 = vpop.f32.mrf.mxu0
    %v1764 = vadd.f32 0.0, %v1763
    %v1765 = vpop.f32.mrf.mxu0
    %v1766 = vpop.f32.mrf.mxu0
    %v1767 = vadd.f32 0.0, %v1766
    %v1768 = vpop.f32.mrf.mxu0
    %1769 = vmatprep.mubr.bf16.mxu0 0
    %1770 = vmatmul.mubr.bf16.gmra.mxu0 %v1727
    %v1771 = vpop.f32.mrf.mxu0
    %v1772 = vadd.f32 0.0, %v1771
    %v1773 = vpop.f32.mrf.mxu0
    %v1774 = vpop.f32.mrf.mxu0
    %v1775 = vadd.f32 0.0, %v1774
    %v1776 = vpop.f32.mrf.mxu0
    %1777 = vdwg.mxu0
    %v1782 = vunpack.c.l.b16 %v1488
    %v1783 = vunpack.c.l.b16 %v1489
    %v1784 = vunpack.c.l.b16 %v1490
    %v1785 = vunpack.c.l.b16 %v1491
    %v1786 = vpack.c.b16 %v1783, %v1782
    %v1787 = vpack.c.b16 %v1785, %v1784
    %v1791 = vsel %vm1293, %v1707, 0
    %v1794 = vsel %vm1293, %v1708, 0
    %1796 = vmatprep.subr.bf16.mxu0 0
    %1797 = vmatpush1.bf16.msra.mxu0 0
    %1798 = vmatprep.subr.bf16.mxu0 0
    %1799 = vmatpush1.bf16.msra.mxu0 0
    %1800 = vmatprep.subr.bf16.mxu0 0
    %1801 = vmatpush1.bf16.msra.mxu0 0
    %1802 = vmatprep.subr.bf16.mxu0 0
    %1803 = vmatpush1.bf16.msra.mxu0 0
    %1804 = vmatprep.subr.bf16.mxu0 0
    %1805 = vmatpush1.bf16.msra.mxu0 0
    %1806 = vmatprep.subr.bf16.mxu0 0
    %1807 = vmatpush1.bf16.msra.mxu0 0
    %1808 = vmatprep.subr.bf16.mxu0 0
    %1809 = vmatpush1.bf16.msra.mxu0 %v1787
    %1810 = vmatprep.subr.bf16.mxu0 0
    %1811 = vmatpush1.bf16.msra.mxu0 %v1786
    %1812 = vmatprep.subr.bf16.mxu0 0
    %1813 = vmatpush2.bf16.msra.mxu0 0
    %1814 = vmatprep.subr.bf16.mxu0 0
    %1815 = vmatpush2.bf16.msra.mxu0 0
    %1816 = vmatprep.subr.bf16.mxu0 0
    %1817 = vmatpush2.bf16.msra.mxu0 0
    %1818 = vmatprep.subr.bf16.mxu0 0
    %1819 = vmatpush2.bf16.msra.mxu0 0
    %1820 = vmatprep.subr.bf16.mxu0 0
    %1821 = vmatpush2.bf16.msra.mxu0 0
    %1822 = vmatprep.subr.bf16.mxu0 0
    %1823 = vmatpush2.bf16.msra.mxu0 0
    %1824 = vmatprep.subr.bf16.mxu0 0
    %1825 = vmatpush2.bf16.msra.mxu0 0
    %1826 = vmatprep.subr.bf16.mxu0 0
    %1827 = vmatpush2.bf16.msra.mxu0 0
    %1828 = vmatprep.mubr.bf16.mxu0 0
    %1829 = vmatmul.mubr.bf16.gmra.mxu0 %v1791
    %v1830 = vpop.f32.mrf.mxu0
    %v1831 = vadd.f32 %v1764, %v1830
    %v1832 = vpop.f32.mrf.mxu0
    %v1833 = vpop.f32.mrf.mxu0
    %v1834 = vadd.f32 %v1767, %v1833
    %v1835 = vpop.f32.mrf.mxu0
    %1836 = vmatprep.mubr.bf16.mxu0 0
    %1837 = vmatmul.mubr.bf16.gmra.mxu0 %v1794
    %v1838 = vpop.f32.mrf.mxu0
    %v1839 = vadd.f32 %v1772, %v1838
    %v1840 = vpop.f32.mrf.mxu0
    %v1841 = vpop.f32.mrf.mxu0
    %v1842 = vadd.f32 %v1775, %v1841
    %v1843 = vpop.f32.mrf.mxu0
    %1844 = vdwg.mxu0
    %v1845 = vpack.c.bf16 %v1664, %v1661
    %v1846 = vpack.c.bf16 %v1672, %v1669
    %v1851 = vunpack.c.l.b16 %v1496
    %v1852 = vunpack.c.l.b16 %v1497
    %v1853 = vunpack.c.l.b16 %v1498
    %v1854 = vunpack.c.l.b16 %v1499
    %v1855 = vpack.c.b16 %v1852, %v1851
    %v1856 = vpack.c.b16 %v1854, %v1853
    %v1860 = vsel %vm1293, %v1845, 0
    %v1863 = vsel %vm1293, %v1846, 0
    %1865 = vmatprep.subr.bf16.mxu0 0
    %1866 = vmatpush1.bf16.msra.mxu0 0
    %1867 = vmatprep.subr.bf16.mxu0 0
    %1868 = vmatpush1.bf16.msra.mxu0 0
    %1869 = vmatprep.subr.bf16.mxu0 0
    %1870 = vmatpush1.bf16.msra.mxu0 0
    %1871 = vmatprep.subr.bf16.mxu0 0
    %1872 = vmatpush1.bf16.msra.mxu0 0
    %1873 = vmatprep.subr.bf16.mxu0 0
    %1874 = vmatpush1.bf16.msra.mxu0 0
    %1875 = vmatprep.subr.bf16.mxu0 0
    %1876 = vmatpush1.bf16.msra.mxu0 0
    %1877 = vmatprep.subr.bf16.mxu0 0
    %1878 = vmatpush1.bf16.msra.mxu0 %v1856
    %1879 = vmatprep.subr.bf16.mxu0 0
    %1880 = vmatpush1.bf16.msra.mxu0 %v1855
    %1881 = vmatprep.subr.bf16.mxu0 0
    %1882 = vmatpush2.bf16.msra.mxu0 0
    %1883 = vmatprep.subr.bf16.mxu0 0
    %1884 = vmatpush2.bf16.msra.mxu0 0
    %1885 = vmatprep.subr.bf16.mxu0 0
    %1886 = vmatpush2.bf16.msra.mxu0 0
    %1887 = vmatprep.subr.bf16.mxu0 0
    %1888 = vmatpush2.bf16.msra.mxu0 0
    %1889 = vmatprep.subr.bf16.mxu0 0
    %1890 = vmatpush2.bf16.msra.mxu0 0
    %1891 = vmatprep.subr.bf16.mxu0 0
    %1892 = vmatpush2.bf16.msra.mxu0 0
    %1893 = vmatprep.subr.bf16.mxu0 0
    %1894 = vmatpush2.bf16.msra.mxu0 0
    %1895 = vmatprep.subr.bf16.mxu0 0
    %1896 = vmatpush2.bf16.msra.mxu0 0
    %1897 = vmatprep.mubr.bf16.mxu0 0
    %1898 = vmatmul.mubr.bf16.gmra.mxu0 %v1860
    %v1899 = vpop.f32.mrf.mxu0
    %v1900 = vadd.f32 0.0, %v1899
    %v1901 = vpop.f32.mrf.mxu0
    %v1902 = vpop.f32.mrf.mxu0
    %v1903 = vadd.f32 0.0, %v1902
    %v1904 = vpop.f32.mrf.mxu0
    %1905 = vmatprep.mubr.bf16.mxu0 0
    %1906 = vmatmul.mubr.bf16.gmra.mxu0 %v1863
    %v1907 = vpop.f32.mrf.mxu0
    %v1908 = vadd.f32 0.0, %v1907
    %v1909 = vpop.f32.mrf.mxu0
    %v1910 = vpop.f32.mrf.mxu0
    %v1911 = vadd.f32 0.0, %v1910
    %v1912 = vpop.f32.mrf.mxu0
    %1913 = vdwg.mxu0
    %v1914 = vadd.f32 %v1831, %v1900
    %v1915 = vadd.f32 %v1834, %v1903
    %v1916 = vadd.f32 %v1839, %v1908
    %v1917 = vadd.f32 %v1842, %v1911
    %v1918 = vpack.c.bf16 %v1680, %v1677
    %v1919 = vpack.c.bf16 %v1688, %v1685
    %v1924 = vunpack.c.l.b16 %v1500
    %v1925 = vunpack.c.l.b16 %v1501
    %v1926 = vunpack.c.l.b16 %v1502
    %v1927 = vunpack.c.l.b16 %v1503
    %v1928 = vpack.c.b16 %v1925, %v1924
    %v1929 = vpack.c.b16 %v1927, %v1926
    %v1933 = vsel %vm1293, %v1918, 0
    %v1936 = vsel %vm1293, %v1919, 0
    %1938 = vmatprep.subr.bf16.mxu0 0
    %1939 = vmatpush1.bf16.msra.mxu0 0
    %1940 = vmatprep.subr.bf16.mxu0 0
    %1941 = vmatpush1.bf16.msra.mxu0 0
    %1942 = vmatprep.subr.bf16.mxu0 0
    %1943 = vmatpush1.bf16.msra.mxu0 0
    %1944 = vmatprep.subr.bf16.mxu0 0
    %1945 = vmatpush1.bf16.msra.mxu0 0
    %1946 = vmatprep.subr.bf16.mxu0 0
    %1947 = vmatpush1.bf16.msra.mxu0 0
    %1948 = vmatprep.subr.bf16.mxu0 0
    %1949 = vmatpush1.bf16.msra.mxu0 0
    %1950 = vmatprep.subr.bf16.mxu0 0
    %1951 = vmatpush1.bf16.msra.mxu0 %v1929
    %1952 = vmatprep.subr.bf16.mxu0 0
    %1953 = vmatpush1.bf16.msra.mxu0 %v1928
    %1954 = vmatprep.subr.bf16.mxu0 0
    %1955 = vmatpush2.bf16.msra.mxu0 0
    %1956 = vmatprep.subr.bf16.mxu0 0
    %1957 = vmatpush2.bf16.msra.mxu0 0
    %1958 = vmatprep.subr.bf16.mxu0 0
    %1959 = vmatpush2.bf16.msra.mxu0 0
    %1960 = vmatprep.subr.bf16.mxu0 0
    %1961 = vmatpush2.bf16.msra.mxu0 0
    %1962 = vmatprep.subr.bf16.mxu0 0
    %1963 = vmatpush2.bf16.msra.mxu0 0
    %1964 = vmatprep.subr.bf16.mxu0 0
    %1965 = vmatpush2.bf16.msra.mxu0 0
    %1966 = vmatprep.subr.bf16.mxu0 0
    %1967 = vmatpush2.bf16.msra.mxu0 0
    %1968 = vmatprep.subr.bf16.mxu0 0
    %1969 = vmatpush2.bf16.msra.mxu0 0
    %1970 = vmatprep.mubr.bf16.mxu0 0
    %1971 = vmatmul.mubr.bf16.gmra.mxu0 %v1933
    %v1972 = vpop.f32.mrf.mxu0
    %v1973 = vadd.f32 0.0, %v1972
    %v1974 = vpop.f32.mrf.mxu0
    %v1975 = vpop.f32.mrf.mxu0
    %v1976 = vadd.f32 0.0, %v1975
    %v1977 = vpop.f32.mrf.mxu0
    %1978 = vmatprep.mubr.bf16.mxu0 0
    %1979 = vmatmul.mubr.bf16.gmra.mxu0 %v1936
    %v1980 = vpop.f32.mrf.mxu0
    %v1981 = vadd.f32 0.0, %v1980
    %v1982 = vpop.f32.mrf.mxu0
    %v1983 = vpop.f32.mrf.mxu0
    %v1984 = vadd.f32 0.0, %v1983
    %v1985 = vpop.f32.mrf.mxu0
    %1986 = vdwg.mxu0
    %v1987 = vadd.f32 %v1914, %v1973
    %v1988 = vadd.f32 %v1915, %v1976
    %v1989 = vadd.f32 %v1916, %v1981
    %v1990 = vadd.f32 %v1917, %v1984
    %v1991 = vpack.c.bf16 %v1696, %v1693
    %v1992 = vpack.c.bf16 %v1704, %v1701
    %v1997 = vunpack.c.l.b16 %v1504
    %v1998 = vunpack.c.l.b16 %v1505
    %v1999 = vunpack.c.l.b16 %v1506
    %v2000 = vunpack.c.l.b16 %v1507
    %v2001 = vpack.c.b16 %v1998, %v1997
    %v2002 = vpack.c.b16 %v2000, %v1999
    %v2006 = vsel %vm1293, %v1991, 0
    %v2009 = vsel %vm1293, %v1992, 0
    %2011 = vmatprep.subr.bf16.mxu0 0
    %2012 = vmatpush1.bf16.msra.mxu0 0
    %2013 = vmatprep.subr.bf16.mxu0 0
    %2014 = vmatpush1.bf16.msra.mxu0 0
    %2015 = vmatprep.subr.bf16.mxu0 0
    %2016 = vmatpush1.bf16.msra.mxu0 0
    %2017 = vmatprep.subr.bf16.mxu0 0
    %2018 = vmatpush1.bf16.msra.mxu0 0
    %2019 = vmatprep.subr.bf16.mxu0 0
    %2020 = vmatpush1.bf16.msra.mxu0 0
    %2021 = vmatprep.subr.bf16.mxu0 0
    %2022 = vmatpush1.bf16.msra.mxu0 0
    %2023 = vmatprep.subr.bf16.mxu0 0
    %2024 = vmatpush1.bf16.msra.mxu0 %v2002
    %2025 = vmatprep.subr.bf16.mxu0 0
    %2026 = vmatpush1.bf16.msra.mxu0 %v2001
    %2027 = vmatprep.subr.bf16.mxu0 0
    %2028 = vmatpush2.bf16.msra.mxu0 0
    %2029 = vmatprep.subr.bf16.mxu0 0
    %2030 = vmatpush2.bf16.msra.mxu0 0
    %2031 = vmatprep.subr.bf16.mxu0 0
    %2032 = vmatpush2.bf16.msra.mxu0 0
    %2033 = vmatprep.subr.bf16.mxu0 0
    %2034 = vmatpush2.bf16.msra.mxu0 0
    %2035 = vmatprep.subr.bf16.mxu0 0
    %2036 = vmatpush2.bf16.msra.mxu0 0
    %2037 = vmatprep.subr.bf16.mxu0 0
    %2038 = vmatpush2.bf16.msra.mxu0 0
    %2039 = vmatprep.subr.bf16.mxu0 0
    %2040 = vmatpush2.bf16.msra.mxu0 0
    %2041 = vmatprep.subr.bf16.mxu0 0
    %2042 = vmatpush2.bf16.msra.mxu0 0
    %2043 = vmatprep.mubr.bf16.mxu0 0
    %2044 = vmatmul.mubr.bf16.gmra.mxu0 %v2006
    %v2045 = vpop.f32.mrf.mxu0
    %v2046 = vadd.f32 0.0, %v2045
    %v2047 = vpop.f32.mrf.mxu0
    %v2048 = vpop.f32.mrf.mxu0
    %v2049 = vadd.f32 0.0, %v2048
    %v2050 = vpop.f32.mrf.mxu0
    %2051 = vmatprep.mubr.bf16.mxu0 0
    %2052 = vmatmul.mubr.bf16.gmra.mxu0 %v2009
    %v2053 = vpop.f32.mrf.mxu0
    %v2054 = vadd.f32 0.0, %v2053
    %v2055 = vpop.f32.mrf.mxu0
    %v2056 = vpop.f32.mrf.mxu0
    %v2057 = vadd.f32 0.0, %v2056
    %v2058 = vpop.f32.mrf.mxu0
    %2059 = vdwg.mxu0
    %v2060 = vadd.f32 %v1987, %v2046
    %v2061 = vadd.f32 %v1988, %v2049
    %v2062 = vadd.f32 %v1989, %v2054
    %v2063 = vadd.f32 %v1990, %v2057
    %v2064 = vlaneseq
    %v2065 = vshrl.u32 %v2064, 7
    %v2066 = vsub.s32 0, %v2065
    %v2067 = vrot.slane %v1508, %v2066
    %v2068 = vmul.f32 %v2060, %v2067
    %v2069 = vmul.f32 %v2061, %v2067
    %v2070 = vmul.f32 %v2062, %v2067
    %v2071 = vmul.f32 %v2063, %v2067
    %v2072 = vlaneseq
    %v2073 = vshrl.u32 %v2072, 7
    %v2074 = vsub.s32 0, %v2073
    %v2075 = vrot.slane %v1509, %v2074
    %v2076 = vadd.f32 %v2068, %v2075
    %v2077 = vadd.f32 %v2069, %v2075
    %v2078 = vadd.f32 %v2070, %v2075
    %v2079 = vadd.f32 %v2071, %v2075
    %v2080 = vmax.f32 %v2076, 0.0
    %v2081 = vmax.f32 %v2077, 0.0
    %v2082 = vmax.f32 %v2078, 0.0
    %v2083 = vmax.f32 %v2079, 0.0
    %v2084 = vld [vmem:[#allocation2 + $0x1d8] sm:$0xf]
    %v2085 = vld [vmem:[#allocation2 + $0x1dc] sm:$0xf]
    %v2086 = vld [vmem:[#allocation2 + $0x1e0] sm:$0xf]
    %v2087 = vld [vmem:[#allocation2 + $0x1e4] sm:$0xf]
    %v2088 = vpack.c.bf16 %v2081, %v2080
    %v2089 = vpack.c.bf16 %v2083, %v2082
    %v2092 = vunpack.c.l.b16 %v2084
    %v2093 = vunpack.c.l.b16 %v2085
    %v2094 = vpack.c.b16 %v2093, %v2092
    %v2096 = vsel %vm1293, %v2094, 0
    %2098 = vmatprep.subr.bf16.mxu0 0
    %2099 = vmatpush1.bf16.msra.mxu0 0
    %2100 = vmatprep.subr.bf16.mxu0 0
    %2101 = vmatpush1.bf16.msra.mxu0 0
    %2102 = vmatprep.subr.bf16.mxu0 0
    %2103 = vmatpush1.bf16.msra.mxu0 0
    %2104 = vmatprep.subr.bf16.mxu0 0
    %2105 = vmatpush1.bf16.msra.mxu0 0
    %2106 = vmatprep.subr.bf16.mxu0 0
    %2107 = vmatpush1.bf16.msra.mxu0 0
    %2108 = vmatprep.subr.bf16.mxu0 0
    %2109 = vmatpush1.bf16.msra.mxu0 0
    %2110 = vmatprep.subr.bf16.mxu0 0
    %2111 = vmatpush1.bf16.msra.mxu0 %v2089
    %2112 = vmatprep.subr.bf16.mxu0 0
    %2113 = vmatpush1.bf16.msra.mxu0 %v2088
    %2114 = vmatprep.subr.bf16.mxu0 0
    %2115 = vmatpush2.bf16.msra.mxu0 0
    %2116 = vmatprep.subr.bf16.mxu0 0
    %2117 = vmatpush2.bf16.msra.mxu0 0
    %2118 = vmatprep.subr.bf16.mxu0 0
    %2119 = vmatpush2.bf16.msra.mxu0 0
    %2120 = vmatprep.subr.bf16.mxu0 0
    %2121 = vmatpush2.bf16.msra.mxu0 0
    %2122 = vmatprep.subr.bf16.mxu0 0
    %2123 = vmatpush2.bf16.msra.mxu0 0
    %2124 = vmatprep.subr.bf16.mxu0 0
    %2125 = vmatpush2.bf16.msra.mxu0 0
    %2126 = vmatprep.subr.bf16.mxu0 0
    %2127 = vmatpush2.bf16.msra.mxu0 0
    %2128 = vmatprep.subr.bf16.mxu0 0
    %2129 = vmatpush2.bf16.msra.mxu0 0
    %2130 = vmatprep.mubr.bf16.mxu0 0
    %2131 = vmatmul.mubr.bf16.gmra.mxu0 %v2096
    %v2132 = vpop.f32.mrf.mxu0
    %v2133 = vadd.f32 0.0, %v2132
    %v2134 = vpop.f32.mrf.mxu0
    %v2135 = vpop.f32.mrf.mxu0
    %v2136 = vadd.f32 0.0, %v2135
    %v2137 = vpop.f32.mrf.mxu0
    %2138 = vdwg.mxu0
    %v2141 = vunpack.c.l.b16 %v2086
    %v2142 = vunpack.c.l.b16 %v2087
    %v2143 = vpack.c.b16 %v2142, %v2141
    %v2145 = vsel %vm1293, %v2143, 0
    %2147 = vmatprep.subr.bf16.mxu0 0
    %2148 = vmatpush1.bf16.msra.mxu0 0
    %2149 = vmatprep.subr.bf16.mxu0 0
    %2150 = vmatpush1.bf16.msra.mxu0 0
    %2151 = vmatprep.subr.bf16.mxu0 0
    %2152 = vmatpush1.bf16.msra.mxu0 0
    %2153 = vmatprep.subr.bf16.mxu0 0
    %2154 = vmatpush1.bf16.msra.mxu0 0
    %2155 = vmatprep.subr.bf16.mxu0 0
    %2156 = vmatpush1.bf16.msra.mxu0 0
    %2157 = vmatprep.subr.bf16.mxu0 0
    %2158 = vmatpush1.bf16.msra.mxu0 0
    %2159 = vmatprep.subr.bf16.mxu0 0
    %2160 = vmatpush1.bf16.msra.mxu0 %v2089
    %2161 = vmatprep.subr.bf16.mxu0 0
    %2162 = vmatpush1.bf16.msra.mxu0 %v2088
    %2163 = vmatprep.subr.bf16.mxu0 0
    %2164 = vmatpush2.bf16.msra.mxu0 0
    %2165 = vmatprep.subr.bf16.mxu0 0
    %2166 = vmatpush2.bf16.msra.mxu0 0
    %2167 = vmatprep.subr.bf16.mxu0 0
    %2168 = vmatpush2.bf16.msra.mxu0 0
    %2169 = vmatprep.subr.bf16.mxu0 0
    %2170 = vmatpush2.bf16.msra.mxu0 0
    %2171 = vmatprep.subr.bf16.mxu0 0
    %2172 = vmatpush2.bf16.msra.mxu0 0
    %2173 = vmatprep.subr.bf16.mxu0 0
    %2174 = vmatpush2.bf16.msra.mxu0 0
    %2175 = vmatprep.subr.bf16.mxu0 0
    %2176 = vmatpush2.bf16.msra.mxu0 0
    %2177 = vmatprep.subr.bf16.mxu0 0
    %2178 = vmatpush2.bf16.msra.mxu0 0
    %2179 = vmatprep.mubr.bf16.mxu0 0
    %2180 = vmatmul.mubr.bf16.gmra.mxu0 %v2145
    %v2181 = vpop.f32.mrf.mxu0
    %v2182 = vadd.f32 0.0, %v2181
    %v2183 = vpop.f32.mrf.mxu0
    %v2184 = vpop.f32.mrf.mxu0
    %v2185 = vadd.f32 0.0, %v2184
    %v2186 = vpop.f32.mrf.mxu0
    %2187 = vdwg.mxu0
    %v2188 = vmax.f32 %v2133, %v2182
    %v2189 = vmax.f32 %v2136, %v2185
    %v2190 = vld [vmem:[#allocation2 + $0x1e8] sm:$0xf]
    %v2191 = vld [vmem:[#allocation2 + $0x1ec] sm:$0xf]
    %v2192 = vld [vmem:[#allocation2 + $0x1f0] sm:$0xf]
    %v2193 = vld [vmem:[#allocation2 + $0x1f4] sm:$0xf]
    %v2194 = vld [vmem:[#allocation2 + $0x1f8] sm:$0x1]
    %v2195 = vld [vmem:[#allocation2 + $0x28] sm:$0x1]
    %v2196 = vld [vmem:[#allocation2 + $0x30] sm:$0xf]
    %v2197 = vld [vmem:[#allocation2 + $0x34] sm:$0xf]
    %v2198 = vpack.c.bf16 %v2189, %v2188
    %v2200 = vsel %vm119, %v2195, 0
    %2202 = vmatprep.subr.bf16.mxu0 0
    %2203 = vmatpush1.bf16.msra.mxu0 0
    %2204 = vmatprep.subr.bf16.mxu0 0
    %2205 = vmatpush1.bf16.msra.mxu0 0
    %2206 = vmatprep.subr.bf16.mxu0 0
    %2207 = vmatpush1.bf16.msra.mxu0 0
    %2208 = vmatprep.subr.bf16.mxu0 0
    %2209 = vmatpush1.bf16.msra.mxu0 0
    %2210 = vmatprep.subr.bf16.mxu0 0
    %2211 = vmatpush1.bf16.msra.mxu0 0
    %2212 = vmatprep.subr.bf16.mxu0 0
    %2213 = vmatpush1.bf16.msra.mxu0 0
    %2214 = vmatprep.subr.bf16.mxu0 0
    %2215 = vmatpush1.bf16.msra.mxu0 0
    %2216 = vmatprep.subr.bf16.mxu0 0
    %2217 = vmatpush1.bf16.msra.mxu0 %v2198
    %2218 = vmatprep.subr.bf16.mxu0 0
    %2219 = vmatpush2.bf16.msra.mxu0 0
    %2220 = vmatprep.subr.bf16.mxu0 0
    %2221 = vmatpush2.bf16.msra.mxu0 0
    %2222 = vmatprep.subr.bf16.mxu0 0
    %2223 = vmatpush2.bf16.msra.mxu0 0
    %2224 = vmatprep.subr.bf16.mxu0 0
    %2225 = vmatpush2.bf16.msra.mxu0 0
    %2226 = vmatprep.subr.bf16.mxu0 0
    %2227 = vmatpush2.bf16.msra.mxu0 0
    %2228 = vmatprep.subr.bf16.mxu0 0
    %2229 = vmatpush2.bf16.msra.mxu0 0
    %2230 = vmatprep.subr.bf16.mxu0 0
    %2231 = vmatpush2.bf16.msra.mxu0 0
    %2232 = vmatprep.subr.bf16.mxu0 0
    %2233 = vmatpush2.bf16.msra.mxu0 0
    %2234 = vmatprep.mubr.bf16.mxu0 0
    %2235 = vmatmul.mubr.bf16.gmra.mxu0 %v2200
    %v2236 = vpop.f32.mrf.mxu0
    %v2237 = vadd.f32 0.0, %v2236
    %v2238 = vpop.f32.mrf.mxu0
    %v2239 = vpop.f32.mrf.mxu0
    %v2240 = vpop.f32.mrf.mxu0
    %2241 = vdwg.mxu0
    %v2242 = vpack.c.bf16 %v2237, %v2237
    %v2247 = vunpack.c.l.b16 %v2190
    %v2248 = vunpack.c.l.b16 %v2191
    %v2249 = vunpack.c.l.b16 %v2192
    %v2250 = vunpack.c.l.b16 %v2193
    %v2251 = vpack.c.b16 %v2248, %v2247
    %v2252 = vpack.c.b16 %v2250, %v2249
    %v2256 = vsel %vm1293, %v2242, 0
    %2258 = vmatprep.subr.bf16.mxu0 0
    %2259 = vmatpush1.bf16.msra.mxu0 0
    %2260 = vmatprep.subr.bf16.mxu0 0
    %2261 = vmatpush1.bf16.msra.mxu0 0
    %2262 = vmatprep.subr.bf16.mxu0 0
    %2263 = vmatpush1.bf16.msra.mxu0 0
    %2264 = vmatprep.subr.bf16.mxu0 0
    %2265 = vmatpush1.bf16.msra.mxu0 0
    %2266 = vmatprep.subr.bf16.mxu0 0
    %2267 = vmatpush1.bf16.msra.mxu0 0
    %2268 = vmatprep.subr.bf16.mxu0 0
    %2269 = vmatpush1.bf16.msra.mxu0 0
    %2270 = vmatprep.subr.bf16.mxu0 0
    %2271 = vmatpush1.bf16.msra.mxu0 %v2252
    %2272 = vmatprep.subr.bf16.mxu0 0
    %2273 = vmatpush1.bf16.msra.mxu0 %v2251
    %2274 = vmatprep.subr.bf16.mxu0 0
    %2275 = vmatpush2.bf16.msra.mxu0 0
    %2276 = vmatprep.subr.bf16.mxu0 0
    %2277 = vmatpush2.bf16.msra.mxu0 0
    %2278 = vmatprep.subr.bf16.mxu0 0
    %2279 = vmatpush2.bf16.msra.mxu0 0
    %2280 = vmatprep.subr.bf16.mxu0 0
    %2281 = vmatpush2.bf16.msra.mxu0 0
    %2282 = vmatprep.subr.bf16.mxu0 0
    %2283 = vmatpush2.bf16.msra.mxu0 0
    %2284 = vmatprep.subr.bf16.mxu0 0
    %2285 = vmatpush2.bf16.msra.mxu0 0
    %2286 = vmatprep.subr.bf16.mxu0 0
    %2287 = vmatpush2.bf16.msra.mxu0 0
    %2288 = vmatprep.subr.bf16.mxu0 0
    %2289 = vmatpush2.bf16.msra.mxu0 0
    %2290 = vmatprep.mubr.bf16.mxu0 0
    %2291 = vmatmul.mubr.bf16.gmra.mxu0 %v2256
    %v2292 = vpop.f32.mrf.mxu0
    %v2293 = vadd.f32 0.0, %v2292
    %v2294 = vpop.f32.mrf.mxu0
    %v2295 = vpop.f32.mrf.mxu0
    %v2296 = vpop.f32.mrf.mxu0
    %2297 = vdwg.mxu0
    %v2298 = vmax.f32 %v2293, 0.0
    %v2299 = vpack.c.bf16 %v2298, %v2298
    %v2301 = vsel %vm242, %v2299, 0
    %v2304 = vsel %vm169, %v2194, 0
    %2306 = vmatprep.subr.bf16.mxu0 0
    %2307 = vmatpush1.bf16.msra.mxu0 0
    %2308 = vmatprep.subr.bf16.mxu0 0
    %2309 = vmatpush1.bf16.msra.mxu0 0
    %2310 = vmatprep.subr.bf16.mxu0 0
    %2311 = vmatpush1.bf16.msra.mxu0 0
    %2312 = vmatprep.subr.bf16.mxu0 0
    %2313 = vmatpush1.bf16.msra.mxu0 0
    %2314 = vmatprep.subr.bf16.mxu0 0
    %2315 = vmatpush1.bf16.msra.mxu0 0
    %2316 = vmatprep.subr.bf16.mxu0 0
    %2317 = vmatpush1.bf16.msra.mxu0 0
    %2318 = vmatprep.subr.bf16.mxu0 0
    %2319 = vmatpush1.bf16.msra.mxu0 0
    %2320 = vmatprep.subr.bf16.mxu0 0
    %2321 = vmatpush1.bf16.msra.mxu0 %v2304
    %2322 = vmatprep.subr.bf16.mxu0 0
    %2323 = vmatpush2.bf16.msra.mxu0 0
    %2324 = vmatprep.subr.bf16.mxu0 0
    %2325 = vmatpush2.bf16.msra.mxu0 0
    %2326 = vmatprep.subr.bf16.mxu0 0
    %2327 = vmatpush2.bf16.msra.mxu0 0
    %2328 = vmatprep.subr.bf16.mxu0 0
    %2329 = vmatpush2.bf16.msra.mxu0 0
    %2330 = vmatprep.subr.bf16.mxu0 0
    %2331 = vmatpush2.bf16.msra.mxu0 0
    %2332 = vmatprep.subr.bf16.mxu0 0
    %2333 = vmatpush2.bf16.msra.mxu0 0
    %2334 = vmatprep.subr.bf16.mxu0 0
    %2335 = vmatpush2.bf16.msra.mxu0 0
    %2336 = vmatprep.subr.bf16.mxu0 0
    %2337 = vmatpush2.bf16.msra.mxu0 0
    %2338 = vmatprep.mubr.bf16.mxu0 0
    %2339 = vmatmul.mubr.bf16.gmra.mxu0 %v2301
    %v2340 = vpop.f32.mrf.mxu0
    %v2341 = vadd.f32 0.0, %v2340
    %v2342 = vpop.f32.mrf.mxu0
    %v2343 = vpop.f32.mrf.mxu0
    %v2344 = vpop.f32.mrf.mxu0
    %2345 = vdwg.mxu0
    %v2346 = vxor.u32 %v2341, 2147483648
    %v2347 = vmul.f32 %v2346, 1.442695
    %v2348 = vpow.pop %v2347
    %v2349 = vadd.f32 %v2348, 1.0
    %v2350 = vrcp.pop %v2349
    %v2351 = vmul.f32 1.0, %v2350
    %v2352 = vpack.c.bf16 %v2351, %v2351
    %v2355 = vunpack.c.l.b16 %v2196
    %v2356 = vunpack.c.l.b16 %v2197
    %v2357 = vpack.c.b16 %v2356, %v2355
    %v2359 = vsel %vm242, %v2357, 0
    %v2362 = vsel %vm169, %v2352, 0
    %2364 = vmatprep.subr.bf16.mxu0 0
    %2365 = vmatpush1.bf16.msra.mxu0 0
    %2366 = vmatprep.subr.bf16.mxu0 0
    %2367 = vmatpush1.bf16.msra.mxu0 0
    %2368 = vmatprep.subr.bf16.mxu0 0
    %2369 = vmatpush1.bf16.msra.mxu0 0
    %2370 = vmatprep.subr.bf16.mxu0 0
    %2371 = vmatpush1.bf16.msra.mxu0 0
    %2372 = vmatprep.subr.bf16.mxu0 0
    %2373 = vmatpush1.bf16.msra.mxu0 0
    %2374 = vmatprep.subr.bf16.mxu0 0
    %2375 = vmatpush1.bf16.msra.mxu0 0
    %2376 = vmatprep.subr.bf16.mxu0 0
    %2377 = vmatpush1.bf16.msra.mxu0 0
    %2378 = vmatprep.subr.bf16.mxu0 0
    %2379 = vmatpush1.bf16.msra.mxu0 %v2362
    %2380 = vmatprep.subr.bf16.mxu0 0
    %2381 = vmatpush2.bf16.msra.mxu0 0
    %2382 = vmatprep.subr.bf16.mxu0 0
    %2383 = vmatpush2.bf16.msra.mxu0 0
    %2384 = vmatprep.subr.bf16.mxu0 0
    %2385 = vmatpush2.bf16.msra.mxu0 0
    %2386 = vmatprep.subr.bf16.mxu0 0
    %2387 = vmatpush2.bf16.msra.mxu0 0
    %2388 = vmatprep.subr.bf16.mxu0 0
    %2389 = vmatpush2.bf16.msra.mxu0 0
    %2390 = vmatprep.subr.bf16.mxu0 0
    %2391 = vmatpush2.bf16.msra.mxu0 0
    %2392 = vmatprep.subr.bf16.mxu0 0
    %2393 = vmatpush2.bf16.msra.mxu0 0
    %2394 = vmatprep.subr.bf16.mxu0 0
    %2395 = vmatpush2.bf16.msra.mxu0 0
    %2396 = vmatprep.mubr.bf16.mxu0 0
    %2397 = vmatmul.mubr.bf16.gmra.mxu0 %v2359
    %v2398 = vpop.f32.mrf.mxu0
    %v2399 = vadd.f32 0.0, %v2398
    %v2400 = vpop.f32.mrf.mxu0
    %v2401 = vpop.f32.mrf.mxu0
    %v2402 = vadd.f32 0.0, %v2401
    %v2403 = vpop.f32.mrf.mxu0
    %2404 = vdwg.mxu0
    %v2405 = vmul.f32 %v2188, %v2399
    %v2406 = vmul.f32 %v2189, %v2402
    %v2407 = vld [vmem:[#allocation2 + $0x200] sm:$0xf]
    %v2408 = vld [vmem:[#allocation2 + $0x204] sm:$0xf]
    %v2409 = vld [vmem:[#allocation2 + $0x208] sm:$0xf]
    %v2410 = vld [vmem:[#allocation2 + $0x210] sm:$0xf]
    %v2411 = vld [vmem:[#allocation2 + $0x214] sm:$0xf]
    %v2412 = vld [vmem:[#allocation2 + $0x218] sm:$0xf]
    %v2413 = vld [vmem:[#allocation2 + $0x21c] sm:$0xf]
    %v2414 = vld [vmem:[#allocation2 + $0x220] sm:$0xf]
    %v2415 = vld [vmem:[#allocation2 + $0x224] sm:$0xf]
    %v2416 = vld [vmem:[#allocation2 + $0x228] sm:$0xf]
    %v2417 = vld [vmem:[#allocation2 + $0x22c] sm:$0xf]
    %v2418 = vld [vmem:[#allocation2 + $0x230] sm:$0xf]
    %v2419 = vld [vmem:[#allocation2 + $0x234] sm:$0xf]
    %v2420 = vld [vmem:[#allocation2 + $0x238] sm:$0xf]
    %v2421 = vld [vmem:[#allocation2 + $0x23c] sm:$0xf]
    %v2422 = vld [vmem:[#allocation4 + $0x20] sm:$0x1]
    %v2423 = vld [vmem:[#allocation4 + $0x28] sm:$0x1]
    %v2424 = vpack.c.bf16 %v2406, %v2405
    %v2428 = vunpack.c.l.b16 %v2407
    %v2429 = vunpack.c.l.b16 %v2408
    %v2430 = vunpack.c.l.b16 %v2409
    %v2431 = vpack.c.b16 %v2429, %v2428
    %v2432 = vpack.c.b16 %v2430, %v2430
    %v2434 = vsel %vm119, %v2431, 0
    %v2437 = vsel %vm119, %v2432, 0
    %2439 = vmatprep.subr.bf16.mxu0 0
    %2440 = vmatpush1.bf16.msra.mxu0 0
    %2441 = vmatprep.subr.bf16.mxu0 0
    %2442 = vmatpush1.bf16.msra.mxu0 0
    %2443 = vmatprep.subr.bf16.mxu0 0
    %2444 = vmatpush1.bf16.msra.mxu0 0
    %2445 = vmatprep.subr.bf16.mxu0 0
    %2446 = vmatpush1.bf16.msra.mxu0 0
    %2447 = vmatprep.subr.bf16.mxu0 0
    %2448 = vmatpush1.bf16.msra.mxu0 0
    %2449 = vmatprep.subr.bf16.mxu0 0
    %2450 = vmatpush1.bf16.msra.mxu0 0
    %2451 = vmatprep.subr.bf16.mxu0 0
    %2452 = vmatpush1.bf16.msra.mxu0 0
    %2453 = vmatprep.subr.bf16.mxu0 0
    %2454 = vmatpush1.bf16.msra.mxu0 %v2424
    %2455 = vmatprep.subr.bf16.mxu0 0
    %2456 = vmatpush2.bf16.msra.mxu0 0
    %2457 = vmatprep.subr.bf16.mxu0 0
    %2458 = vmatpush2.bf16.msra.mxu0 0
    %2459 = vmatprep.subr.bf16.mxu0 0
    %2460 = vmatpush2.bf16.msra.mxu0 0
    %2461 = vmatprep.subr.bf16.mxu0 0
    %2462 = vmatpush2.bf16.msra.mxu0 0
    %2463 = vmatprep.subr.bf16.mxu0 0
    %2464 = vmatpush2.bf16.msra.mxu0 0
    %2465 = vmatprep.subr.bf16.mxu0 0
    %2466 = vmatpush2.bf16.msra.mxu0 0
    %2467 = vmatprep.subr.bf16.mxu0 0
    %2468 = vmatpush2.bf16.msra.mxu0 0
    %2469 = vmatprep.subr.bf16.mxu0 0
    %2470 = vmatpush2.bf16.msra.mxu0 0
    %2471 = vmatprep.mubr.bf16.mxu0 0
    %2472 = vmatmul.mubr.bf16.gmra.mxu0 %v2434
    %v2473 = vpop.f32.mrf.mxu0
    %v2474 = vadd.f32 0.0, %v2473
    %v2475 = vpop.f32.mrf.mxu0
    %v2476 = vpop.f32.mrf.mxu0
    %v2477 = vadd.f32 0.0, %v2476
    %v2478 = vpop.f32.mrf.mxu0
    %2479 = vmatprep.mubr.bf16.mxu0 0
    %2480 = vmatmul.mubr.bf16.gmra.mxu0 %v2437
    %v2481 = vpop.f32.mrf.mxu0
    %v2482 = vadd.f32 0.0, %v2481
    %v2483 = vpop.f32.mrf.mxu0
    %v2484 = vpop.f32.mrf.mxu0
    %v2485 = vpop.f32.mrf.mxu0
    %2486 = vdwg.mxu0
    %v2487 = vpack.c.bf16 %v2474, %v2474
    %v2488 = vpack.c.bf16 %v2477, %v2477
    %v2493 = vunpack.c.l.b16 %v2414
    %v2494 = vunpack.c.l.b16 %v2415
    %v2495 = vunpack.c.l.b16 %v2416
    %v2496 = vunpack.c.l.b16 %v2417
    %v2497 = vpack.c.b16 %v2494, %v2493
    %v2498 = vpack.c.b16 %v2496, %v2495
    %v2502 = vsel %vm1293, %v2488, 0
    %2504 = vmatprep.subr.bf16.mxu0 0
    %2505 = vmatpush1.bf16.msra.mxu0 0
    %2506 = vmatprep.subr.bf16.mxu0 0
    %2507 = vmatpush1.bf16.msra.mxu0 0
    %2508 = vmatprep.subr.bf16.mxu0 0
    %2509 = vmatpush1.bf16.msra.mxu0 0
    %2510 = vmatprep.subr.bf16.mxu0 0
    %2511 = vmatpush1.bf16.msra.mxu0 0
    %2512 = vmatprep.subr.bf16.mxu0 0
    %2513 = vmatpush1.bf16.msra.mxu0 0
    %2514 = vmatprep.subr.bf16.mxu0 0
    %2515 = vmatpush1.bf16.msra.mxu0 0
    %2516 = vmatprep.subr.bf16.mxu0 0
    %2517 = vmatpush1.bf16.msra.mxu0 %v2498
    %2518 = vmatprep.subr.bf16.mxu0 0
    %2519 = vmatpush1.bf16.msra.mxu0 %v2497
    %2520 = vmatprep.subr.bf16.mxu0 0
    %2521 = vmatpush2.bf16.msra.mxu0 0
    %2522 = vmatprep.subr.bf16.mxu0 0
    %2523 = vmatpush2.bf16.msra.mxu0 0
    %2524 = vmatprep.subr.bf16.mxu0 0
    %2525 = vmatpush2.bf16.msra.mxu0 0
    %2526 = vmatprep.subr.bf16.mxu0 0
    %2527 = vmatpush2.bf16.msra.mxu0 0
    %2528 = vmatprep.subr.bf16.mxu0 0
    %2529 = vmatpush2.bf16.msra.mxu0 0
    %2530 = vmatprep.subr.bf16.mxu0 0
    %2531 = vmatpush2.bf16.msra.mxu0 0
    %2532 = vmatprep.subr.bf16.mxu0 0
    %2533 = vmatpush2.bf16.msra.mxu0 0
    %2534 = vmatprep.subr.bf16.mxu0 0
    %2535 = vmatpush2.bf16.msra.mxu0 0
    %2536 = vmatprep.mubr.bf16.mxu0 0
    %2537 = vmatmul.mubr.bf16.gmra.mxu0 %v2502
    %v2538 = vpop.f32.mrf.mxu0
    %v2539 = vadd.f32 0.0, %v2538
    %v2540 = vpop.f32.mrf.mxu0
    %v2541 = vpop.f32.mrf.mxu0
    %v2542 = vpop.f32.mrf.mxu0
    %2543 = vdwg.mxu0
    %v2548 = vunpack.c.l.b16 %v2410
    %v2549 = vunpack.c.l.b16 %v2411
    %v2550 = vunpack.c.l.b16 %v2412
    %v2551 = vunpack.c.l.b16 %v2413
    %v2552 = vpack.c.b16 %v2549, %v2548
    %v2553 = vpack.c.b16 %v2551, %v2550
    %v2557 = vsel %vm1293, %v2487, 0
    %2559 = vmatprep.subr.bf16.mxu0 0
    %2560 = vmatpush1.bf16.msra.mxu0 0
    %2561 = vmatprep.subr.bf16.mxu0 0
    %2562 = vmatpush1.bf16.msra.mxu0 0
    %2563 = vmatprep.subr.bf16.mxu0 0
    %2564 = vmatpush1.bf16.msra.mxu0 0
    %2565 = vmatprep.subr.bf16.mxu0 0
    %2566 = vmatpush1.bf16.msra.mxu0 0
    %2567 = vmatprep.subr.bf16.mxu0 0
    %2568 = vmatpush1.bf16.msra.mxu0 0
    %2569 = vmatprep.subr.bf16.mxu0 0
    %2570 = vmatpush1.bf16.msra.mxu0 0
    %2571 = vmatprep.subr.bf16.mxu0 0
    %2572 = vmatpush1.bf16.msra.mxu0 %v2553
    %2573 = vmatprep.subr.bf16.mxu0 0
    %2574 = vmatpush1.bf16.msra.mxu0 %v2552
    %2575 = vmatprep.subr.bf16.mxu0 0
    %2576 = vmatpush2.bf16.msra.mxu0 0
    %2577 = vmatprep.subr.bf16.mxu0 0
    %2578 = vmatpush2.bf16.msra.mxu0 0
    %2579 = vmatprep.subr.bf16.mxu0 0
    %2580 = vmatpush2.bf16.msra.mxu0 0
    %2581 = vmatprep.subr.bf16.mxu0 0
    %2582 = vmatpush2.bf16.msra.mxu0 0
    %2583 = vmatprep.subr.bf16.mxu0 0
    %2584 = vmatpush2.bf16.msra.mxu0 0
    %2585 = vmatprep.subr.bf16.mxu0 0
    %2586 = vmatpush2.bf16.msra.mxu0 0
    %2587 = vmatprep.subr.bf16.mxu0 0
    %2588 = vmatpush2.bf16.msra.mxu0 0
    %2589 = vmatprep.subr.bf16.mxu0 0
    %2590 = vmatpush2.bf16.msra.mxu0 0
    %2591 = vmatprep.mubr.bf16.mxu0 0
    %2592 = vmatmul.mubr.bf16.gmra.mxu0 %v2557
    %v2593 = vpop.f32.mrf.mxu0
    %v2594 = vadd.f32 %v2539, %v2593
    %v2595 = vpop.f32.mrf.mxu0
    %v2596 = vpop.f32.mrf.mxu0
    %v2597 = vpop.f32.mrf.mxu0
    %2598 = vdwg.mxu0
    %v2599 = vpack.c.bf16 %v2482, %v2482
    %v2604 = vunpack.c.l.b16 %v2418
    %v2605 = vunpack.c.l.b16 %v2419
    %v2606 = vunpack.c.l.b16 %v2420
    %v2607 = vunpack.c.l.b16 %v2421
    %v2608 = vpack.c.b16 %v2605, %v2604
    %v2609 = vpack.c.b16 %v2607, %v2606
    %v2613 = vsel %vm1293, %v2599, 0
    %2615 = vmatprep.subr.bf16.mxu0 0
    %2616 = vmatpush1.bf16.msra.mxu0 0
    %2617 = vmatprep.subr.bf16.mxu0 0
    %2618 = vmatpush1.bf16.msra.mxu0 0
    %2619 = vmatprep.subr.bf16.mxu0 0
    %2620 = vmatpush1.bf16.msra.mxu0 0
    %2621 = vmatprep.subr.bf16.mxu0 0
    %2622 = vmatpush1.bf16.msra.mxu0 0
    %2623 = vmatprep.subr.bf16.mxu0 0
    %2624 = vmatpush1.bf16.msra.mxu0 0
    %2625 = vmatprep.subr.bf16.mxu0 0
    %2626 = vmatpush1.bf16.msra.mxu0 0
    %2627 = vmatprep.subr.bf16.mxu0 0
    %2628 = vmatpush1.bf16.msra.mxu0 %v2609
    %2629 = vmatprep.subr.bf16.mxu0 0
    %2630 = vmatpush1.bf16.msra.mxu0 %v2608
    %2631 = vmatprep.subr.bf16.mxu0 0
    %2632 = vmatpush2.bf16.msra.mxu0 0
    %2633 = vmatprep.subr.bf16.mxu0 0
    %2634 = vmatpush2.bf16.msra.mxu0 0
    %2635 = vmatprep.subr.bf16.mxu0 0
    %2636 = vmatpush2.bf16.msra.mxu0 0
    %2637 = vmatprep.subr.bf16.mxu0 0
    %2638 = vmatpush2.bf16.msra.mxu0 0
    %2639 = vmatprep.subr.bf16.mxu0 0
    %2640 = vmatpush2.bf16.msra.mxu0 0
    %2641 = vmatprep.subr.bf16.mxu0 0
    %2642 = vmatpush2.bf16.msra.mxu0 0
    %2643 = vmatprep.subr.bf16.mxu0 0
    %2644 = vmatpush2.bf16.msra.mxu0 0
    %2645 = vmatprep.subr.bf16.mxu0 0
    %2646 = vmatpush2.bf16.msra.mxu0 0
    %2647 = vmatprep.mubr.bf16.mxu0 0
    %2648 = vmatmul.mubr.bf16.gmra.mxu0 %v2613
    %v2649 = vpop.f32.mrf.mxu0
    %v2650 = vadd.f32 0.0, %v2649
    %v2651 = vpop.f32.mrf.mxu0
    %v2652 = vpop.f32.mrf.mxu0
    %v2653 = vpop.f32.mrf.mxu0
    %2654 = vdwg.mxu0
    %v2655 = vadd.f32 %v2594, %v2650
    %v2656 = vlaneseq
    %v2657 = vshrl.u32 %v2656, 7
    %v2658 = vsub.s32 0, %v2657
    %v2659 = vrot.slane %v2422, %v2658
    %v2660 = vmul.f32 %v2655, %v2659
    %v2661 = vlaneseq
    %v2662 = vshrl.u32 %v2661, 7
    %v2663 = vsub.s32 0, %v2662
    %v2664 = vrot.slane %v2423, %v2663
    %v2665 = vadd.f32 %v2660, %v2664
    %v2666 = vmax.f32 %v2665, 0.0
    %v2667 = vld [vmem:[#allocation2 + $0x240] sm:$0x3]
    %v2668 = vld [vmem:[#allocation2 + $0x248] sm:$0x3]
    %v2669 = vpack.c.bf16 %v2666, %v2666
    %vm2670 = vcmask 64512
    %v2672 = vsel %vm2670, %v2667, 0
    %vm2674 = vcmask 1043456
    %v2676 = vsel %vm2674, %v2669, 0
    %2678 = vmatprep.subr.bf16.mxu0 0
    %2679 = vmatpush1.bf16.msra.mxu0 0
    %2680 = vmatprep.subr.bf16.mxu0 0
    %2681 = vmatpush1.bf16.msra.mxu0 0
    %2682 = vmatprep.subr.bf16.mxu0 0
    %2683 = vmatpush1.bf16.msra.mxu0 0
    %2684 = vmatprep.subr.bf16.mxu0 0
    %2685 = vmatpush1.bf16.msra.mxu0 0
    %2686 = vmatprep.subr.bf16.mxu0 0
    %2687 = vmatpush1.bf16.msra.mxu0 0
    %2688 = vmatprep.subr.bf16.mxu0 0
    %2689 = vmatpush1.bf16.msra.mxu0 0
    %2690 = vmatprep.subr.bf16.mxu0 0
    %2691 = vmatpush1.bf16.msra.mxu0 0
    %2692 = vmatprep.subr.bf16.mxu0 0
    %2693 = vmatpush1.bf16.msra.mxu0 %v2676
    %2694 = vmatprep.subr.bf16.mxu0 0
    %2695 = vmatpush2.bf16.msra.mxu0 0
    %2696 = vmatprep.subr.bf16.mxu0 0
    %2697 = vmatpush2.bf16.msra.mxu0 0
    %2698 = vmatprep.subr.bf16.mxu0 0
    %2699 = vmatpush2.bf16.msra.mxu0 0
    %2700 = vmatprep.subr.bf16.mxu0 0
    %2701 = vmatpush2.bf16.msra.mxu0 0
    %2702 = vmatprep.subr.bf16.mxu0 0
    %2703 = vmatpush2.bf16.msra.mxu0 0
    %2704 = vmatprep.subr.bf16.mxu0 0
    %2705 = vmatpush2.bf16.msra.mxu0 0
    %2706 = vmatprep.subr.bf16.mxu0 0
    %2707 = vmatpush2.bf16.msra.mxu0 0
    %2708 = vmatprep.subr.bf16.mxu0 0
    %2709 = vmatpush2.bf16.msra.mxu0 0
    %2710 = vmatprep.mubr.bf16.mxu0 0
    %2711 = vmatmul.mubr.bf16.gmra.mxu0 %v2672
    %v2712 = vpop.f32.mrf.mxu0
    %v2713 = vadd.f32 0.0, %v2712
    %v2714 = vpop.f32.mrf.mxu0
    %v2715 = vpop.f32.mrf.mxu0
    %v2716 = vpop.f32.mrf.mxu0
    %2717 = vdwg.mxu0
    %v2719 = vsel %vm2670, %v2668, 0
    %2721 = vmatprep.subr.bf16.mxu0 0
    %2722 = vmatpush1.bf16.msra.mxu0 0
    %2723 = vmatprep.subr.bf16.mxu0 0
    %2724 = vmatpush1.bf16.msra.mxu0 0
    %2725 = vmatprep.subr.bf16.mxu0 0
    %2726 = vmatpush1.bf16.msra.mxu0 0
    %2727 = vmatprep.subr.bf16.mxu0 0
    %2728 = vmatpush1.bf16.msra.mxu0 0
    %2729 = vmatprep.subr.bf16.mxu0 0
    %2730 = vmatpush1.bf16.msra.mxu0 0
    %2731 = vmatprep.subr.bf16.mxu0 0
    %2732 = vmatpush1.bf16.msra.mxu0 0
    %2733 = vmatprep.subr.bf16.mxu0 0
    %2734 = vmatpush1.bf16.msra.mxu0 0
    %2735 = vmatprep.subr.bf16.mxu0 0
    %2736 = vmatpush1.bf16.msra.mxu0 %v2676
    %2737 = vmatprep.subr.bf16.mxu0 0
    %2738 = vmatpush2.bf16.msra.mxu0 0
    %2739 = vmatprep.subr.bf16.mxu0 0
    %2740 = vmatpush2.bf16.msra.mxu0 0
    %2741 = vmatprep.subr.bf16.mxu0 0
    %2742 = vmatpush2.bf16.msra.mxu0 0
    %2743 = vmatprep.subr.bf16.mxu0 0
    %2744 = vmatpush2.bf16.msra.mxu0 0
    %2745 = vmatprep.subr.bf16.mxu0 0
    %2746 = vmatpush2.bf16.msra.mxu0 0
    %2747 = vmatprep.subr.bf16.mxu0 0
    %2748 = vmatpush2.bf16.msra.mxu0 0
    %2749 = vmatprep.subr.bf16.mxu0 0
    %2750 = vmatpush2.bf16.msra.mxu0 0
    %2751 = vmatprep.subr.bf16.mxu0 0
    %2752 = vmatpush2.bf16.msra.mxu0 0
    %2753 = vmatprep.mubr.bf16.mxu0 0
    %2754 = vmatmul.mubr.bf16.gmra.mxu0 %v2719
    %v2755 = vpop.f32.mrf.mxu0
    %v2756 = vadd.f32 0.0, %v2755
    %v2757 = vpop.f32.mrf.mxu0
    %v2758 = vpop.f32.mrf.mxu0
    %v2759 = vpop.f32.mrf.mxu0
    %2760 = vdwg.mxu0
    %v2761 = vmax.f32 %v2713, %v2756
    %v2762 = vld [vmem:[#allocation2 + $0x250] sm:$0xf]
    %v2763 = vld [vmem:[#allocation2 + $0x254] sm:$0xf]
    %v2764 = vld [vmem:[#allocation2 + $0x258] sm:$0xf]
    %v2765 = vld [vmem:[#allocation2 + $0x25c] sm:$0xf]
    %v2766 = vld [vmem:[#allocation2 + $0x260] sm:$0xf]
    %v2767 = vld [vmem:[#allocation2 + $0x264] sm:$0xf]
    %v2768 = vld [vmem:[#allocation2 + $0x268] sm:$0xf]
    %v2769 = vld [vmem:[#allocation2 + $0x26c] sm:$0xf]
    %v2770 = vld [vmem:[#allocation2 + $0x270] sm:$0x3]
    %v2771 = vld [vmem:[#allocation2 + $0x40] sm:$0x3]
    %v2772 = vpack.c.bf16 %v2761, %v2761
    %vm2773 = vcmask 31744
    %v2775 = vsel %vm2773, %v52, 0
    %vm2777 = vcmask 1041408
    %v2779 = vsel %vm2777, %v2772, 0
    %2781 = vmatprep.subr.bf16.mxu0 0
    %2782 = vmatpush1.bf16.msra.mxu0 0
    %2783 = vmatprep.subr.bf16.mxu0 0
    %2784 = vmatpush1.bf16.msra.mxu0 0
    %2785 = vmatprep.subr.bf16.mxu0 0
    %2786 = vmatpush1.bf16.msra.mxu0 0
    %2787 = vmatprep.subr.bf16.mxu0 0
    %2788 = vmatpush1.bf16.msra.mxu0 0
    %2789 = vmatprep.subr.bf16.mxu0 0
    %2790 = vmatpush1.bf16.msra.mxu0 0
    %2791 = vmatprep.subr.bf16.mxu0 0
    %2792 = vmatpush1.bf16.msra.mxu0 0
    %2793 = vmatprep.subr.bf16.mxu0 0
    %2794 = vmatpush1.bf16.msra.mxu0 0
    %2795 = vmatprep.subr.bf16.mxu0 0
    %2796 = vmatpush1.bf16.msra.mxu0 %v2779
    %2797 = vmatprep.subr.bf16.mxu0 0
    %2798 = vmatpush2.bf16.msra.mxu0 0
    %2799 = vmatprep.subr.bf16.mxu0 0
    %2800 = vmatpush2.bf16.msra.mxu0 0
    %2801 = vmatprep.subr.bf16.mxu0 0
    %2802 = vmatpush2.bf16.msra.mxu0 0
    %2803 = vmatprep.subr.bf16.mxu0 0
    %2804 = vmatpush2.bf16.msra.mxu0 0
    %2805 = vmatprep.subr.bf16.mxu0 0
    %2806 = vmatpush2.bf16.msra.mxu0 0
    %2807 = vmatprep.subr.bf16.mxu0 0
    %2808 = vmatpush2.bf16.msra.mxu0 0
    %2809 = vmatprep.subr.bf16.mxu0 0
    %2810 = vmatpush2.bf16.msra.mxu0 0
    %2811 = vmatprep.subr.bf16.mxu0 0
    %2812 = vmatpush2.bf16.msra.mxu0 0
    %2813 = vmatprep.mubr.bf16.mxu0 0
    %2814 = vmatmul.mubr.bf16.gmra.mxu0 %v2775
    %v2815 = vpop.f32.mrf.mxu0
    %v2816 = vadd.f32 0.0, %v2815
    %v2817 = vpop.f32.mrf.mxu0
    %v2818 = vpop.f32.mrf.mxu0
    %v2819 = vpop.f32.mrf.mxu0
    %2820 = vdwg.mxu0
    %v2821 = vpack.c.bf16 %v2816, %v2816
    %v2830 = vunpack.c.l.b16 %v2762
    %v2831 = vunpack.c.l.b16 %v2763
    %v2832 = vunpack.c.l.b16 %v2764
    %v2833 = vunpack.c.l.b16 %v2765
    %v2834 = vunpack.c.l.b16 %v2766
    %v2835 = vunpack.c.l.b16 %v2767
    %v2836 = vunpack.c.l.b16 %v2768
    %v2837 = vunpack.c.l.b16 %v2769
    %v2838 = vpack.c.b16 %v2831, %v2830
    %v2839 = vpack.c.b16 %v2833, %v2832
    %v2840 = vpack.c.b16 %v2835, %v2834
    %v2841 = vpack.c.b16 %v2837, %v2836
    %v2847 = vsel %vm68, %v2821, 0
    %2849 = vmatprep.subr.bf16.mxu0 0
    %2850 = vmatpush1.bf16.msra.mxu0 0
    %2851 = vmatprep.subr.bf16.mxu0 0
    %2852 = vmatpush1.bf16.msra.mxu0 0
    %2853 = vmatprep.subr.bf16.mxu0 0
    %2854 = vmatpush1.bf16.msra.mxu0 0
    %2855 = vmatprep.subr.bf16.mxu0 0
    %2856 = vmatpush1.bf16.msra.mxu0 0
    %2857 = vmatprep.subr.bf16.mxu0 0
    %2858 = vmatpush1.bf16.msra.mxu0 %v2841
    %2859 = vmatprep.subr.bf16.mxu0 0
    %2860 = vmatpush1.bf16.msra.mxu0 %v2840
    %2861 = vmatprep.subr.bf16.mxu0 0
    %2862 = vmatpush1.bf16.msra.mxu0 %v2839
    %2863 = vmatprep.subr.bf16.mxu0 0
    %2864 = vmatpush1.bf16.msra.mxu0 %v2838
    %2865 = vmatprep.subr.bf16.mxu0 0
    %2866 = vmatpush2.bf16.msra.mxu0 0
    %2867 = vmatprep.subr.bf16.mxu0 0
    %2868 = vmatpush2.bf16.msra.mxu0 0
    %2869 = vmatprep.subr.bf16.mxu0 0
    %2870 = vmatpush2.bf16.msra.mxu0 0
    %2871 = vmatprep.subr.bf16.mxu0 0
    %2872 = vmatpush2.bf16.msra.mxu0 0
    %2873 = vmatprep.subr.bf16.mxu0 0
    %2874 = vmatpush2.bf16.msra.mxu0 0
    %2875 = vmatprep.subr.bf16.mxu0 0
    %2876 = vmatpush2.bf16.msra.mxu0 0
    %2877 = vmatprep.subr.bf16.mxu0 0
    %2878 = vmatpush2.bf16.msra.mxu0 0
    %2879 = vmatprep.subr.bf16.mxu0 0
    %2880 = vmatpush2.bf16.msra.mxu0 0
    %2881 = vmatprep.mubr.bf16.mxu0 0
    %2882 = vmatmul.mubr.bf16.gmra.mxu0 %v2847
    %v2883 = vpop.f32.mrf.mxu0
    %v2884 = vadd.f32 0.0, %v2883
    %v2885 = vpop.f32.mrf.mxu0
    %v2886 = vpop.f32.mrf.mxu0
    %v2887 = vpop.f32.mrf.mxu0
    %2888 = vdwg.mxu0
    %v2889 = vmax.f32 %v2884, 0.0
    %v2890 = vpack.c.bf16 %v2889, %v2889
    %v2892 = vsel %vm2773, %v2890, 0
    %v2895 = vsel %vm2777, %v2770, 0
    %2897 = vmatprep.subr.bf16.mxu0 0
    %2898 = vmatpush1.bf16.msra.mxu0 0
    %2899 = vmatprep.subr.bf16.mxu0 0
    %2900 = vmatpush1.bf16.msra.mxu0 0
    %2901 = vmatprep.subr.bf16.mxu0 0
    %2902 = vmatpush1.bf16.msra.mxu0 0
    %2903 = vmatprep.subr.bf16.mxu0 0
    %2904 = vmatpush1.bf16.msra.mxu0 0
    %2905 = vmatprep.subr.bf16.mxu0 0
    %2906 = vmatpush1.bf16.msra.mxu0 0
    %2907 = vmatprep.subr.bf16.mxu0 0
    %2908 = vmatpush1.bf16.msra.mxu0 0
    %2909 = vmatprep.subr.bf16.mxu0 0
    %2910 = vmatpush1.bf16.msra.mxu0 0
    %2911 = vmatprep.subr.bf16.mxu0 0
    %2912 = vmatpush1.bf16.msra.mxu0 %v2895
    %2913 = vmatprep.subr.bf16.mxu0 0
    %2914 = vmatpush2.bf16.msra.mxu0 0
    %2915 = vmatprep.subr.bf16.mxu0 0
    %2916 = vmatpush2.bf16.msra.mxu0 0
    %2917 = vmatprep.subr.bf16.mxu0 0
    %2918 = vmatpush2.bf16.msra.mxu0 0
    %2919 = vmatprep.subr.bf16.mxu0 0
    %2920 = vmatpush2.bf16.msra.mxu0 0
    %2921 = vmatprep.subr.bf16.mxu0 0
    %2922 = vmatpush2.bf16.msra.mxu0 0
    %2923 = vmatprep.subr.bf16.mxu0 0
    %2924 = vmatpush2.bf16.msra.mxu0 0
    %2925 = vmatprep.subr.bf16.mxu0 0
    %2926 = vmatpush2.bf16.msra.mxu0 0
    %2927 = vmatprep.subr.bf16.mxu0 0
    %2928 = vmatpush2.bf16.msra.mxu0 0
    %2929 = vmatprep.mubr.bf16.mxu0 0
    %2930 = vmatmul.mubr.bf16.gmra.mxu0 %v2892
    %v2931 = vpop.f32.mrf.mxu0
    %v2932 = vadd.f32 0.0, %v2931
    %v2933 = vpop.f32.mrf.mxu0
    %v2934 = vpop.f32.mrf.mxu0
    %v2935 = vpop.f32.mrf.mxu0
    %2936 = vdwg.mxu0
    %v2937 = vxor.u32 %v2932, 2147483648
    %v2938 = vmul.f32 %v2937, 1.442695
    %v2939 = vpow.pop %v2938
    %v2940 = vadd.f32 %v2939, 1.0
    %v2941 = vrcp.pop %v2940
    %v2942 = vmul.f32 1.0, %v2941
    %v2943 = vpack.c.bf16 %v2942, %v2942
    %v2945 = vsel %vm242, %v2771, 0
    %v2948 = vsel %vm169, %v2943, 0
    %2950 = vmatprep.subr.bf16.mxu0 0
    %2951 = vmatpush1.bf16.msra.mxu0 0
    %2952 = vmatprep.subr.bf16.mxu0 0
    %2953 = vmatpush1.bf16.msra.mxu0 0
    %2954 = vmatprep.subr.bf16.mxu0 0
    %2955 = vmatpush1.bf16.msra.mxu0 0
    %2956 = vmatprep.subr.bf16.mxu0 0
    %2957 = vmatpush1.bf16.msra.mxu0 0
    %2958 = vmatprep.subr.bf16.mxu0 0
    %2959 = vmatpush1.bf16.msra.mxu0 0
    %2960 = vmatprep.subr.bf16.mxu0 0
    %2961 = vmatpush1.bf16.msra.mxu0 0
    %2962 = vmatprep.subr.bf16.mxu0 0
    %2963 = vmatpush1.bf16.msra.mxu0 0
    %2964 = vmatprep.subr.bf16.mxu0 0
    %2965 = vmatpush1.bf16.msra.mxu0 %v2948
    %2966 = vmatprep.subr.bf16.mxu0 0
    %2967 = vmatpush2.bf16.msra.mxu0 0
    %2968 = vmatprep.subr.bf16.mxu0 0
    %2969 = vmatpush2.bf16.msra.mxu0 0
    %2970 = vmatprep.subr.bf16.mxu0 0
    %2971 = vmatpush2.bf16.msra.mxu0 0
    %2972 = vmatprep.subr.bf16.mxu0 0
    %2973 = vmatpush2.bf16.msra.mxu0 0
    %2974 = vmatprep.subr.bf16.mxu0 0
    %2975 = vmatpush2.bf16.msra.mxu0 0
    %2976 = vmatprep.subr.bf16.mxu0 0
    %2977 = vmatpush2.bf16.msra.mxu0 0
    %2978 = vmatprep.subr.bf16.mxu0 0
    %2979 = vmatpush2.bf16.msra.mxu0 0
    %2980 = vmatprep.subr.bf16.mxu0 0
    %2981 = vmatpush2.bf16.msra.mxu0 0
    %2982 = vmatprep.mubr.bf16.mxu0 0
    %2983 = vmatmul.mubr.bf16.gmra.mxu0 %v2945
    %v2984 = vpop.f32.mrf.mxu0
    %v2985 = vadd.f32 0.0, %v2984
    %v2986 = vpop.f32.mrf.mxu0
    %v2987 = vpop.f32.mrf.mxu0
    %v2988 = vpop.f32.mrf.mxu0
    %2989 = vdwg.mxu0
    %v2990 = vmul.f32 %v2761, %v2985
    %v2991 = vld [vmem:[#allocation2 + $0x278] sm:$0xf]
    %v2992 = vld [vmem:[#allocation2 + $0x27c] sm:$0xf]
    %v2993 = vld [vmem:[#allocation2 + $0x280] sm:$0xf]
    %v2994 = vld [vmem:[#allocation2 + $0x284] sm:$0xf]
    %v2995 = vld [vmem:[#allocation2 + $0x288] sm:$0xf]
    %v2996 = vld [vmem:[#allocation2 + $0x28c] sm:$0xf]
    %v2997 = vld [vmem:[#allocation2 + $0x290] sm:$0xf]
    %v2998 = vld [vmem:[#allocation2 + $0x294] sm:$0xf]
    %v2999 = vpack.c.bf16 %v2990, %v2990
    %v3000 = vld [vmem:[#allocation4 + $0x30] sm:$0x1]
    %v3001 = vlaneseq
    %v3002 = vshrl.u32 %v3001, 7
    %v3003 = vsub.s32 0, %v3002
    %v3004 = vrot.slane %v3000, %v3003
    %v3013 = vunpack.c.l.b16 %v2991
    %v3014 = vunpack.c.l.b16 %v2992
    %v3015 = vunpack.c.l.b16 %v2993
    %v3016 = vunpack.c.l.b16 %v2994
    %v3017 = vunpack.c.l.b16 %v2995
    %v3018 = vunpack.c.l.b16 %v2996
    %v3019 = vunpack.c.l.b16 %v2997
    %v3020 = vunpack.c.l.b16 %v2998
    %v3021 = vpack.c.b16 %v3014, %v3013
    %v3022 = vpack.c.b16 %v3016, %v3015
    %v3023 = vpack.c.b16 %v3018, %v3017
    %v3024 = vpack.c.b16 %v3020, %v3019
    %v3030 = vsel %vm68, %v2999, 0
    %3032 = vmatprep.subr.bf16.mxu0 0
    %3033 = vmatpush1.bf16.msra.mxu0 0
    %3034 = vmatprep.subr.bf16.mxu0 0
    %3035 = vmatpush1.bf16.msra.mxu0 0
    %3036 = vmatprep.subr.bf16.mxu0 0
    %3037 = vmatpush1.bf16.msra.mxu0 0
    %3038 = vmatprep.subr.bf16.mxu0 0
    %3039 = vmatpush1.bf16.msra.mxu0 0
    %3040 = vmatprep.subr.bf16.mxu0 0
    %3041 = vmatpush1.bf16.msra.mxu0 %v3024
    %3042 = vmatprep.subr.bf16.mxu0 0
    %3043 = vmatpush1.bf16.msra.mxu0 %v3023
    %3044 = vmatprep.subr.bf16.mxu0 0
    %3045 = vmatpush1.bf16.msra.mxu0 %v3022
    %3046 = vmatprep.subr.bf16.mxu0 0
    %3047 = vmatpush1.bf16.msra.mxu0 %v3021
    %3048 = vmatprep.subr.bf16.mxu0 0
    %3049 = vmatpush2.bf16.msra.mxu0 0
    %3050 = vmatprep.subr.bf16.mxu0 0
    %3051 = vmatpush2.bf16.msra.mxu0 0
    %3052 = vmatprep.subr.bf16.mxu0 0
    %3053 = vmatpush2.bf16.msra.mxu0 0
    %3054 = vmatprep.subr.bf16.mxu0 0
    %3055 = vmatpush2.bf16.msra.mxu0 0
    %3056 = vmatprep.subr.bf16.mxu0 0
    %3057 = vmatpush2.bf16.msra.mxu0 0
    %3058 = vmatprep.subr.bf16.mxu0 0
    %3059 = vmatpush2.bf16.msra.mxu0 0
    %3060 = vmatprep.subr.bf16.mxu0 0
    %3061 = vmatpush2.bf16.msra.mxu0 0
    %3062 = vmatprep.subr.bf16.mxu0 0
    %3063 = vmatpush2.bf16.msra.mxu0 0
    %3064 = vmatprep.mubr.bf16.mxu0 0
    %3065 = vmatmul.mubr.bf16.gmra.mxu0 %v3030
    %v3066 = vpop.f32.mrf.mxu0
    %v3067 = vadd.f32 %v3004, %v3066
    %v3068 = vpop.f32.mrf.mxu0
    %v3069 = vpop.f32.mrf.mxu0
    %v3070 = vpop.f32.mrf.mxu0
    %3071 = vdwg.mxu0
    %v3072 = vld [vmem:[#allocation4 + $0x80] sm:$0xf]
    %v3073 = vld [vmem:[#allocation2 + $0x298] sm:$0xf]
    %v3074 = vld [vmem:[#allocation2 + $0x29c] sm:$0xf]
    %v3075 = vld [vmem:[#allocation2 + $0x2a0] sm:$0xf]
    %v3076 = vld [vmem:[#allocation2 + $0x2a4] sm:$0xf]
    %v3077 = vpack.c.bf16 %v3067, %v3067
    %v3078 = vld [vmem:[#allocation4 + $0x38] sm:$0x1]
    %v3079 = vlaneseq
    %v3080 = vshrl.u32 %v3079, 7
    %v3081 = vsub.s32 0, %v3080
    %v3082 = vrot.slane %v3078, %v3081
    %v3087 = vunpack.c.l.b16 %v3073
    %v3088 = vunpack.c.l.b16 %v3074
    %v3089 = vunpack.c.l.b16 %v3075
    %v3090 = vunpack.c.l.b16 %v3076
    %v3091 = vpack.c.b16 %v3088, %v3087
    %v3092 = vpack.c.b16 %v3090, %v3089
    %v3096 = vsel %vm1293, %v3077, 0
    %3098 = vmatprep.subr.bf16.mxu0 0
    %3099 = vmatpush1.bf16.msra.mxu0 0
    %3100 = vmatprep.subr.bf16.mxu0 0
    %3101 = vmatpush1.bf16.msra.mxu0 0
    %3102 = vmatprep.subr.bf16.mxu0 0
    %3103 = vmatpush1.bf16.msra.mxu0 0
    %3104 = vmatprep.subr.bf16.mxu0 0
    %3105 = vmatpush1.bf16.msra.mxu0 0
    %3106 = vmatprep.subr.bf16.mxu0 0
    %3107 = vmatpush1.bf16.msra.mxu0 0
    %3108 = vmatprep.subr.bf16.mxu0 0
    %3109 = vmatpush1.bf16.msra.mxu0 0
    %3110 = vmatprep.subr.bf16.mxu0 0
    %3111 = vmatpush1.bf16.msra.mxu0 %v3092
    %3112 = vmatprep.subr.bf16.mxu0 0
    %3113 = vmatpush1.bf16.msra.mxu0 %v3091
    %3114 = vmatprep.subr.bf16.mxu0 0
    %3115 = vmatpush2.bf16.msra.mxu0 0
    %3116 = vmatprep.subr.bf16.mxu0 0
    %3117 = vmatpush2.bf16.msra.mxu0 0
    %3118 = vmatprep.subr.bf16.mxu0 0
    %3119 = vmatpush2.bf16.msra.mxu0 0
    %3120 = vmatprep.subr.bf16.mxu0 0
    %3121 = vmatpush2.bf16.msra.mxu0 0
    %3122 = vmatprep.subr.bf16.mxu0 0
    %3123 = vmatpush2.bf16.msra.mxu0 0
    %3124 = vmatprep.subr.bf16.mxu0 0
    %3125 = vmatpush2.bf16.msra.mxu0 0
    %3126 = vmatprep.subr.bf16.mxu0 0
    %3127 = vmatpush2.bf16.msra.mxu0 0
    %3128 = vmatprep.subr.bf16.mxu0 0
    %3129 = vmatpush2.bf16.msra.mxu0 0
    %3130 = vmatprep.mubr.bf16.mxu0 0
    %3131 = vmatmul.mubr.bf16.gmra.mxu0 %v3096
    %v3132 = vpop.f32.mrf.mxu0
    %v3133 = vadd.f32 %v3082, %v3132
    %v3134 = vpop.f32.mrf.mxu0
    %v3135 = vpop.f32.mrf.mxu0
    %v3136 = vpop.f32.mrf.mxu0
    %3137 = vdwg.mxu0
    %v3138 = vmul.f32 %v3133, 0.35355338
    %v3139 = vld [vmem:[#allocation2 + $0x2a8] sm:$0xf]
    %v3140 = vld [vmem:[#allocation2 + $0x2ac] sm:$0xf]
    %v3141 = vld [vmem:[#allocation2 + $0x2b0] sm:$0xf]
    %v3142 = vld [vmem:[#allocation2 + $0x2b4] sm:$0xf]
    %v3143 = vpack.c.bf16 %v3138, %v3138
    %v3144 = vpack.c.bf16 %v3133, %v3133
    %3146 = vrot.lane.b32.xlu0 %v3144, 96
    %v3147 = vpop.permute.xlu0 %3146
    %v3149 = vsel %vm2670, %v3143, 0
    %v3152 = vsel %vm2670, %v3147, 0
    %3154 = vmatprep.subr.bf16.mxu0 0
    %3155 = vmatpush1.bf16.xpose.msra.mxu0 0
    %3156 = vmatprep.subr.bf16.mxu0 0
    %3157 = vmatpush1.bf16.xpose.msra.mxu0 0
    %3158 = vmatprep.subr.bf16.mxu0 0
    %3159 = vmatpush1.bf16.xpose.msra.mxu0 0
    %3160 = vmatprep.subr.bf16.mxu0 0
    %3161 = vmatpush1.bf16.xpose.msra.mxu0 0
    %3162 = vmatprep.subr.bf16.mxu0 0
    %3163 = vmatpush1.bf16.xpose.msra.mxu0 0
    %3164 = vmatprep.subr.bf16.mxu0 0
    %3165 = vmatpush1.bf16.xpose.msra.mxu0 0
    %3166 = vmatprep.subr.bf16.mxu0 0
    %3167 = vmatpush1.bf16.xpose.msra.mxu0 0
    %3168 = vmatprep.subr.bf16.mxu0 0
    %3169 = vmatpush1.bf16.xpose.msra.mxu0 %v3152
    %3170 = vmatprep.subr.bf16.mxu0 0
    %3171 = vmatpush2.bf16.xpose.msra.mxu0 0
    %3172 = vmatprep.subr.bf16.mxu0 0
    %3173 = vmatpush2.bf16.xpose.msra.mxu0 0
    %3174 = vmatprep.subr.bf16.mxu0 0
    %3175 = vmatpush2.bf16.xpose.msra.mxu0 0
    %3176 = vmatprep.subr.bf16.mxu0 0
    %3177 = vmatpush2.bf16.xpose.msra.mxu0 0
    %3178 = vmatprep.subr.bf16.mxu0 0
    %3179 = vmatpush2.bf16.xpose.msra.mxu0 0
    %3180 = vmatprep.subr.bf16.mxu0 0
    %3181 = vmatpush2.bf16.xpose.msra.mxu0 0
    %3182 = vmatprep.subr.bf16.mxu0 0
    %3183 = vmatpush2.bf16.xpose.msra.mxu0 0
    %3184 = vmatprep.subr.bf16.mxu0 0
    %3185 = vmatpush2.bf16.xpose.msra.mxu0 0
    %3186 = vmatprep.mubr.bf16.mxu0 0
    %3187 = vmatmul.mubr.bf16.gmra.mxu0 %v3149
    %v3188 = vpop.f32.mrf.mxu0
    %v3189 = vadd.f32 %v3072, %v3188
    %v3190 = vpop.f32.mrf.mxu0
    %v3191 = vpop.f32.mrf.mxu0
    %v3192 = vpop.f32.mrf.mxu0
    %3193 = vdwg.mxu0
    %vm3194 = vcmask 27648
    %v3195 = vsel %vm3194, %v3189, -inf
    %3196 = vmax.xlane.f32.xlu0 %v3195
    %v3197 = vpop.xlane.xlu0 %3196
    %v3198 = vsub.f32 %v3189, %v3197
    %v3199 = vmul.f32 %v3198, 1.442695
    %v3200 = vpow.pop %v3199
    %v3201 = vsel %vm3194, %v3200, 0.0
    %3202 = vadd.xlane.f32.xlu0 %v3201
    %v3203 = vpop.xlane.xlu0 %3202
    %v3204 = vrcp.pop %v3203
    %v3205 = vmul.f32 %v3200, %v3204
    %v3206 = vpack.c.bf16 %v3205, %v3205
    %3207 = vrot.lane.b32.xlu0 %v3144, 64
    %v3208 = vpop.permute.xlu0 %3207
    %v3210 = vsel %vm2773, %v3206, 0
    %v3213 = vsel %vm2777, %v3208, 0
    %3215 = vmatprep.subr.bf16.mxu0 0
    %3216 = vmatpush1.bf16.msra.mxu0 0
    %3217 = vmatprep.subr.bf16.mxu0 0
    %3218 = vmatpush1.bf16.msra.mxu0 0
    %3219 = vmatprep.subr.bf16.mxu0 0
    %3220 = vmatpush1.bf16.msra.mxu0 0
    %3221 = vmatprep.subr.bf16.mxu0 0
    %3222 = vmatpush1.bf16.msra.mxu0 0
    %3223 = vmatprep.subr.bf16.mxu0 0
    %3224 = vmatpush1.bf16.msra.mxu0 0
    %3225 = vmatprep.subr.bf16.mxu0 0
    %3226 = vmatpush1.bf16.msra.mxu0 0
    %3227 = vmatprep.subr.bf16.mxu0 0
    %3228 = vmatpush1.bf16.msra.mxu0 0
    %3229 = vmatprep.subr.bf16.mxu0 0
    %3230 = vmatpush1.bf16.msra.mxu0 %v3213
    %3231 = vmatprep.subr.bf16.mxu0 0
    %3232 = vmatpush2.bf16.msra.mxu0 0
    %3233 = vmatprep.subr.bf16.mxu0 0
    %3234 = vmatpush2.bf16.msra.mxu0 0
    %3235 = vmatprep.subr.bf16.mxu0 0
    %3236 = vmatpush2.bf16.msra.mxu0 0
    %3237 = vmatprep.subr.bf16.mxu0 0
    %3238 = vmatpush2.bf16.msra.mxu0 0
    %3239 = vmatprep.subr.bf16.mxu0 0
    %3240 = vmatpush2.bf16.msra.mxu0 0
    %3241 = vmatprep.subr.bf16.mxu0 0
    %3242 = vmatpush2.bf16.msra.mxu0 0
    %3243 = vmatprep.subr.bf16.mxu0 0
    %3244 = vmatpush2.bf16.msra.mxu0 0
    %3245 = vmatprep.subr.bf16.mxu0 0
    %3246 = vmatpush2.bf16.msra.mxu0 0
    %3247 = vmatprep.mubr.bf16.mxu0 0
    %3248 = vmatmul.mubr.bf16.gmra.mxu0 %v3210
    %v3249 = vpop.f32.mrf.mxu0
    %v3250 = vadd.f32 0.0, %v3249
    %v3251 = vpop.f32.mrf.mxu0
    %v3252 = vpop.f32.mrf.mxu0
    %v3253 = vpop.f32.mrf.mxu0
    %3254 = vdwg.mxu0
    %v3255 = vpack.c.bf16 %v3250, %v3250
    %3257 = vrot.lane.b32.xlu0 %v3143, 120
    %v3258 = vpop.permute.xlu0 %3257
    %3259 = vrot.lane.b32.xlu0 %v3144, 88
    %v3260 = vpop.permute.xlu0 %3259
    %v3262 = vsel %vm2670, %v3258, 0
    %v3265 = vsel %vm2670, %v3260, 0
    %3267 = vmatprep.subr.bf16.mxu0 0
    %3268 = vmatpush1.bf16.xpose.msra.mxu0 0
    %3269 = vmatprep.subr.bf16.mxu0 0
    %3270 = vmatpush1.bf16.xpose.msra.mxu0 0
    %3271 = vmatprep.subr.bf16.mxu0 0
    %3272 = vmatpush1.bf16.xpose.msra.mxu0 0
    %3273 = vmatprep.subr.bf16.mxu0 0
    %3274 = vmatpush1.bf16.xpose.msra.mxu0 0
    %3275 = vmatprep.subr.bf16.mxu0 0
    %3276 = vmatpush1.bf16.xpose.msra.mxu0 0
    %3277 = vmatprep.subr.bf16.mxu0 0
    %3278 = vmatpush1.bf16.xpose.msra.mxu0 0
    %3279 = vmatprep.subr.bf16.mxu0 0
    %3280 = vmatpush1.bf16.xpose.msra.mxu0 0
    %3281 = vmatprep.subr.bf16.mxu0 0
    %3282 = vmatpush1.bf16.xpose.msra.mxu0 %v3265
    %3283 = vmatprep.subr.bf16.mxu0 0
    %3284 = vmatpush2.bf16.xpose.msra.mxu0 0
    %3285 = vmatprep.subr.bf16.mxu0 0
    %3286 = vmatpush2.bf16.xpose.msra.mxu0 0
    %3287 = vmatprep.subr.bf16.mxu0 0
    %3288 = vmatpush2.bf16.xpose.msra.mxu0 0
    %3289 = vmatprep.subr.bf16.mxu0 0
    %3290 = vmatpush2.bf16.xpose.msra.mxu0 0
    %3291 = vmatprep.subr.bf16.mxu0 0
    %3292 = vmatpush2.bf16.xpose.msra.mxu0 0
    %3293 = vmatprep.subr.bf16.mxu0 0
    %3294 = vmatpush2.bf16.xpose.msra.mxu0 0
    %3295 = vmatprep.subr.bf16.mxu0 0
    %3296 = vmatpush2.bf16.xpose.msra.mxu0 0
    %3297 = vmatprep.subr.bf16.mxu0 0
    %3298 = vmatpush2.bf16.xpose.msra.mxu0 0
    %3299 = vmatprep.mubr.bf16.mxu0 0
    %3300 = vmatmul.mubr.bf16.gmra.mxu0 %v3262
    %v3301 = vpop.f32.mrf.mxu0
    %v3302 = vadd.f32 %v3072, %v3301
    %v3303 = vpop.f32.mrf.mxu0
    %v3304 = vpop.f32.mrf.mxu0
    %v3305 = vpop.f32.mrf.mxu0
    %3306 = vdwg.mxu0
    %v3307 = vsel %vm3194, %v3302, -inf
    %3308 = vmax.xlane.f32.xlu0 %v3307
    %v3309 = vpop.xlane.xlu0 %3308
    %v3310 = vsub.f32 %v3302, %v3309
    %v3311 = vmul.f32 %v3310, 1.442695
    %v3312 = vpow.pop %v3311
    %v3313 = vsel %vm3194, %v3312, 0.0
    %3314 = vadd.xlane.f32.xlu0 %v3313
    %v3315 = vpop.xlane.xlu0 %3314
    %v3316 = vrcp.pop %v3315
    %v3317 = vmul.f32 %v3312, %v3316
    %v3318 = vpack.c.bf16 %v3317, %v3317
    %3319 = vrot.lane.b32.xlu0 %v3144, 56
    %v3320 = vpop.permute.xlu0 %3319
    %v3322 = vsel %vm2773, %v3318, 0
    %v3325 = vsel %vm2777, %v3320, 0
    %3327 = vmatprep.subr.bf16.mxu0 0
    %3328 = vmatpush1.bf16.msra.mxu0 0
    %3329 = vmatprep.subr.bf16.mxu0 0
    %3330 = vmatpush1.bf16.msra.mxu0 0
    %3331 = vmatprep.subr.bf16.mxu0 0
    %3332 = vmatpush1.bf16.msra.mxu0 0
    %3333 = vmatprep.subr.bf16.mxu0 0
    %3334 = vmatpush1.bf16.msra.mxu0 0
    %3335 = vmatprep.subr.bf16.mxu0 0
    %3336 = vmatpush1.bf16.msra.mxu0 0
    %3337 = vmatprep.subr.bf16.mxu0 0
    %3338 = vmatpush1.bf16.msra.mxu0 0
    %3339 = vmatprep.subr.bf16.mxu0 0
    %3340 = vmatpush1.bf16.msra.mxu0 0
    %3341 = vmatprep.subr.bf16.mxu0 0
    %3342 = vmatpush1.bf16.msra.mxu0 %v3325
    %3343 = vmatprep.subr.bf16.mxu0 0
    %3344 = vmatpush2.bf16.msra.mxu0 0
    %3345 = vmatprep.subr.bf16.mxu0 0
    %3346 = vmatpush2.bf16.msra.mxu0 0
    %3347 = vmatprep.subr.bf16.mxu0 0
    %3348 = vmatpush2.bf16.msra.mxu0 0
    %3349 = vmatprep.subr.bf16.mxu0 0
    %3350 = vmatpush2.bf16.msra.mxu0 0
    %3351 = vmatprep.subr.bf16.mxu0 0
    %3352 = vmatpush2.bf16.msra.mxu0 0
    %3353 = vmatprep.subr.bf16.mxu0 0
    %3354 = vmatpush2.bf16.msra.mxu0 0
    %3355 = vmatprep.subr.bf16.mxu0 0
    %3356 = vmatpush2.bf16.msra.mxu0 0
    %3357 = vmatprep.subr.bf16.mxu0 0
    %3358 = vmatpush2.bf16.msra.mxu0 0
    %3359 = vmatprep.mubr.bf16.mxu0 0
    %3360 = vmatmul.mubr.bf16.gmra.mxu0 %v3322
    %v3361 = vpop.f32.mrf.mxu0
    %v3362 = vadd.f32 0.0, %v3361
    %v3363 = vpop.f32.mrf.mxu0
    %v3364 = vpop.f32.mrf.mxu0
    %v3365 = vpop.f32.mrf.mxu0
    %3366 = vdwg.mxu0
    %v3367 = vpack.c.bf16 %v3362, %v3362
    %v3369 = vsel %vm2670, %v3367, 0
    %v3372 = vsel %vm2674, %v3140, 0
    %3374 = vmatprep.subr.bf16.mxu0 0
    %3375 = vmatpush1.bf16.msra.mxu0 0
    %3376 = vmatprep.subr.bf16.mxu0 0
    %3377 = vmatpush1.bf16.msra.mxu0 0
    %3378 = vmatprep.subr.bf16.mxu0 0
    %3379 = vmatpush1.bf16.msra.mxu0 0
    %3380 = vmatprep.subr.bf16.mxu0 0
    %3381 = vmatpush1.bf16.msra.mxu0 0
    %3382 = vmatprep.subr.bf16.mxu0 0
    %3383 = vmatpush1.bf16.msra.mxu0 0
    %3384 = vmatprep.subr.bf16.mxu0 0
    %3385 = vmatpush1.bf16.msra.mxu0 0
    %3386 = vmatprep.subr.bf16.mxu0 0
    %3387 = vmatpush1.bf16.msra.mxu0 0
    %3388 = vmatprep.subr.bf16.mxu0 0
    %3389 = vmatpush1.bf16.msra.mxu0 %v3372
    %3390 = vmatprep.subr.bf16.mxu0 0
    %3391 = vmatpush2.bf16.msra.mxu0 0
    %3392 = vmatprep.subr.bf16.mxu0 0
    %3393 = vmatpush2.bf16.msra.mxu0 0
    %3394 = vmatprep.subr.bf16.mxu0 0
    %3395 = vmatpush2.bf16.msra.mxu0 0
    %3396 = vmatprep.subr.bf16.mxu0 0
    %3397 = vmatpush2.bf16.msra.mxu0 0
    %3398 = vmatprep.subr.bf16.mxu0 0
    %3399 = vmatpush2.bf16.msra.mxu0 0
    %3400 = vmatprep.subr.bf16.mxu0 0
    %3401 = vmatpush2.bf16.msra.mxu0 0
    %3402 = vmatprep.subr.bf16.mxu0 0
    %3403 = vmatpush2.bf16.msra.mxu0 0
    %3404 = vmatprep.subr.bf16.mxu0 0
    %3405 = vmatpush2.bf16.msra.mxu0 0
    %3406 = vmatprep.mubr.bf16.mxu0 0
    %3407 = vmatmul.mubr.bf16.gmra.mxu0 %v3369
    %v3408 = vpop.f32.mrf.mxu0
    %v3409 = vadd.f32 0.0, %v3408
    %v3410 = vpop.f32.mrf.mxu0
    %v3411 = vpop.f32.mrf.mxu0
    %v3412 = vpop.f32.mrf.mxu0
    %3413 = vdwg.mxu0
    %v3415 = vsel %vm2670, %v3255, 0
    %v3418 = vsel %vm2674, %v3139, 0
    %3420 = vmatprep.subr.bf16.mxu0 0
    %3421 = vmatpush1.bf16.msra.mxu0 0
    %3422 = vmatprep.subr.bf16.mxu0 0
    %3423 = vmatpush1.bf16.msra.mxu0 0
    %3424 = vmatprep.subr.bf16.mxu0 0
    %3425 = vmatpush1.bf16.msra.mxu0 0
    %3426 = vmatprep.subr.bf16.mxu0 0
    %3427 = vmatpush1.bf16.msra.mxu0 0
    %3428 = vmatprep.subr.bf16.mxu0 0
    %3429 = vmatpush1.bf16.msra.mxu0 0
    %3430 = vmatprep.subr.bf16.mxu0 0
    %3431 = vmatpush1.bf16.msra.mxu0 0
    %3432 = vmatprep.subr.bf16.mxu0 0
    %3433 = vmatpush1.bf16.msra.mxu0 0
    %3434 = vmatprep.subr.bf16.mxu0 0
    %3435 = vmatpush1.bf16.msra.mxu0 %v3418
    %3436 = vmatprep.subr.bf16.mxu0 0
    %3437 = vmatpush2.bf16.msra.mxu0 0
    %3438 = vmatprep.subr.bf16.mxu0 0
    %3439 = vmatpush2.bf16.msra.mxu0 0
    %3440 = vmatprep.subr.bf16.mxu0 0
    %3441 = vmatpush2.bf16.msra.mxu0 0
    %3442 = vmatprep.subr.bf16.mxu0 0
    %3443 = vmatpush2.bf16.msra.mxu0 0
    %3444 = vmatprep.subr.bf16.mxu0 0
    %3445 = vmatpush2.bf16.msra.mxu0 0
    %3446 = vmatprep.subr.bf16.mxu0 0
    %3447 = vmatpush2.bf16.msra.mxu0 0
    %3448 = vmatprep.subr.bf16.mxu0 0
    %3449 = vmatpush2.bf16.msra.mxu0 0
    %3450 = vmatprep.subr.bf16.mxu0 0
    %3451 = vmatpush2.bf16.msra.mxu0 0
    %3452 = vmatprep.mubr.bf16.mxu0 0
    %3453 = vmatmul.mubr.bf16.gmra.mxu0 %v3415
    %v3454 = vpop.f32.mrf.mxu0
    %v3455 = vadd.f32 %v3409, %v3454
    %v3456 = vpop.f32.mrf.mxu0
    %v3457 = vpop.f32.mrf.mxu0
    %v3458 = vpop.f32.mrf.mxu0
    %3459 = vdwg.mxu0
    %3460 = vrot.lane.b32.xlu0 %v3143, 112
    %v3461 = vpop.permute.xlu0 %3460
    %3462 = vrot.lane.b32.xlu0 %v3144, 80
    %v3463 = vpop.permute.xlu0 %3462
    %v3465 = vsel %vm2670, %v3461, 0
    %v3468 = vsel %vm2670, %v3463, 0
    %3470 = vmatprep.subr.bf16.mxu0 0
    %3471 = vmatpush1.bf16.xpose.msra.mxu0 0
    %3472 = vmatprep.subr.bf16.mxu0 0
    %3473 = vmatpush1.bf16.xpose.msra.mxu0 0
    %3474 = vmatprep.subr.bf16.mxu0 0
    %3475 = vmatpush1.bf16.xpose.msra.mxu0 0
    %3476 = vmatprep.subr.bf16.mxu0 0
    %3477 = vmatpush1.bf16.xpose.msra.mxu0 0
    %3478 = vmatprep.subr.bf16.mxu0 0
    %3479 = vmatpush1.bf16.xpose.msra.mxu0 0
    %3480 = vmatprep.subr.bf16.mxu0 0
    %3481 = vmatpush1.bf16.xpose.msra.mxu0 0
    %3482 = vmatprep.subr.bf16.mxu0 0
    %3483 = vmatpush1.bf16.xpose.msra.mxu0 0
    %3484 = vmatprep.subr.bf16.mxu0 0
    %3485 = vmatpush1.bf16.xpose.msra.mxu0 %v3468
    %3486 = vmatprep.subr.bf16.mxu0 0
    %3487 = vmatpush2.bf16.xpose.msra.mxu0 0
    %3488 = vmatprep.subr.bf16.mxu0 0
    %3489 = vmatpush2.bf16.xpose.msra.mxu0 0
    %3490 = vmatprep.subr.bf16.mxu0 0
    %3491 = vmatpush2.bf16.xpose.msra.mxu0 0
    %3492 = vmatprep.subr.bf16.mxu0 0
    %3493 = vmatpush2.bf16.xpose.msra.mxu0 0
    %3494 = vmatprep.subr.bf16.mxu0 0
    %3495 = vmatpush2.bf16.xpose.msra.mxu0 0
    %3496 = vmatprep.subr.bf16.mxu0 0
    %3497 = vmatpush2.bf16.xpose.msra.mxu0 0
    %3498 = vmatprep.subr.bf16.mxu0 0
    %3499 = vmatpush2.bf16.xpose.msra.mxu0 0
    %3500 = vmatprep.subr.bf16.mxu0 0
    %3501 = vmatpush2.bf16.xpose.msra.mxu0 0
    %3502 = vmatprep.mubr.bf16.mxu0 0
    %3503 = vmatmul.mubr.bf16.gmra.mxu0 %v3465
    %v3504 = vpop.f32.mrf.mxu0
    %v3505 = vadd.f32 %v3072, %v3504
    %v3506 = vpop.f32.mrf.mxu0
    %v3507 = vpop.f32.mrf.mxu0
    %v3508 = vpop.f32.mrf.mxu0
    %3509 = vdwg.mxu0
    %v3510 = vsel %vm3194, %v3505, -inf
    %3511 = vmax.xlane.f32.xlu0 %v3510
    %v3512 = vpop.xlane.xlu0 %3511
    %v3513 = vsub.f32 %v3505, %v3512
    %v3514 = vmul.f32 %v3513, 1.442695
    %v3515 = vpow.pop %v3514
    %v3516 = vsel %vm3194, %v3515, 0.0
    %3517 = vadd.xlane.f32.xlu0 %v3516
    %v3518 = vpop.xlane.xlu0 %3517
    %v3519 = vrcp.pop %v3518
    %v3520 = vmul.f32 %v3515, %v3519
    %v3521 = vpack.c.bf16 %v3520, %v3520
    %3522 = vrot.lane.b32.xlu0 %v3144, 48
    %v3523 = vpop.permute.xlu0 %3522
    %v3525 = vsel %vm2773, %v3521, 0
    %v3528 = vsel %vm2777, %v3523, 0
    %3530 = vmatprep.subr.bf16.mxu0 0
    %3531 = vmatpush1.bf16.msra.mxu0 0
    %3532 = vmatprep.subr.bf16.mxu0 0
    %3533 = vmatpush1.bf16.msra.mxu0 0
    %3534 = vmatprep.subr.bf16.mxu0 0
    %3535 = vmatpush1.bf16.msra.mxu0 0
    %3536 = vmatprep.subr.bf16.mxu0 0
    %3537 = vmatpush1.bf16.msra.mxu0 0
    %3538 = vmatprep.subr.bf16.mxu0 0
    %3539 = vmatpush1.bf16.msra.mxu0 0
    %3540 = vmatprep.subr.bf16.mxu0 0
    %3541 = vmatpush1.bf16.msra.mxu0 0
    %3542 = vmatprep.subr.bf16.mxu0 0
    %3543 = vmatpush1.bf16.msra.mxu0 0
    %3544 = vmatprep.subr.bf16.mxu0 0
    %3545 = vmatpush1.bf16.msra.mxu0 %v3528
    %3546 = vmatprep.subr.bf16.mxu0 0
    %3547 = vmatpush2.bf16.msra.mxu0 0
    %3548 = vmatprep.subr.bf16.mxu0 0
    %3549 = vmatpush2.bf16.msra.mxu0 0
    %3550 = vmatprep.subr.bf16.mxu0 0
    %3551 = vmatpush2.bf16.msra.mxu0 0
    %3552 = vmatprep.subr.bf16.mxu0 0
    %3553 = vmatpush2.bf16.msra.mxu0 0
    %3554 = vmatprep.subr.bf16.mxu0 0
    %3555 = vmatpush2.bf16.msra.mxu0 0
    %3556 = vmatprep.subr.bf16.mxu0 0
    %3557 = vmatpush2.bf16.msra.mxu0 0
    %3558 = vmatprep.subr.bf16.mxu0 0
    %3559 = vmatpush2.bf16.msra.mxu0 0
    %3560 = vmatprep.subr.bf16.mxu0 0
    %3561 = vmatpush2.bf16.msra.mxu0 0
    %3562 = vmatprep.mubr.bf16.mxu0 0
    %3563 = vmatmul.mubr.bf16.gmra.mxu0 %v3525
    %v3564 = vpop.f32.mrf.mxu0
    %v3565 = vadd.f32 0.0, %v3564
    %v3566 = vpop.f32.mrf.mxu0
    %v3567 = vpop.f32.mrf.mxu0
    %v3568 = vpop.f32.mrf.mxu0
    %3569 = vdwg.mxu0
    %v3570 = vpack.c.bf16 %v3565, %v3565
    %v3572 = vsel %vm2670, %v3570, 0
    %v3575 = vsel %vm2674, %v3141, 0
    %3577 = vmatprep.subr.bf16.mxu0 0
    %3578 = vmatpush1.bf16.msra.mxu0 0
    %3579 = vmatprep.subr.bf16.mxu0 0
    %3580 = vmatpush1.bf16.msra.mxu0 0
    %3581 = vmatprep.subr.bf16.mxu0 0
    %3582 = vmatpush1.bf16.msra.mxu0 0
    %3583 = vmatprep.subr.bf16.mxu0 0
    %3584 = vmatpush1.bf16.msra.mxu0 0
    %3585 = vmatprep.subr.bf16.mxu0 0
    %3586 = vmatpush1.bf16.msra.mxu0 0
    %3587 = vmatprep.subr.bf16.mxu0 0
    %3588 = vmatpush1.bf16.msra.mxu0 0
    %3589 = vmatprep.subr.bf16.mxu0 0
    %3590 = vmatpush1.bf16.msra.mxu0 0
    %3591 = vmatprep.subr.bf16.mxu0 0
    %3592 = vmatpush1.bf16.msra.mxu0 %v3575
    %3593 = vmatprep.subr.bf16.mxu0 0
    %3594 = vmatpush2.bf16.msra.mxu0 0
    %3595 = vmatprep.subr.bf16.mxu0 0
    %3596 = vmatpush2.bf16.msra.mxu0 0
    %3597 = vmatprep.subr.bf16.mxu0 0
    %3598 = vmatpush2.bf16.msra.mxu0 0
    %3599 = vmatprep.subr.bf16.mxu0 0
    %3600 = vmatpush2.bf16.msra.mxu0 0
    %3601 = vmatprep.subr.bf16.mxu0 0
    %3602 = vmatpush2.bf16.msra.mxu0 0
    %3603 = vmatprep.subr.bf16.mxu0 0
    %3604 = vmatpush2.bf16.msra.mxu0 0
    %3605 = vmatprep.subr.bf16.mxu0 0
    %3606 = vmatpush2.bf16.msra.mxu0 0
    %3607 = vmatprep.subr.bf16.mxu0 0
    %3608 = vmatpush2.bf16.msra.mxu0 0
    %3609 = vmatprep.mubr.bf16.mxu0 0
    %3610 = vmatmul.mubr.bf16.gmra.mxu0 %v3572
    %v3611 = vpop.f32.mrf.mxu0
    %v3612 = vadd.f32 0.0, %v3611
    %v3613 = vpop.f32.mrf.mxu0
    %v3614 = vpop.f32.mrf.mxu0
    %v3615 = vpop.f32.mrf.mxu0
    %3616 = vdwg.mxu0
    %v3617 = vadd.f32 %v3455, %v3612
    %3618 = vrot.lane.b32.xlu0 %v3143, 104
    %v3619 = vpop.permute.xlu0 %3618
    %3620 = vrot.lane.b32.xlu0 %v3144, 72
    %v3621 = vpop.permute.xlu0 %3620
    %v3623 = vsel %vm2670, %v3619, 0
    %v3626 = vsel %vm2670, %v3621, 0
    %3628 = vmatprep.subr.bf16.mxu0 0
    %3629 = vmatpush1.bf16.xpose.msra.mxu0 0
    %3630 = vmatprep.subr.bf16.mxu0 0
    %3631 = vmatpush1.bf16.xpose.msra.mxu0 0
    %3632 = vmatprep.subr.bf16.mxu0 0
    %3633 = vmatpush1.bf16.xpose.msra.mxu0 0
    %3634 = vmatprep.subr.bf16.mxu0 0
    %3635 = vmatpush1.bf16.xpose.msra.mxu0 0
    %3636 = vmatprep.subr.bf16.mxu0 0
    %3637 = vmatpush1.bf16.xpose.msra.mxu0 0
    %3638 = vmatprep.subr.bf16.mxu0 0
    %3639 = vmatpush1.bf16.xpose.msra.mxu0 0
    %3640 = vmatprep.subr.bf16.mxu0 0
    %3641 = vmatpush1.bf16.xpose.msra.mxu0 0
    %3642 = vmatprep.subr.bf16.mxu0 0
    %3643 = vmatpush1.bf16.xpose.msra.mxu0 %v3626
    %3644 = vmatprep.subr.bf16.mxu0 0
    %3645 = vmatpush2.bf16.xpose.msra.mxu0 0
    %3646 = vmatprep.subr.bf16.mxu0 0
    %3647 = vmatpush2.bf16.xpose.msra.mxu0 0
    %3648 = vmatprep.subr.bf16.mxu0 0
    %3649 = vmatpush2.bf16.xpose.msra.mxu0 0
    %3650 = vmatprep.subr.bf16.mxu0 0
    %3651 = vmatpush2.bf16.xpose.msra.mxu0 0
    %3652 = vmatprep.subr.bf16.mxu0 0
    %3653 = vmatpush2.bf16.xpose.msra.mxu0 0
    %3654 = vmatprep.subr.bf16.mxu0 0
    %3655 = vmatpush2.bf16.xpose.msra.mxu0 0
    %3656 = vmatprep.subr.bf16.mxu0 0
    %3657 = vmatpush2.bf16.xpose.msra.mxu0 0
    %3658 = vmatprep.subr.bf16.mxu0 0
    %3659 = vmatpush2.bf16.xpose.msra.mxu0 0
    %3660 = vmatprep.mubr.bf16.mxu0 0
    %3661 = vmatmul.mubr.bf16.gmra.mxu0 %v3623
    %v3662 = vpop.f32.mrf.mxu0
    %v3663 = vadd.f32 %v3072, %v3662
    %v3664 = vpop.f32.mrf.mxu0
    %v3665 = vpop.f32.mrf.mxu0
    %v3666 = vpop.f32.mrf.mxu0
    %3667 = vdwg.mxu0
    %v3668 = vsel %vm3194, %v3663, -inf
    %3669 = vmax.xlane.f32.xlu0 %v3668
    %v3670 = vpop.xlane.xlu0 %3669
    %v3671 = vsub.f32 %v3663, %v3670
    %v3672 = vmul.f32 %v3671, 1.442695
    %v3673 = vpow.pop %v3672
    %v3674 = vsel %vm3194, %v3673, 0.0
    %3675 = vadd.xlane.f32.xlu0 %v3674
    %v3676 = vpop.xlane.xlu0 %3675
    %v3677 = vrcp.pop %v3676
    %v3678 = vmul.f32 %v3673, %v3677
    %v3679 = vpack.c.bf16 %v3678, %v3678
    %3680 = vrot.lane.b32.xlu0 %v3144, 40
    %v3681 = vpop.permute.xlu0 %3680
    %v3683 = vsel %vm2773, %v3679, 0
    %v3686 = vsel %vm2777, %v3681, 0
    %3688 = vmatprep.subr.bf16.mxu0 0
    %3689 = vmatpush1.bf16.msra.mxu0 0
    %3690 = vmatprep.subr.bf16.mxu0 0
    %3691 = vmatpush1.bf16.msra.mxu0 0
    %3692 = vmatprep.subr.bf16.mxu0 0
    %3693 = vmatpush1.bf16.msra.mxu0 0
    %3694 = vmatprep.subr.bf16.mxu0 0
    %3695 = vmatpush1.bf16.msra.mxu0 0
    %3696 = vmatprep.subr.bf16.mxu0 0
    %3697 = vmatpush1.bf16.msra.mxu0 0
    %3698 = vmatprep.subr.bf16.mxu0 0
    %3699 = vmatpush1.bf16.msra.mxu0 0
    %3700 = vmatprep.subr.bf16.mxu0 0
    %3701 = vmatpush1.bf16.msra.mxu0 0
    %3702 = vmatprep.subr.bf16.mxu0 0
    %3703 = vmatpush1.bf16.msra.mxu0 %v3686
    %3704 = vmatprep.subr.bf16.mxu0 0
    %3705 = vmatpush2.bf16.msra.mxu0 0
    %3706 = vmatprep.subr.bf16.mxu0 0
    %3707 = vmatpush2.bf16.msra.mxu0 0
    %3708 = vmatprep.subr.bf16.mxu0 0
    %3709 = vmatpush2.bf16.msra.mxu0 0
    %3710 = vmatprep.subr.bf16.mxu0 0
    %3711 = vmatpush2.bf16.msra.mxu0 0
    %3712 = vmatprep.subr.bf16.mxu0 0
    %3713 = vmatpush2.bf16.msra.mxu0 0
    %3714 = vmatprep.subr.bf16.mxu0 0
    %3715 = vmatpush2.bf16.msra.mxu0 0
    %3716 = vmatprep.subr.bf16.mxu0 0
    %3717 = vmatpush2.bf16.msra.mxu0 0
    %3718 = vmatprep.subr.bf16.mxu0 0
    %3719 = vmatpush2.bf16.msra.mxu0 0
    %3720 = vmatprep.mubr.bf16.mxu0 0
    %3721 = vmatmul.mubr.bf16.gmra.mxu0 %v3683
    %v3722 = vpop.f32.mrf.mxu0
    %v3723 = vadd.f32 0.0, %v3722
    %v3724 = vpop.f32.mrf.mxu0
    %v3725 = vpop.f32.mrf.mxu0
    %v3726 = vpop.f32.mrf.mxu0
    %3727 = vdwg.mxu0
    %v3728 = vpack.c.bf16 %v3723, %v3723
    %v3730 = vsel %vm2670, %v3728, 0
    %v3733 = vsel %vm2674, %v3142, 0
    %3735 = vmatprep.subr.bf16.mxu0 0
    %3736 = vmatpush1.bf16.msra.mxu0 0
    %3737 = vmatprep.subr.bf16.mxu0 0
    %3738 = vmatpush1.bf16.msra.mxu0 0
    %3739 = vmatprep.subr.bf16.mxu0 0
    %3740 = vmatpush1.bf16.msra.mxu0 0
    %3741 = vmatprep.subr.bf16.mxu0 0
    %3742 = vmatpush1.bf16.msra.mxu0 0
    %3743 = vmatprep.subr.bf16.mxu0 0
    %3744 = vmatpush1.bf16.msra.mxu0 0
    %3745 = vmatprep.subr.bf16.mxu0 0
    %3746 = vmatpush1.bf16.msra.mxu0 0
    %3747 = vmatprep.subr.bf16.mxu0 0
    %3748 = vmatpush1.bf16.msra.mxu0 0
    %3749 = vmatprep.subr.bf16.mxu0 0
    %3750 = vmatpush1.bf16.msra.mxu0 %v3733
    %3751 = vmatprep.subr.bf16.mxu0 0
    %3752 = vmatpush2.bf16.msra.mxu0 0
    %3753 = vmatprep.subr.bf16.mxu0 0
    %3754 = vmatpush2.bf16.msra.mxu0 0
    %3755 = vmatprep.subr.bf16.mxu0 0
    %3756 = vmatpush2.bf16.msra.mxu0 0
    %3757 = vmatprep.subr.bf16.mxu0 0
    %3758 = vmatpush2.bf16.msra.mxu0 0
    %3759 = vmatprep.subr.bf16.mxu0 0
    %3760 = vmatpush2.bf16.msra.mxu0 0
    %3761 = vmatprep.subr.bf16.mxu0 0
    %3762 = vmatpush2.bf16.msra.mxu0 0
    %3763 = vmatprep.subr.bf16.mxu0 0
    %3764 = vmatpush2.bf16.msra.mxu0 0
    %3765 = vmatprep.subr.bf16.mxu0 0
    %3766 = vmatpush2.bf16.msra.mxu0 0
    %3767 = vmatprep.mubr.bf16.mxu0 0
    %3768 = vmatmul.mubr.bf16.gmra.mxu0 %v3730
    %v3769 = vpop.f32.mrf.mxu0
    %v3770 = vadd.f32 0.0, %v3769
    %v3771 = vpop.f32.mrf.mxu0
    %v3772 = vpop.f32.mrf.mxu0
    %v3773 = vpop.f32.mrf.mxu0
    %3774 = vdwg.mxu0
    %v3775 = vadd.f32 %v3617, %v3770
    %v3776 = vld [vmem:[#allocation4 + $0x40] sm:$0x1]
    %v3777 = vlaneseq
    %v3778 = vshrl.u32 %v3777, 7
    %v3779 = vsub.s32 0, %v3778
    %v3780 = vrot.slane %v3776, %v3779
    %v3781 = vadd.f32 %v3775, %v3780
    %v3782 = vadd.f32 %v3067, %v3781
    %v3783 = vld [vmem:[#allocation4 + $0x48] sm:$0x1]
    %v3784 = vld [vmem:[#allocation4 + $0x50] sm:$0x1]
    %vm3785 = vcmask 257024
    %v3786 = vsel %vm3785, %v3782, 0.0
    %3787 = vadd.xlane.f32.xlu0 %v3786
    %v3788 = vpop.xlane.xlu0 %3787
    %v3789 = vrcp.pop 32.0
    %v3790 = vmul.f32 %v3788, %v3789
    %v3791 = vsub.f32 %v3782, %v3790
    %v3792 = vmul.f32 %v3791, %v3791
    %v3793 = vsel %vm3785, %v3792, 0.0
    %3794 = vadd.xlane.f32.xlu0 %v3793
    %v3795 = vpop.xlane.xlu0 %3794
    %v3796 = vmul.f32 %v3795, %v3789
    %v3797 = vadd.f32 %v3796, 1e-05
    %v3798 = vrsqrt.pop %v3797
    %v3799 = vmul.f32 %v3791, %v3798
    %v3800 = vlaneseq
    %v3801 = vshrl.u32 %v3800, 7
    %v3802 = vsub.s32 0, %v3801
    %v3803 = vrot.slane %v3783, %v3802
    %v3804 = vmul.f32 %v3799, %v3803
    %v3805 = vlaneseq
    %v3806 = vshrl.u32 %v3805, 7
    %v3807 = vsub.s32 0, %v3806
    %v3808 = vrot.slane %v3784, %v3807
    %v3809 = vadd.f32 %v3804, %v3808
    %v3810 = vld [vmem:[#allocation2 + $0x2b8] sm:$0xf]
    %v3811 = vld [vmem:[#allocation2 + $0x2bc] sm:$0xf]
    %v3812 = vld [vmem:[#allocation2 + $0x2c0] sm:$0xf]
    %v3813 = vld [vmem:[#allocation2 + $0x2c4] sm:$0xf]
    %v3814 = vpack.c.bf16 %v3809, %v3809
    %v3815 = vld [vmem:[#allocation4 + $0x58] sm:$0x1]
    %v3816 = vlaneseq
    %v3817 = vshrl.u32 %v3816, 7
    %v3818 = vsub.s32 0, %v3817
    %v3819 = vrot.slane %v3815, %v3818
    %v3824 = vunpack.c.l.b16 %v3810
    %v3825 = vunpack.c.l.b16 %v3811
    %v3826 = vunpack.c.l.b16 %v3812
    %v3827 = vunpack.c.l.b16 %v3813
    %v3828 = vpack.c.b16 %v3825, %v3824
    %v3829 = vpack.c.b16 %v3827, %v3826
    %v3833 = vsel %vm1293, %v3814, 0
    %3835 = vmatprep.subr.bf16.mxu0 0
    %3836 = vmatpush1.bf16.msra.mxu0 0
    %3837 = vmatprep.subr.bf16.mxu0 0
    %3838 = vmatpush1.bf16.msra.mxu0 0
    %3839 = vmatprep.subr.bf16.mxu0 0
    %3840 = vmatpush1.bf16.msra.mxu0 0
    %3841 = vmatprep.subr.bf16.mxu0 0
    %3842 = vmatpush1.bf16.msra.mxu0 0
    %3843 = vmatprep.subr.bf16.mxu0 0
    %3844 = vmatpush1.bf16.msra.mxu0 0
    %3845 = vmatprep.subr.bf16.mxu0 0
    %3846 = vmatpush1.bf16.msra.mxu0 0
    %3847 = vmatprep.subr.bf16.mxu0 0
    %3848 = vmatpush1.bf16.msra.mxu0 %v3829
    %3849 = vmatprep.subr.bf16.mxu0 0
    %3850 = vmatpush1.bf16.msra.mxu0 %v3828
    %3851 = vmatprep.subr.bf16.mxu0 0
    %3852 = vmatpush2.bf16.msra.mxu0 0
    %3853 = vmatprep.subr.bf16.mxu0 0
    %3854 = vmatpush2.bf16.msra.mxu0 0
    %3855 = vmatprep.subr.bf16.mxu0 0
    %3856 = vmatpush2.bf16.msra.mxu0 0
    %3857 = vmatprep.subr.bf16.mxu0 0
    %3858 = vmatpush2.bf16.msra.mxu0 0
    %3859 = vmatprep.subr.bf16.mxu0 0
    %3860 = vmatpush2.bf16.msra.mxu0 0
    %3861 = vmatprep.subr.bf16.mxu0 0
    %3862 = vmatpush2.bf16.msra.mxu0 0
    %3863 = vmatprep.subr.bf16.mxu0 0
    %3864 = vmatpush2.bf16.msra.mxu0 0
    %3865 = vmatprep.subr.bf16.mxu0 0
    %3866 = vmatpush2.bf16.msra.mxu0 0
    %3867 = vmatprep.mubr.bf16.mxu0 0
    %3868 = vmatmul.mubr.bf16.gmra.mxu0 %v3833
    %v3869 = vpop.f32.mrf.mxu0
    %v3870 = vadd.f32 %v3819, %v3869
    %v3871 = vpop.f32.mrf.mxu0
    %v3872 = vpop.f32.mrf.mxu0
    %v3873 = vpop.f32.mrf.mxu0
    %3874 = vdwg.mxu0
    %v3875 = vmax.f32 %v3870, 0.0
    %v3876 = vld [vmem:[#allocation2 + $0x2c8] sm:$0xf]
    %v3877 = vld [vmem:[#allocation2 + $0x2cc] sm:$0xf]
    %v3878 = vld [vmem:[#allocation2 + $0x2d0] sm:$0xf]
    %v3879 = vld [vmem:[#allocation2 + $0x2d4] sm:$0xf]
    %v3880 = vld [vmem:[#allocation2 + $0x2d8] sm:$0xf]
    %v3881 = vld [vmem:[#allocation2 + $0x2dc] sm:$0xf]
    %v3882 = vld [vmem:[#allocation2 + $0x2e0] sm:$0xf]
    %v3883 = vld [vmem:[#allocation2 + $0x2e4] sm:$0xf]
    %v3884 = vld [vmem:[#allocation2 + $0x2e8] sm:$0xf]
    %v3885 = vld [vmem:[#allocation2 + $0x2ec] sm:$0xf]
    %v3886 = vld [vmem:[#allocation2 + $0x2f0] sm:$0xf]
    %v3887 = vld [vmem:[#allocation2 + $0x2f4] sm:$0xf]
    %v3888 = vld [vmem:[#allocation2 + $0x2f8] sm:$0xf]
    %v3889 = vld [vmem:[#allocation2 + $0x2fc] sm:$0xf]
    %v3890 = vld [vmem:[#allocation2 + $0x300] sm:$0xf]
    %v3891 = vld [vmem:[#allocation2 + $0x304] sm:$0xf]
    %v3892 = vpack.c.bf16 %v3875, %v3875
    %v3893 = vld [vmem:[#allocation4 + $0x60] sm:$0x1]
    %v3894 = vlaneseq
    %v3895 = vshrl.u32 %v3894, 7
    %v3896 = vsub.s32 0, %v3895
    %v3897 = vrot.slane %v3893, %v3896
    %v3914 = vunpack.c.l.b16 %v3876
    %v3915 = vunpack.c.l.b16 %v3877
    %v3916 = vunpack.c.l.b16 %v3878
    %v3917 = vunpack.c.l.b16 %v3879
    %v3918 = vunpack.c.l.b16 %v3880
    %v3919 = vunpack.c.l.b16 %v3881
    %v3920 = vunpack.c.l.b16 %v3882
    %v3921 = vunpack.c.l.b16 %v3883
    %v3922 = vunpack.c.l.b16 %v3884
    %v3923 = vunpack.c.l.b16 %v3885
    %v3924 = vunpack.c.l.b16 %v3886
    %v3925 = vunpack.c.l.b16 %v3887
    %v3926 = vunpack.c.l.b16 %v3888
    %v3927 = vunpack.c.l.b16 %v3889
    %v3928 = vunpack.c.l.b16 %v3890
    %v3929 = vunpack.c.l.b16 %v3891
    %v3930 = vpack.c.b16 %v3915, %v3914
    %v3931 = vpack.c.b16 %v3917, %v3916
    %v3932 = vpack.c.b16 %v3919, %v3918
    %v3933 = vpack.c.b16 %v3921, %v3920
    %v3934 = vpack.c.b16 %v3923, %v3922
    %v3935 = vpack.c.b16 %v3925, %v3924
    %v3936 = vpack.c.b16 %v3927, %v3926
    %v3937 = vpack.c.b16 %v3929, %v3928
    %3946 = vmatprep.subr.bf16.mxu0 0
    %3947 = vmatpush1.bf16.msra.mxu0 %v3937
    %3948 = vmatprep.subr.bf16.mxu0 0
    %3949 = vmatpush1.bf16.msra.mxu0 %v3936
    %3950 = vmatprep.subr.bf16.mxu0 0
    %3951 = vmatpush1.bf16.msra.mxu0 %v3935
    %3952 = vmatprep.subr.bf16.mxu0 0
    %3953 = vmatpush1.bf16.msra.mxu0 %v3934
    %3954 = vmatprep.subr.bf16.mxu0 0
    %3955 = vmatpush1.bf16.msra.mxu0 %v3933
    %3956 = vmatprep.subr.bf16.mxu0 0
    %3957 = vmatpush1.bf16.msra.mxu0 %v3932
    %3958 = vmatprep.subr.bf16.mxu0 0
    %3959 = vmatpush1.bf16.msra.mxu0 %v3931
    %3960 = vmatprep.subr.bf16.mxu0 0
    %3961 = vmatpush1.bf16.msra.mxu0 %v3930
    %3962 = vmatprep.subr.bf16.mxu0 0
    %3963 = vmatpush2.bf16.msra.mxu0 0
    %3964 = vmatprep.subr.bf16.mxu0 0
    %3965 = vmatpush2.bf16.msra.mxu0 0
    %3966 = vmatprep.subr.bf16.mxu0 0
    %3967 = vmatpush2.bf16.msra.mxu0 0
    %3968 = vmatprep.subr.bf16.mxu0 0
    %3969 = vmatpush2.bf16.msra.mxu0 0
    %3970 = vmatprep.subr.bf16.mxu0 0
    %3971 = vmatpush2.bf16.msra.mxu0 0
    %3972 = vmatprep.subr.bf16.mxu0 0
    %3973 = vmatpush2.bf16.msra.mxu0 0
    %3974 = vmatprep.subr.bf16.mxu0 0
    %3975 = vmatpush2.bf16.msra.mxu0 0
    %3976 = vmatprep.subr.bf16.mxu0 0
    %3977 = vmatpush2.bf16.msra.mxu0 0
    %3978 = vmatprep.mubr.bf16.mxu0 0
    %3979 = vmatmul.mubr.bf16.gmra.mxu0 %v3892
    %v3980 = vpop.f32.mrf.mxu0
    %v3981 = vadd.f32 %v3897, %v3980
    %v3982 = vpop.f32.mrf.mxu0
    %v3983 = vpop.f32.mrf.mxu0
    %v3984 = vpop.f32.mrf.mxu0
    %3985 = vdwg.mxu0
    %v3986 = vadd.f32 %v3809, %v3981
    %v3987 = vld [vmem:[#allocation4 + $0x68] sm:$0x1]
    %v3988 = vld [vmem:[#allocation4 + $0x70] sm:$0x1]
    %v3989 = vsel %vm3785, %v3986, 0.0
    %3990 = vadd.xlane.f32.xlu0 %v3989
    %v3991 = vpop.xlane.xlu0 %3990
    %v3992 = vmul.f32 %v3991, %v3789
    %v3993 = vsub.f32 %v3986, %v3992
    %v3994 = vmul.f32 %v3993, %v3993
    %v3995 = vsel %vm3785, %v3994, 0.0
    %3996 = vadd.xlane.f32.xlu0 %v3995
    %v3997 = vpop.xlane.xlu0 %3996
    %v3998 = vmul.f32 %v3997, %v3789
    %v3999 = vadd.f32 %v3998, 1e-05
    %v4000 = vrsqrt.pop %v3999
    %v4001 = vmul.f32 %v3993, %v4000
    %v4002 = vlaneseq
    %v4003 = vshrl.u32 %v4002, 7
    %v4004 = vsub.s32 0, %v4003
    %v4005 = vrot.slane %v3987, %v4004
    %v4006 = vmul.f32 %v4001, %v4005
    %v4007 = vlaneseq
    %v4008 = vshrl.u32 %v4007, 7
    %v4009 = vsub.s32 0, %v4008
    %v4010 = vrot.slane %v3988, %v4009
    %v4011 = vadd.f32 %v4006, %v4010
    %v4012 = vpack.c.bf16 %v4011, %v4011
    %v4014 = vsel %vm2777, %v4012, 0
    %4016 = vmatprep.subr.bf16.mxu0 0
    %4017 = vmatpush1.bf16.msra.mxu0 0
    %4018 = vmatprep.subr.bf16.mxu0 0
    %4019 = vmatpush1.bf16.msra.mxu0 0
    %4020 = vmatprep.subr.bf16.mxu0 0
    %4021 = vmatpush1.bf16.msra.mxu0 0
    %4022 = vmatprep.subr.bf16.mxu0 0
    %4023 = vmatpush1.bf16.msra.mxu0 0
    %4024 = vmatprep.subr.bf16.mxu0 0
    %4025 = vmatpush1.bf16.msra.mxu0 0
    %4026 = vmatprep.subr.bf16.mxu0 0
    %4027 = vmatpush1.bf16.msra.mxu0 0
    %4028 = vmatprep.subr.bf16.mxu0 0
    %4029 = vmatpush1.bf16.msra.mxu0 0
    %4030 = vmatprep.subr.bf16.mxu0 0
    %4031 = vmatpush1.bf16.msra.mxu0 %v4014
    %4032 = vmatprep.subr.bf16.mxu0 0
    %4033 = vmatpush2.bf16.msra.mxu0 0
    %4034 = vmatprep.subr.bf16.mxu0 0
    %4035 = vmatpush2.bf16.msra.mxu0 0
    %4036 = vmatprep.subr.bf16.mxu0 0
    %4037 = vmatpush2.bf16.msra.mxu0 0
    %4038 = vmatprep.subr.bf16.mxu0 0
    %4039 = vmatpush2.bf16.msra.mxu0 0
    %4040 = vmatprep.subr.bf16.mxu0 0
    %4041 = vmatpush2.bf16.msra.mxu0 0
    %4042 = vmatprep.subr.bf16.mxu0 0
    %4043 = vmatpush2.bf16.msra.mxu0 0
    %4044 = vmatprep.subr.bf16.mxu0 0
    %4045 = vmatpush2.bf16.msra.mxu0 0
    %4046 = vmatprep.subr.bf16.mxu0 0
    %4047 = vmatpush2.bf16.msra.mxu0 0
    %4048 = vmatprep.mubr.bf16.mxu0 0
    %4049 = vmatmul.mubr.bf16.gmra.mxu0 %v2775
    %v4050 = vpop.f32.mrf.mxu0
    %v4051 = vadd.f32 0.0, %v4050
    %v4052 = vpop.f32.mrf.mxu0
    %v4053 = vpop.f32.mrf.mxu0
    %v4054 = vpop.f32.mrf.mxu0
    %4055 = vdwg.mxu0
    %v4056 = vld [vmem:[#allocation2 + $0x308] sm:$0xf]
    %v4057 = vld [vmem:[#allocation2 + $0x30c] sm:$0xf]
    %v4058 = vld [vmem:[#allocation2 + $0x310] sm:$0xf]
    %v4059 = vld [vmem:[#allocation2 + $0x314] sm:$0xf]
    %v4060 = vpack.c.bf16 %v4051, %v4051
    %v4061 = vld [vmem:[#allocation4 + $0x78] sm:$0x1]
    %v4062 = vlaneseq
    %v4063 = vshrl.u32 %v4062, 7
    %v4064 = vsub.s32 0, %v4063
    %v4065 = vrot.slane %v4061, %v4064
    %v4070 = vunpack.c.l.b16 %v4056
    %v4071 = vunpack.c.l.b16 %v4057
    %v4072 = vunpack.c.l.b16 %v4058
    %v4073 = vunpack.c.l.b16 %v4059
    %v4074 = vpack.c.b16 %v4071, %v4070
    %v4075 = vpack.c.b16 %v4073, %v4072
    %v4079 = vsel %vm1293, %v4060, 0
    %4081 = vmatprep.subr.bf16.mxu0 0
    %4082 = vmatpush1.bf16.msra.mxu0 0
    %4083 = vmatprep.subr.bf16.mxu0 0
    %4084 = vmatpush1.bf16.msra.mxu0 0
    %4085 = vmatprep.subr.bf16.mxu0 0
    %4086 = vmatpush1.bf16.msra.mxu0 0
    %4087 = vmatprep.subr.bf16.mxu0 0
    %4088 = vmatpush1.bf16.msra.mxu0 0
    %4089 = vmatprep.subr.bf16.mxu0 0
    %4090 = vmatpush1.bf16.msra.mxu0 0
    %4091 = vmatprep.subr.bf16.mxu0 0
    %4092 = vmatpush1.bf16.msra.mxu0 0
    %4093 = vmatprep.subr.bf16.mxu0 0
    %4094 = vmatpush1.bf16.msra.mxu0 %v4075
    %4095 = vmatprep.subr.bf16.mxu0 0
    %4096 = vmatpush1.bf16.msra.mxu0 %v4074
    %4097 = vmatprep.subr.bf16.mxu0 0
    %4098 = vmatpush2.bf16.msra.mxu0 0
    %4099 = vmatprep.subr.bf16.mxu0 0
    %4100 = vmatpush2.bf16.msra.mxu0 0
    %4101 = vmatprep.subr.bf16.mxu0 0
    %4102 = vmatpush2.bf16.msra.mxu0 0
    %4103 = vmatprep.subr.bf16.mxu0 0
    %4104 = vmatpush2.bf16.msra.mxu0 0
    %4105 = vmatprep.subr.bf16.mxu0 0
    %4106 = vmatpush2.bf16.msra.mxu0 0
    %4107 = vmatprep.subr.bf16.mxu0 0
    %4108 = vmatpush2.bf16.msra.mxu0 0
    %4109 = vmatprep.subr.bf16.mxu0 0
    %4110 = vmatpush2.bf16.msra.mxu0 0
    %4111 = vmatprep.subr.bf16.mxu0 0
    %4112 = vmatpush2.bf16.msra.mxu0 0
    %4113 = vmatprep.mubr.bf16.mxu0 0
    %4114 = vmatmul.mubr.bf16.gmra.mxu0 %v4079
    %v4115 = vpop.f32.mrf.mxu0
    %v4116 = vadd.f32 %v4065, %v4115
    %v4117 = vpop.f32.mrf.mxu0
    %v4118 = vpop.f32.mrf.mxu0
    %v4119 = vpop.f32.mrf.mxu0
    %4120 = vdwg.mxu0
    %v4121 = vxor.u32 %v4116, 2147483648
    %v4122 = vmul.f32 %v4121, 1.442695
    %v4123 = vpow.pop %v4122
    %v4124 = vadd.f32 %v4123, 1.0
    %v4125 = vrcp.pop %v4124
    %v4126 = vmul.f32 1.0, %v4125
    %vm4127 = vcmask 123968
    %v4128 = vsel %vm4127, %v4116, -inf
    %4129 = vmax.xlane.f32.xlu0 %v4128
    %v4130 = vpop.xlane.xlu0 %4129
    %v4131 = vsub.f32 %v4116, %v4130
    %v4132 = vmul.f32 %v4131, 1.442695
    %v4133 = vpow.pop %v4132
    %4135 = vrot.lane.b32.xlu0 %v4133, 120
    %v4136 = vpop.permute.xlu0 %4135
    %vm4138 = vcmask 58368
    %v4139 = vsel %vm4138, %v4136, 0.0
    %4140 = vadd.xlane.f32.xlu0 %v4139
    %v4141 = vpop.xlane.xlu0 %4140
    %v4142 = vrcp.pop %v4141
    %v4143 = vmul.f32 %v4133, %v4142
    %vm4144 = vcmask 189568
    %v4145 = vsel %vm4144, %v4116, -inf
    %4146 = vmax.xlane.f32.xlu0 %v4145
    %v4147 = vpop.xlane.xlu0 %4146
    %v4148 = vsub.f32 %v4116, %v4147
    %v4149 = vmul.f32 %v4148, 1.442695
    %v4150 = vpow.pop %v4149
    %4152 = vrot.lane.b32.xlu0 %v4150, 112
    %v4153 = vpop.permute.xlu0 %4152
    %v4155 = vsel %vm4138, %v4153, 0.0
    %4156 = vadd.xlane.f32.xlu0 %v4155
    %v4157 = vpop.xlane.xlu0 %4156
    %v4158 = vrcp.pop %v4157
    %v4159 = vmul.f32 %v4150, %v4158
    %v4160 = vsel %vm2670, %v4126, %v4143
    %v4161 = vsel %vm119, %v4160, %v4159
    %vm4162 = vcmask 189440
    %4163 = vst.msk [vmem:[%s3] sm:$0x3] %vm4162, %v4161
    // Predicated region
    $region22: #{forward.1} parent=1 // pred_check
      _
    $region23: #{forward.1} parent=1 // pred_check_branch
      %4165 = sbr.rel (0) target = $region25
    $region24: #{forward.1} parent=1 // pred_region
      _
    $region25: #{forward.1} parent=1 // pred_fallthru
      _
    // Predicated region
    $region26: #{forward.1} parent=1 // pred_check
      _
    $region27: #{forward.1} parent=1 // pred_check_branch
      %4167 = sbr.rel (0) target = $region29
    $region28: #{forward.1} parent=1 // pred_region
      _
    $region29: #{forward.1} parent=1 // pred_fallthru
      _
    %4168 = vsyncpa [#allocation3], 1
    %4169 = vsyncpa [#allocation5], 1

</llo_original>
